<compile_context>
chip_gen: v7x
topology: tpu7x:2x2x1
jax: 0.10.0
libtpu: 0.0.40
codegen_flags: <defaults>
</compile_context>

<pallas_src>
import functools

import jax
import jax.numpy as jnp
from jax import lax
from jax.experimental import pallas as pl
from jax.experimental.pallas import tpu as pltpu

EPS = 1e-5
LANE = 128
F32 = jnp.float32
BF16 = jnp.bfloat16
LEAD = 8   # leading zero rows in the conv2 scratch (keeps all tap slices in-bounds)
TRAIL = 8  # trailing zero rows


# ----------------------------------------------------------------------------
# small helpers
# ----------------------------------------------------------------------------
def _round_up(x, m):
    return (x + m - 1) // m * m


def _pad_to(x, shape):
    pads = [(0, t - s) for s, t in zip(x.shape, shape)]
    if all(p == (0, 0) for p in pads):
        return x
    return jnp.pad(x, pads)


def _pick_m_tile(m, row_bytes, budget=24 << 20):
    # Largest row tile that divides M and keeps ~4 double-buffered (mt, C)
    # slabs inside `budget` of VMEM (respects v7x's 64 MiB physical ceiling).
    for cand in (4096, 2048, 1024, 512, 256, 128):
        if m % cand == 0 and 4 * cand * row_bytes <= budget:
            return cand
    return m  # tiny demo shapes: one tile


def _vmem_limit(buf_bytes):
    # Explicit scoped-VMEM limit: ~double-buffered block bytes + headroom.
    return int(min(100 << 20, max(32 << 20, 2 * buf_bytes + (8 << 20))))


def _bn_scale_shift(ps, pq, gamma, beta, count):
    """Reduce per-tile partial sums -> per-channel BN scale/shift (tiny JAX op)."""
    c = ps.shape[-1]
    s = jnp.sum(ps.reshape(-1, c), axis=0, keepdims=True)
    q = jnp.sum(pq.reshape(-1, c), axis=0, keepdims=True)
    mean = s / count
    # TODO(synk): one-pass E[y^2]-E[y]^2 can cancel for very large M; switch to
    # an offset-centered or two-pass reduction if that regime matters.
    var = jnp.maximum(q / count - mean * mean, 0.0)
    scale = gamma * lax.rsqrt(var + EPS)
    shift = beta - mean * scale
    return scale, shift


# ----------------------------------------------------------------------------
# pass 1: conv1 (1x1) as (mt, Cin) x (Cin, Cmid) bf16 matmul + partial stats
# ----------------------------------------------------------------------------
def _conv1_kernel(x_ref, w_ref, y_ref, ps_ref, pq_ref):
    y = jnp.dot(x_ref[...].astype(BF16), w_ref[...],
                preferred_element_type=F32)
    yb = y.astype(BF16)
    y_ref[...] = yb
    yf = yb.astype(F32)
    ps_ref[...] = jnp.sum(yf, axis=0, keepdims=True)[None]
    pq_ref[...] = jnp.sum(yf * yf, axis=0, keepdims=True)[None]


# ----------------------------------------------------------------------------
# pass 2: bn1 (scale/shift FMA) + relu + conv2 (3x3, stride 1, pad 1) + stats
#   3x3 conv = 9 accumulating dots over flat row-shifted slices of an H-padded
#   scratch; W-edge wrap rows are zeroed with a per-column mask.
# ----------------------------------------------------------------------------
def _conv2_kernel(H, W, C, y1_ref, scale_ref, shift_ref, w2_ref,
                  y2_ref, ps_ref, pq_ref, pad_ref):
    HW = H * W
    top = LEAD + W                      # first interior row of the scratch
    tail = pad_ref.shape[0] - top - HW  # trailing zero rows

    # Zero halo regions unconditionally each step (cheap; megacore-safe).
    pad_ref[pl.ds(0, top), :] = jnp.zeros((top, C), F32)
    pad_ref[pl.ds(top + HW, tail), :] = jnp.zeros((tail, C), F32)

    # bn1 + relu, then write the interior rows (aligned full-row store).
    a = jnp.maximum(y1_ref[...].astype(F32) * scale_ref[...] + shift_ref[...],
                    0.0)
    pad_ref[pl.ds(top, HW), :] = a

    # Column masks zeroing rows that would wrap around the W edges.
    col = lax.broadcasted_iota(jnp.int32, (HW, 1), 0) % W
    mask_r = (col != (W - 1)).astype(F32)   # tap dw = +1
    mask_l = (col != 0).astype(F32)         # tap dw = -1

    acc = jnp.zeros((HW, C), F32)
    for dh in (-1, 0, 1):
        for dw in (-1, 0, 1):
            k = (dh + 1) * 3 + (dw + 1)
            start = LEAD + (1 + dh) * W + dw
            src = pad_ref[pl.ds(start, HW), :]
            if dw == 1:
                src = src * mask_r
            elif dw == -1:
                src = src * mask_l
            acc += jnp.dot(src.astype(BF16), w2_ref[k],
                           preferred_element_type=F32)

    yb = acc.astype(BF16)
    y2_ref[...] = yb
    yf = yb.astype(F32)
    ps_ref[...] = jnp.sum(yf, axis=0, keepdims=True)[None]
    pq_ref[...] = jnp.sum(yf * yf, axis=0, keepdims=True)[None]


# ----------------------------------------------------------------------------
# pass 3: bn2 (FMA) + relu + conv3 (1x1) + partial stats
# ----------------------------------------------------------------------------
def _conv3_kernel(y2_ref, scale_ref, shift_ref, w3_ref, y3_ref, ps_ref, pq_ref):
    a = jnp.maximum(y2_ref[...].astype(F32) * scale_ref[...] + shift_ref[...],
                    0.0)
    y = jnp.dot(a.astype(BF16), w3_ref[...], preferred_element_type=F32)
    yb = y.astype(BF16)
    y3_ref[...] = yb
    yf = yb.astype(F32)
    ps_ref[...] = jnp.sum(yf, axis=0, keepdims=True)[None]
    pq_ref[...] = jnp.sum(yf * yf, axis=0, keepdims=True)[None]


# ----------------------------------------------------------------------------
# pass 4: bn3 (FMA) + residual add + relu  (fully parallel, pure elementwise)
# ----------------------------------------------------------------------------
def _bn3_residual_kernel(y3_ref, x_ref, scale_ref, shift_ref, o_ref):
    y = y3_ref[...].astype(F32) * scale_ref[...] + shift_ref[...]
    o_ref[...] = jnp.maximum(y + x_ref[...], 0.0)


# ----------------------------------------------------------------------------
# wrapper
# ----------------------------------------------------------------------------
def bottleneck_block(x_nhwc, params, m_tile=None):
    """x_nhwc: (N, H, W, Cin) float32. Returns (N, H, W, Cout) float32."""
    N, H, W, Cin = x_nhwc.shape
    Cmid = params["w1"].shape[1]
    Cout = params["w3"].shape[1]
    # identity_downsample=None, stride=1 => plain residual add.
    assert Cin == Cout, "identity add requires in_channels == out_channels*expansion"

    # TODO(synk): on v6e/v7x pad channels to 256 where real channel counts
    # allow (256x256 MXU); 128 is already optimal on v5e.
    Cin_p = _round_up(Cin, LANE)
    Cmid_p = _round_up(Cmid, LANE)
    Cout_p = _round_up(Cout, LANE)

    HW = H * W
    M = N * HW
    mt = m_tile or _pick_m_tile(M, max(Cin_p, Cmid_p, Cout_p) * 4)
    assert M % mt == 0
    n_mt = M // mt
    count = float(M)

    # Lane-pad parameters; weights go to bf16 for the MXU.  Conv biases are
    # dropped (exactly cancelled by the train-mode BN mean subtraction).
    w1 = _pad_to(params["w1"].astype(F32), (Cin_p, Cmid_p)).astype(BF16)
    w2 = _pad_to(params["w2"].astype(F32),
                 (3, 3, Cmid_p, Cmid_p)).reshape(9, Cmid_p, Cmid_p).astype(BF16)
    w3 = _pad_to(params["w3"].astype(F32), (Cmid_p, Cout_p)).astype(BF16)
    g1 = _pad_to(params["g1"].astype(F32), (1, Cmid_p))
    be1 = _pad_to(params["be1"].astype(F32), (1, Cmid_p))
    g2 = _pad_to(params["g2"].astype(F32), (1, Cmid_p))
    be2 = _pad_to(params["be2"].astype(F32), (1, Cmid_p))
    g3 = _pad_to(params["g3"].astype(F32), (1, Cout_p))
    be3 = _pad_to(params["be3"].astype(F32), (1, Cout_p))

    x_flat = _pad_to(x_nhwc.astype(F32), (N, H, W, Cin_p)).reshape(M, Cin_p)

    row = lambda c: pl.BlockSpec((mt, c), lambda i: (i, 0))
    vec = lambda c: pl.BlockSpec((1, c), lambda i: (0, 0))
    part3 = lambda c: pl.BlockSpec((1, 1, c), lambda i: (i, 0, 0))
    full = lambda a: pl.BlockSpec(a.shape, lambda i: tuple(0 for _ in a.shape))
    pstat = lambda n, c: jax.ShapeDtypeStruct((n, 1, c), F32)

    # ---- pass 1: conv1 + per-tile partial stats (parallel) --------------------
    p1_bytes = mt * Cin_p * 4 + mt * Cmid_p * 2 + Cin_p * Cmid_p * 2
    y1, ps1, pq1 = pl.pallas_call(
        _conv1_kernel,
        grid=(n_mt,),
        in_specs=[row(Cin_p), full(w1)],
        out_specs=(row(Cmid_p), part3(Cmid_p), part3(Cmid_p)),
        out_shape=(jax.ShapeDtypeStruct((M, Cmid_p), BF16),
                   pstat(n_mt, Cmid_p), pstat(n_mt, Cmid_p)),
        compiler_params=pltpu.CompilerParams(
            dimension_semantics=("parallel",),
            vmem_limit_bytes=_vmem_limit(p1_bytes)),
    )(x_flat, w1)
    scale1, shift1 = _bn_scale_shift(ps1, pq1, g1, be1, count)

    # ---- pass 2: bn1+relu, conv2 3x3 (9 accumulating dots), stats -------------
    # TODO(synk): for very large H*W tile this pass by row bands with a halo
    # instead of one image per grid step.
    pad_rows = LEAD + (H + 2) * W + TRAIL
    img = pl.BlockSpec((HW, Cmid_p), lambda n: (n, 0))
    p2_bytes = (2 * HW * Cmid_p * 2 + 9 * Cmid_p * Cmid_p * 2
                + pad_rows * Cmid_p * 4 + HW * Cmid_p * 4)
    y2, ps2, pq2 = pl.pallas_call(
        functools.partial(_conv2_kernel, H, W, Cmid_p),
        grid=(N,),
        in_specs=[img, vec(Cmid_p), vec(Cmid_p), full(w2)],
        out_specs=(img, part3(Cmid_p), part3(Cmid_p)),
        out_shape=(jax.ShapeDtypeStruct((M, Cmid_p), BF16),
                   pstat(N, Cmid_p), pstat(N, Cmid_p)),
        scratch_shapes=[pltpu.VMEM((pad_rows, Cmid_p), F32)],
        compiler_params=pltpu.CompilerParams(
            dimension_semantics=("parallel",),
            vmem_limit_bytes=_vmem_limit(p2_bytes)),
    )(y1, scale1, shift1, w2)
    scale2, shift2 = _bn_scale_shift(ps2, pq2, g2, be2, count)

    # ---- pass 3: bn2+relu, conv3, stats (parallel) -----------------------------
    p3_bytes = mt * Cmid_p * 2 + mt * Cout_p * 2 + Cmid_p * Cout_p * 2 + mt * Cmid_p * 4
    y3, ps3, pq3 = pl.pallas_call(
        _conv3_kernel,
        grid=(n_mt,),
        in_specs=[row(Cmid_p), vec(Cmid_p), vec(Cmid_p), full(w3)],
        out_specs=(row(Cout_p), part3(Cout_p), part3(Cout_p)),
        out_shape=(jax.ShapeDtypeStruct((M, Cout_p), BF16),
                   pstat(n_mt, Cout_p), pstat(n_mt, Cout_p)),
        compiler_params=pltpu.CompilerParams(
            dimension_semantics=("parallel",),
            vmem_limit_bytes=_vmem_limit(p3_bytes)),
    )(y2, scale2, shift2, w3)
    scale3, shift3 = _bn_scale_shift(ps3, pq3, g3, be3, count)

    # ---- pass 4: bn3 + residual + relu (parallel) ------------------------------
    p4_bytes = mt * Cout_p * 2 + mt * Cin_p * 4 + mt * Cout_p * 4
    out_p = pl.pallas_call(
        _bn3_residual_kernel,
        grid=(n_mt,),
        in_specs=[row(Cout_p), row(Cin_p), vec(Cout_p), vec(Cout_p)],
        out_specs=row(Cout_p),
        out_shape=jax.ShapeDtypeStruct((M, Cout_p), F32),
        compiler_params=pltpu.CompilerParams(
            dimension_semantics=("parallel",),
            vmem_limit_bytes=_vmem_limit(p4_bytes)),
    )(y3, x_flat, scale3, shift3)

    return out_p.reshape(N, H, W, Cout_p)[..., :Cout]


# ----------------------------------------------------------------------------
# pure-JAX f32 reference of the PyTorch forward (train-mode BN, biases kept)
# ----------------------------------------------------------------------------
def reference_block(x_nhwc, params):
    def bn(y, g, b):
        m = jnp.mean(y, axis=(0, 1, 2), keepdims=True)
        v = jnp.mean((y - m) ** 2, axis=(0, 1, 2), keepdims=True)
        return (y - m) * lax.rsqrt(v + EPS) * g + b

    y = jnp.einsum("nhwc,cd->nhwd", x_nhwc, params["w1"]) + params["b1"]
    y = jnp.maximum(bn(y, params["g1"], params["be1"]), 0.0)
    y = lax.conv_general_dilated(
        y, params["w2"], window_strides=(1, 1), padding="SAME",
        dimension_numbers=("NHWC", "HWIO", "NHWC"),
    ) + params["b2"]
    y = jnp.maximum(bn(y, params["g2"], params["be2"]), 0.0)
    y = jnp.einsum("nhwc,cd->nhwd", y, params["w3"]) + params["b3"]
    y = bn(y, params["g3"], params["be3"])
    return jnp.maximum(y + x_nhwc, 0.0)


def make_params(key, cin, cmid, cout):
    ks = jax.random.split(key, 9)
    return {
        "w1": 0.1 * jax.random.normal(ks[0], (cin, cmid), jnp.float32),
        "b1": 0.1 * jax.random.normal(ks[1], (1, cmid), jnp.float32),
        "g1": 1.0 + 0.1 * jax.random.normal(ks[2], (1, cmid), jnp.float32),
        "be1": jnp.zeros((1, cmid), jnp.float32),
        "w2": 0.1 * jax.random.normal(ks[3], (3, 3, cmid, cmid), jnp.float32),
        "b2": 0.1 * jax.random.normal(ks[4], (1, cmid), jnp.float32),
        "g2": 1.0 + 0.1 * jax.random.normal(ks[5], (1, cmid), jnp.float32),
        "be2": jnp.zeros((1, cmid), jnp.float32),
        "w3": 0.1 * jax.random.normal(ks[6], (cmid, cout), jnp.float32),
        "b3": 0.1 * jax.random.normal(ks[7], (1, cout), jnp.float32),
        "g3": 1.0 + 0.1 * jax.random.normal(ks[8], (1, cout), jnp.float32),
        "be3": jnp.zeros((1, cout), jnp.float32),
    }


if __name__ == "__main__":
    # block(in_chanells=16, out_channels=4, identity_downsample=None, stride=1)
    N, H, W = 2, 8, 8
    out_channels = 4
    expansion = 4
    cin = out_channels * expansion   # 16 (identity add shape-valid)
    cmid = out_channels              # 4
    cout = out_channels * expansion  # 16

    key = jax.random.PRNGKey(0)
    kx, kp = jax.random.split(key)
    x_nchw = jax.random.normal(kx, (N, cin, H, W), jnp.float32)  # PyTorch layout
    x_nhwc = jnp.transpose(x_nchw, (0, 2, 3, 1))                 # kernel layout

    params = make_params(kp, cin, cmid, cout)

    block_fn = jax.jit(bottleneck_block)
    out = jax.block_until_ready(block_fn(x_nhwc, params))

    ref = reference_block(x_nhwc, params)
    assert out.shape == (N, H, W, cout)
    # bf16 MXU compute + bf16 streamed intermediates -> compare against the
    # f32 reference with a bf16-level bound.
    assert jnp.allclose(out, ref, rtol=1e-1, atol=1e-1), "mismatch vs reference"

    print("KERNEL_OK")
</pallas_src>

<mosaic_0001>
module attributes {stable_mosaic.version = 11 : i64} {
  func.func @_conv1_kernel(%arg0: i32, %arg1: memref<128x128xf32, #tpu.memory_space<vmem>>, %arg2: memref<128x128xbf16, #tpu.memory_space<vmem>>, %arg3: memref<128x128xbf16, #tpu.memory_space<vmem>>, %arg4: memref<1x1x128xf32, #tpu.memory_space<vmem>>, %arg5: memref<1x1x128xf32, #tpu.memory_space<vmem>>) attributes {dimension_semantics = [#tpu.dimension_semantics<parallel>], iteration_bounds = array<i64: 1>, scalar_prefetch = 0 : i64, scratch_operands = 0 : i64, tpu.core_type = #tpu.core_type<tc>, window_params = [{transform_indices = @transform_0, window_bounds = array<i64: 128, 128>}, {pipeline_mode = #tpu.pipeline_mode<synchronous>, transform_indices = @transform_1, window_bounds = array<i64: 128, 128>}, {transform_indices = @transform_2, window_bounds = array<i64: 128, 128>}, {transform_indices = @transform_3, window_bounds = array<i64: 1, 1, 128>}, {transform_indices = @transform_4, window_bounds = array<i64: 1, 1, 128>}]} {
    %c0 = arith.constant 0 : index
    %c0_0 = arith.constant 0 : index
    %0 = vector.load %arg1[%c0, %c0_0] : memref<128x128xf32, #tpu.memory_space<vmem>>, vector<128x128xf32>
    %1 = arith.truncf %0 : vector<128x128xf32> to vector<128x128xbf16>
    %c0_1 = arith.constant 0 : index
    %c0_2 = arith.constant 0 : index
    %2 = vector.load %arg2[%c0_1, %c0_2] : memref<128x128xbf16, #tpu.memory_space<vmem>>, vector<128x128xbf16>
    %cst = arith.constant dense<0.000000e+00> : vector<128x128xf32>
    %3 = tpu.matmul %1, %2, %cst {dimension_numbers = #tpu.dot_dimension_numbers<[1], [0], [0], [1], [0, 0, 1, 1], [], []>} : vector<128x128xbf16>, vector<128x128xbf16>, vector<128x128xf32> -> vector<128x128xf32>
    %4 = arith.truncf %3 : vector<128x128xf32> to vector<128x128xbf16>
    %c0_3 = arith.constant 0 : index
    %c0_4 = arith.constant 0 : index
    %5 = vector.load %arg3[%c0_3, %c0_4] : memref<128x128xbf16, #tpu.memory_space<vmem>>, vector<128x128xbf16>
    tpu.vector_store %arg3[%c0_3, %c0_4], %4 {strides = array<i32>} : memref<128x128xbf16, #tpu.memory_space<vmem>>, vector<128x128xbf16>,
    %6 = arith.extf %4 : vector<128x128xbf16> to vector<128x128xf32>
    %cst_5 = arith.constant dense<0.000000e+00> : vector<128xf32>
    %7 = vector.multi_reduction <add>, %6, %cst_5 [0] : vector<128x128xf32> to vector<128xf32>
    %8 = vector.shape_cast %7 : vector<128xf32> to vector<1x128xf32>
    %9 = vector.shape_cast %8 : vector<1x128xf32> to vector<1x1x128xf32>
    %c0_6 = arith.constant 0 : index
    %c0_7 = arith.constant 0 : index
    %c0_8 = arith.constant 0 : index
    %10 = vector.load %arg4[%c0_6, %c0_7, %c0_8] : memref<1x1x128xf32, #tpu.memory_space<vmem>>, vector<1x1x128xf32>
    tpu.vector_store %arg4[%c0_6, %c0_7, %c0_8], %9 {strides = array<i32>} : memref<1x1x128xf32, #tpu.memory_space<vmem>>, vector<1x1x128xf32>,
    %11 = arith.mulf %6, %6 : vector<128x128xf32>
    %cst_9 = arith.constant dense<0.000000e+00> : vector<128xf32>
    %12 = vector.multi_reduction <add>, %11, %cst_9 [0] : vector<128x128xf32> to vector<128xf32>
    %13 = vector.shape_cast %12 : vector<128xf32> to vector<1x128xf32>
    %14 = vector.shape_cast %13 : vector<1x128xf32> to vector<1x1x128xf32>
    %c0_10 = arith.constant 0 : index
    %c0_11 = arith.constant 0 : index
    %c0_12 = arith.constant 0 : index
    %15 = vector.load %arg5[%c0_10, %c0_11, %c0_12] : memref<1x1x128xf32, #tpu.memory_space<vmem>>, vector<1x1x128xf32>
    tpu.vector_store %arg5[%c0_10, %c0_11, %c0_12], %14 {strides = array<i32>} : memref<1x1x128xf32, #tpu.memory_space<vmem>>, vector<1x1x128xf32>,
    return
  }
  func.func @transform_0(%arg0: i32) -> (i32, i32) {
    %c0_i32 = arith.constant 0 : i32
    %c0_i32_0 = arith.constant 0 : i32
    return %arg0, %c0_i32 : i32, i32
  }
  func.func @transform_1(%arg0: i32) -> (i32, i32) {
    %c0_i32 = arith.constant 0 : i32
    %c0_i32_0 = arith.constant 0 : i32
    %c0_i32_1 = arith.constant 0 : i32
    return %c0_i32, %c0_i32_0 : i32, i32
  }
  func.func @transform_2(%arg0: i32) -> (i32, i32) {
    %c0_i32 = arith.constant 0 : i32
    %c0_i32_0 = arith.constant 0 : i32
    return %arg0, %c0_i32 : i32, i32
  }
  func.func @transform_3(%arg0: i32) -> (i32, i32, i32) {
    %c0_i32 = arith.constant 0 : i32
    %c0_i32_0 = arith.constant 0 : i32
    %c0_i32_1 = arith.constant 0 : i32
    return %arg0, %c0_i32, %c0_i32_0 : i32, i32, i32
  }
  func.func @transform_4(%arg0: i32) -> (i32, i32, i32) {
    %c0_i32 = arith.constant 0 : i32
    %c0_i32_0 = arith.constant 0 : i32
    %c0_i32_1 = arith.constant 0 : i32
    return %arg0, %c0_i32, %c0_i32_0 : i32, i32, i32
  }
}

module attributes {stable_mosaic.version = 11 : i64} {
  func.func @_conv2_kernel(%arg0: i32, %arg1: memref<64x128xbf16, #tpu.memory_space<vmem>>, %arg2: memref<1x128xf32, #tpu.memory_space<vmem>>, %arg3: memref<1x128xf32, #tpu.memory_space<vmem>>, %arg4: memref<9x128x128xbf16, #tpu.memory_space<vmem>>, %arg5: memref<64x128xbf16, #tpu.memory_space<vmem>>, %arg6: memref<1x1x128xf32, #tpu.memory_space<vmem>>, %arg7: memref<1x1x128xf32, #tpu.memory_space<vmem>>, %arg8: memref<96x128xf32, #tpu.memory_space<vmem>>) attributes {dimension_semantics = [#tpu.dimension_semantics<parallel>], iteration_bounds = array<i64: 2>, scalar_prefetch = 0 : i64, scratch_operands = 1 : i64, tpu.core_type = #tpu.core_type<tc>, window_params = [{transform_indices = @transform_0, window_bounds = array<i64: 64, 128>}, {pipeline_mode = #tpu.pipeline_mode<synchronous>, transform_indices = @transform_1, window_bounds = array<i64: 1, 128>}, {pipeline_mode = #tpu.pipeline_mode<synchronous>, transform_indices = @transform_2, window_bounds = array<i64: 1, 128>}, {pipeline_mode = #tpu.pipeline_mode<synchronous>, transform_indices = @transform_3, window_bounds = array<i64: 9, 128, 128>}, {transform_indices = @transform_4, window_bounds = array<i64: 64, 128>}, {transform_indices = @transform_5, window_bounds = array<i64: 1, 1, 128>}, {transform_indices = @transform_6, window_bounds = array<i64: 1, 1, 128>}]} {
    %cst = arith.constant 0.000000e+00 : f32
    %0 = vector.broadcast %cst : f32 to vector<16x128xf32>
    %c0 = arith.constant 0 : index
    %c0_0 = arith.constant 0 : index
    %1 = vector.load %arg8[%c0, %c0_0] : memref<96x128xf32, #tpu.memory_space<vmem>>, vector<16x128xf32>
    tpu.vector_store %arg8[%c0, %c0_0], %0 {strides = array<i32>} : memref<96x128xf32, #tpu.memory_space<vmem>>, vector<16x128xf32>,
    %cst_1 = arith.constant 0.000000e+00 : f32
    %2 = vector.broadcast %cst_1 : f32 to vector<16x128xf32>
    %c80 = arith.constant 80 : index
    %c0_2 = arith.constant 0 : index
    %3 = vector.load %arg8[%c80, %c0_2] : memref<96x128xf32, #tpu.memory_space<vmem>>, vector<16x128xf32>
    tpu.vector_store %arg8[%c80, %c0_2], %2 {strides = array<i32>} : memref<96x128xf32, #tpu.memory_space<vmem>>, vector<16x128xf32>,
    %c0_3 = arith.constant 0 : index
    %c0_4 = arith.constant 0 : index
    %4 = vector.load %arg1[%c0_3, %c0_4] : memref<64x128xbf16, #tpu.memory_space<vmem>>, vector<64x128xbf16>
    %5 = arith.extf %4 : vector<64x128xbf16> to vector<64x128xf32>
    %c0_5 = arith.constant 0 : index
    %c0_6 = arith.constant 0 : index
    %6 = vector.load %arg2[%c0_5, %c0_6] : memref<1x128xf32, #tpu.memory_space<vmem>>, vector<1x128xf32>
    %7 = vector.broadcast %6 : vector<1x128xf32> to vector<64x128xf32>
    %8 = arith.mulf %5, %7 : vector<64x128xf32>
    %c0_7 = arith.constant 0 : index
    %c0_8 = arith.constant 0 : index
    %9 = vector.load %arg3[%c0_7, %c0_8] : memref<1x128xf32, #tpu.memory_space<vmem>>, vector<1x128xf32>
    %10 = vector.broadcast %9 : vector<1x128xf32> to vector<64x128xf32>
    %11 = arith.addf %8, %10 : vector<64x128xf32>
    %cst_9 = arith.constant 0.000000e+00 : f32
    %12 = vector.broadcast %cst_9 : f32 to vector<64x128xf32>
    %13 = arith.maximumf %11, %12 : vector<64x128xf32>
    %c16 = arith.constant 16 : index
    %c0_10 = arith.constant 0 : index
    %14 = vector.load %arg8[%c16, %c0_10] : memref<96x128xf32, #tpu.memory_space<vmem>>, vector<64x128xf32>
    tpu.vector_store %arg8[%c16, %c0_10], %13 {strides = array<i32>} : memref<96x128xf32, #tpu.memory_space<vmem>>, vector<64x128xf32>,
    %15 = tpu.iota {dimensions = array<i32: 0>} : vector<64x1xi32>
    %c8_i32 = arith.constant 8 : i32
    %c0_i32 = arith.constant 0 : i32
    %16 = arith.cmpi eq, %c8_i32, %c0_i32 : i32
    %c1_i32 = arith.constant 1 : i32
    %17 = arith.select %16, %c1_i32, %c8_i32 : i32
    %18 = vector.broadcast %17 : i32 to vector<64x1xi32>
    %19 = arith.remsi %15, %18 : vector<64x1xi32>
    %c0_i32_11 = arith.constant 0 : i32
    %20 = vector.broadcast %c0_i32_11 : i32 to vector<64x1xi32>
    %21 = arith.cmpi ne, %19, %20 : vector<64x1xi32>
    %c0_i32_12 = arith.constant 0 : i32
    %22 = vector.broadcast %c0_i32_12 : i32 to vector<64x1xi32>
    %23 = arith.cmpi slt, %19, %22 : vector<64x1xi32>
    %c0_i32_13 = arith.constant 0 : i32
    %24 = arith.cmpi slt, %17, %c0_i32_13 : i32
    %25 = vector.broadcast %24 : i1 to vector<64x1xi1>
    %26 = vector.broadcast %25 : vector<64x1xi1> to vector<64x1xi1>
    %27 = arith.xori %23, %26 : vector<64x1xi1>
    %28 = arith.andi %27, %21 : vector<64x1xi1>
    %29 = vector.broadcast %17 : i32 to vector<64x1xi32>
    %30 = arith.addi %19, %29 : vector<64x1xi32>
    %31 = arith.select %28, %30, %19 : vector<64x1xi1>, vector<64x1xi32>
    %c7_i32 = arith.constant 7 : i32
    %32 = vector.broadcast %c7_i32 : i32 to vector<64x1xi32>
    %33 = arith.cmpi ne, %31, %32 : vector<64x1xi32>
    %34 = arith.extui %33 : vector<64x1xi1> to vector<64x1xi32>
    %35 = arith.sitofp %34 : vector<64x1xi32> to vector<64x1xf32>
    %c0_i32_14 = arith.constant 0 : i32
    %36 = vector.broadcast %c0_i32_14 : i32 to vector<64x1xi32>
    %37 = arith.cmpi ne, %31, %36 : vector<64x1xi32>
    %38 = arith.extui %37 : vector<64x1xi1> to vector<64x1xi32>
    %39 = arith.sitofp %38 : vector<64x1xi32> to vector<64x1xf32>
    %cst_15 = arith.constant 0.000000e+00 : f32
    %40 = vector.broadcast %cst_15 : f32 to vector<64x128xf32>
    %c7 = arith.constant 7 : index
    %c0_16 = arith.constant 0 : index
    %41 = vector.load %arg8[%c7, %c0_16] : memref<96x128xf32, #tpu.memory_space<vmem>>, vector<64x128xf32>
    %42 = vector.broadcast %39 : vector<64x1xf32> to vector<64x128xf32>
    %43 = arith.mulf %41, %42 : vector<64x128xf32>
    %44 = arith.truncf %43 : vector<64x128xf32> to vector<64x128xbf16>
    %c0_17 = arith.constant 0 : index
    %c0_18 = arith.constant 0 : index
    %c0_19 = arith.constant 0 : index
    %45 = vector.load %arg4[%c0_17, %c0_18, %c0_19] : memref<9x128x128xbf16, #tpu.memory_space<vmem>>, vector<1x128x128xbf16>
    %46 = vector.shape_cast %45 : vector<1x128x128xbf16> to vector<128x128xbf16>
    %cst_20 = arith.constant dense<0.000000e+00> : vector<64x128xf32>
    %47 = tpu.matmul %44, %46, %cst_20 {dimension_numbers = #tpu.dot_dimension_numbers<[1], [0], [0], [1], [0, 0, 1, 1], [], []>} : vector<64x128xbf16>, vector<128x128xbf16>, vector<64x128xf32> -> vector<64x128xf32>
    %48 = arith.addf %40, %47 : vector<64x128xf32>
    %c8 = arith.constant 8 : index
    %c0_21 = arith.constant 0 : index
    %49 = vector.load %arg8[%c8, %c0_21] : memref<96x128xf32, #tpu.memory_space<vmem>>, vector<64x128xf32>
    %50 = arith.truncf %49 : vector<64x128xf32> to vector<64x128xbf16>
    %c1 = arith.constant 1 : index
    %c0_22 = arith.constant 0 : index
    %c0_23 = arith.constant 0 : index
    %51 = vector.load %arg4[%c1, %c0_22, %c0_23] : memref<9x128x128xbf16, #tpu.memory_space<vmem>>, vector<1x128x128xbf16>
    %52 = vector.shape_cast %51 : vector<1x128x128xbf16> to vector<128x128xbf16>
    %cst_24 = arith.constant dense<0.000000e+00> : vector<64x128xf32>
    %53 = tpu.matmul %50, %52, %cst_24 {dimension_numbers = #tpu.dot_dimension_numbers<[1], [0], [0], [1], [0, 0, 1, 1], [], []>} : vector<64x128xbf16>, vector<128x128xbf16>, vector<64x128xf32> -> vector<64x128xf32>
    %54 = arith.addf %48, %53 : vector<64x128xf32>
    %c9 = arith.constant 9 : index
    %c0_25 = arith.constant 0 : index
    %55 = vector.load %arg8[%c9, %c0_25] : memref<96x128xf32, #tpu.memory_space<vmem>>, vector<64x128xf32>
    %56 = vector.broadcast %35 : vector<64x1xf32> to vector<64x128xf32>
    %57 = arith.mulf %55, %56 : vector<64x128xf32>
    %58 = arith.truncf %57 : vector<64x128xf32> to vector<64x128xbf16>
    %c2 = arith.constant 2 : index
    %c0_26 = arith.constant 0 : index
    %c0_27 = arith.constant 0 : index
    %59 = vector.load %arg4[%c2, %c0_26, %c0_27] : memref<9x128x128xbf16, #tpu.memory_space<vmem>>, vector<1x128x128xbf16>
    %60 = vector.shape_cast %59 : vector<1x128x128xbf16> to vector<128x128xbf16>
    %cst_28 = arith.constant dense<0.000000e+00> : vector<64x128xf32>
    %61 = tpu.matmul %58, %60, %cst_28 {dimension_numbers = #tpu.dot_dimension_numbers<[1], [0], [0], [1], [0, 0, 1, 1], [], []>} : vector<64x128xbf16>, vector<128x128xbf16>, vector<64x128xf32> -> vector<64x128xf32>
    %62 = arith.addf %54, %61 : vector<64x128xf32>
    %c15 = arith.constant 15 : index
    %c0_29 = arith.constant 0 : index
    %63 = vector.load %arg8[%c15, %c0_29] : memref<96x128xf32, #tpu.memory_space<vmem>>, vector<64x128xf32>
    %64 = vector.broadcast %39 : vector<64x1xf32> to vector<64x128xf32>
    %65 = arith.mulf %63, %64 : vector<64x128xf32>
    %66 = arith.truncf %65 : vector<64x128xf32> to vector<64x128xbf16>
    %c3 = arith.constant 3 : index
    %c0_30 = arith.constant 0 : index
    %c0_31 = arith.constant 0 : index
    %67 = vector.load %arg4[%c3, %c0_30, %c0_31] : memref<9x128x128xbf16, #tpu.memory_space<vmem>>, vector<1x128x128xbf16>
    %68 = vector.shape_cast %67 : vector<1x128x128xbf16> to vector<128x128xbf16>
    %cst_32 = arith.constant dense<0.000000e+00> : vector<64x128xf32>
    %69 = tpu.matmul %66, %68, %cst_32 {dimension_numbers = #tpu.dot_dimension_numbers<[1], [0], [0], [1], [0, 0, 1, 1], [], []>} : vector<64x128xbf16>, vector<128x128xbf16>, vector<64x128xf32> -> vector<64x128xf32>
    %70 = arith.addf %62, %69 : vector<64x128xf32>
    %c16_33 = arith.constant 16 : index
    %c0_34 = arith.constant 0 : index
    %71 = vector.load %arg8[%c16_33, %c0_34] : memref<96x128xf32, #tpu.memory_space<vmem>>, vector<64x128xf32>
    %72 = arith.truncf %71 : vector<64x128xf32> to vector<64x128xbf16>
    %c4 = arith.constant 4 : index
    %c0_35 = arith.constant 0 : index
    %c0_36 = arith.constant 0 : index
    %73 = vector.load %arg4[%c4, %c0_35, %c0_36] : memref<9x128x128xbf16, #tpu.memory_space<vmem>>, vector<1x128x128xbf16>
    %74 = vector.shape_cast %73 : vector<1x128x128xbf16> to vector<128x128xbf16>
    %cst_37 = arith.constant dense<0.000000e+00> : vector<64x128xf32>
    %75 = tpu.matmul %72, %74, %cst_37 {dimension_numbers = #tpu.dot_dimension_numbers<[1], [0], [0], [1], [0, 0, 1, 1], [], []>} : vector<64x128xbf16>, vector<128x128xbf16>, vector<64x128xf32> -> vector<64x128xf32>
    %76 = arith.addf %70, %75 : vector<64x128xf32>
    %c17 = arith.constant 17 : index
    %c0_38 = arith.constant 0 : index
    %77 = vector.load %arg8[%c17, %c0_38] : memref<96x128xf32, #tpu.memory_space<vmem>>, vector<64x128xf32>
    %78 = vector.broadcast %35 : vector<64x1xf32> to vector<64x128xf32>
    %79 = arith.mulf %77, %78 : vector<64x128xf32>
    %80 = arith.truncf %79 : vector<64x128xf32> to vector<64x128xbf16>
    %c5 = arith.constant 5 : index
    %c0_39 = arith.constant 0 : index
    %c0_40 = arith.constant 0 : index
    %81 = vector.load %arg4[%c5, %c0_39, %c0_40] : memref<9x128x128xbf16, #tpu.memory_space<vmem>>, vector<1x128x128xbf16>
    %82 = vector.shape_cast %81 : vector<1x128x128xbf16> to vector<128x128xbf16>
    %cst_41 = arith.constant dense<0.000000e+00> : vector<64x128xf32>
    %83 = tpu.matmul %80, %82, %cst_41 {dimension_numbers = #tpu.dot_dimension_numbers<[1], [0], [0], [1], [0, 0, 1, 1], [], []>} : vector<64x128xbf16>, vector<128x128xbf16>, vector<64x128xf32> -> vector<64x128xf32>
    %84 = arith.addf %76, %83 : vector<64x128xf32>
    %c23 = arith.constant 23 : index
    %c0_42 = arith.constant 0 : index
    %85 = vector.load %arg8[%c23, %c0_42] : memref<96x128xf32, #tpu.memory_space<vmem>>, vector<64x128xf32>
    %86 = vector.broadcast %39 : vector<64x1xf32> to vector<64x128xf32>
    %87 = arith.mulf %85, %86 : vector<64x128xf32>
    %88 = arith.truncf %87 : vector<64x128xf32> to vector<64x128xbf16>
    %c6 = arith.constant 6 : index
    %c0_43 = arith.constant 0 : index
    %c0_44 = arith.constant 0 : index
    %89 = vector.load %arg4[%c6, %c0_43, %c0_44] : memref<9x128x128xbf16, #tpu.memory_space<vmem>>, vector<1x128x128xbf16>
    %90 = vector.shape_cast %89 : vector<1x128x128xbf16> to vector<128x128xbf16>
    %cst_45 = arith.constant dense<0.000000e+00> : vector<64x128xf32>
    %91 = tpu.matmul %88, %90, %cst_45 {dimension_numbers = #tpu.dot_dimension_numbers<[1], [0], [0], [1], [0, 0, 1, 1], [], []>} : vector<64x128xbf16>, vector<128x128xbf16>, vector<64x128xf32> -> vector<64x128xf32>
    %92 = arith.addf %84, %91 : vector<64x128xf32>
    %c24 = arith.constant 24 : index
    %c0_46 = arith.constant 0 : index
    %93 = vector.load %arg8[%c24, %c0_46] : memref<96x128xf32, #tpu.memory_space<vmem>>, vector<64x128xf32>
    %94 = arith.truncf %93 : vector<64x128xf32> to vector<64x128xbf16>
    %c7_47 = arith.constant 7 : index
    %c0_48 = arith.constant 0 : index
    %c0_49 = arith.constant 0 : index
    %95 = vector.load %arg4[%c7_47, %c0_48, %c0_49] : memref<9x128x128xbf16, #tpu.memory_space<vmem>>, vector<1x128x128xbf16>
    %96 = vector.shape_cast %95 : vector<1x128x128xbf16> to vector<128x128xbf16>
    %cst_50 = arith.constant dense<0.000000e+00> : vector<64x128xf32>
    %97 = tpu.matmul %94, %96, %cst_50 {dimension_numbers = #tpu.dot_dimension_numbers<[1], [0], [0], [1], [0, 0, 1, 1], [], []>} : vector<64x128xbf16>, vector<128x128xbf16>, vector<64x128xf32> -> vector<64x128xf32>
    %98 = arith.addf %92, %97 : vector<64x128xf32>
    %c25 = arith.constant 25 : index
    %c0_51 = arith.constant 0 : index
    %99 = vector.load %arg8[%c25, %c0_51] : memref<96x128xf32, #tpu.memory_space<vmem>>, vector<64x128xf32>
    %100 = vector.broadcast %35 : vector<64x1xf32> to vector<64x128xf32>
    %101 = arith.mulf %99, %100 : vector<64x128xf32>
    %102 = arith.truncf %101 : vector<64x128xf32> to vector<64x128xbf16>
    %c8_52 = arith.constant 8 : index
    %c0_53 = arith.constant 0 : index
    %c0_54 = arith.constant 0 : index
    %103 = vector.load %arg4[%c8_52, %c0_53, %c0_54] : memref<9x128x128xbf16, #tpu.memory_space<vmem>>, vector<1x128x128xbf16>
    %104 = vector.shape_cast %103 : vector<1x128x128xbf16> to vector<128x128xbf16>
    %cst_55 = arith.constant dense<0.000000e+00> : vector<64x128xf32>
    %105 = tpu.matmul %102, %104, %cst_55 {dimension_numbers = #tpu.dot_dimension_numbers<[1], [0], [0], [1], [0, 0, 1, 1], [], []>} : vector<64x128xbf16>, vector<128x128xbf16>, vector<64x128xf32> -> vector<64x128xf32>
    %106 = arith.addf %98, %105 : vector<64x128xf32>
    %107 = arith.truncf %106 : vector<64x128xf32> to vector<64x128xbf16>
    %c0_56 = arith.constant 0 : index
    %c0_57 = arith.constant 0 : index
    %108 = vector.load %arg5[%c0_56, %c0_57] : memref<64x128xbf16, #tpu.memory_space<vmem>>, vector<64x128xbf16>
    tpu.vector_store %arg5[%c0_56, %c0_57], %107 {strides = array<i32>} : memref<64x128xbf16, #tpu.memory_space<vmem>>, vector<64x128xbf16>,
    %109 = arith.extf %107 : vector<64x128xbf16> to vector<64x128xf32>
    %cst_58 = arith.constant dense<0.000000e+00> : vector<128xf32>
    %110 = vector.multi_reduction <add>, %109, %cst_58 [0] : vector<64x128xf32> to vector<128xf32>
    %111 = vector.shape_cast %110 : vector<128xf32> to vector<1x128xf32>
    %112 = vector.shape_cast %111 : vector<1x128xf32> to vector<1x1x128xf32>
    %c0_59 = arith.constant 0 : index
    %c0_60 = arith.constant 0 : index
    %c0_61 = arith.constant 0 : index
    %113 = vector.load %arg6[%c0_59, %c0_60, %c0_61] : memref<1x1x128xf32, #tpu.memory_space<vmem>>, vector<1x1x128xf32>
    tpu.vector_store %arg6[%c0_59, %c0_60, %c0_61], %112 {strides = array<i32>} : memref<1x1x128xf32, #tpu.memory_space<vmem>>, vector<1x1x128xf32>,
    %114 = arith.mulf %109, %109 : vector<64x128xf32>
    %cst_62 = arith.constant dense<0.000000e+00> : vector<128xf32>
    %115 = vector.multi_reduction <add>, %114, %cst_62 [0] : vector<64x128xf32> to vector<128xf32>
    %116 = vector.shape_cast %115 : vector<128xf32> to vector<1x128xf32>
    %117 = vector.shape_cast %116 : vector<1x128xf32> to vector<1x1x128xf32>
    %c0_63 = arith.constant 0 : index
    %c0_64 = arith.constant 0 : index
    %c0_65 = arith.constant 0 : index
    %118 = vector.load %arg7[%c0_63, %c0_64, %c0_65] : memref<1x1x128xf32, #tpu.memory_space<vmem>>, vector<1x1x128xf32>
    tpu.vector_store %arg7[%c0_63, %c0_64, %c0_65], %117 {strides = array<i32>} : memref<1x1x128xf32, #tpu.memory_space<vmem>>, vector<1x1x128xf32>,
    return
  }
  func.func @transform_0(%arg0: i32) -> (i32, i32) {
    %c0_i32 = arith.constant 0 : i32
    %c0_i32_0 = arith.constant 0 : i32
    return %arg0, %c0_i32 : i32, i32
  }
  func.func @transform_1(%arg0: i32) -> (i32, i32) {
    %c0_i32 = arith.constant 0 : i32
    %c0_i32_0 = arith.constant 0 : i32
    %c0_i32_1 = arith.constant 0 : i32
    return %c0_i32, %c0_i32_0 : i32, i32
  }
  func.func @transform_2(%arg0: i32) -> (i32, i32) {
    %c0_i32 = arith.constant 0 : i32
    %c0_i32_0 = arith.constant 0 : i32
    %c0_i32_1 = arith.constant 0 : i32
    return %c0_i32, %c0_i32_0 : i32, i32
  }
  func.func @transform_3(%arg0: i32) -> (i32, i32, i32) {
    %c0_i32 = arith.constant 0 : i32
    %c0_i32_0 = arith.constant 0 : i32
    %c0_i32_1 = arith.constant 0 : i32
    %c0_i32_2 = arith.constant 0 : i32
    return %c0_i32, %c0_i32_0, %c0_i32_1 : i32, i32, i32
  }
  func.func @transform_4(%arg0: i32) -> (i32, i32) {
    %c0_i32 = arith.constant 0 : i32
    %c0_i32_0 = arith.constant 0 : i32
    return %arg0, %c0_i32 : i32, i32
  }
  func.func @transform_5(%arg0: i32) -> (i32, i32, i32) {
    %c0_i32 = arith.constant 0 : i32
    %c0_i32_0 = arith.constant 0 : i32
    %c0_i32_1 = arith.constant 0 : i32
    return %arg0, %c0_i32, %c0_i32_0 : i32, i32, i32
  }
  func.func @transform_6(%arg0: i32) -> (i32, i32, i32) {
    %c0_i32 = arith.constant 0 : i32
    %c0_i32_0 = arith.constant 0 : i32
    %c0_i32_1 = arith.constant 0 : i32
    return %arg0, %c0_i32, %c0_i32_0 : i32, i32, i32
  }
}

module attributes {stable_mosaic.version = 11 : i64} {
  func.func @_conv3_kernel(%arg0: i32, %arg1: memref<128x128xbf16, #tpu.memory_space<vmem>>, %arg2: memref<1x128xf32, #tpu.memory_space<vmem>>, %arg3: memref<1x128xf32, #tpu.memory_space<vmem>>, %arg4: memref<128x128xbf16, #tpu.memory_space<vmem>>, %arg5: memref<128x128xbf16, #tpu.memory_space<vmem>>, %arg6: memref<1x1x128xf32, #tpu.memory_space<vmem>>, %arg7: memref<1x1x128xf32, #tpu.memory_space<vmem>>) attributes {dimension_semantics = [#tpu.dimension_semantics<parallel>], iteration_bounds = array<i64: 1>, scalar_prefetch = 0 : i64, scratch_operands = 0 : i64, tpu.core_type = #tpu.core_type<tc>, window_params = [{transform_indices = @transform_0, window_bounds = array<i64: 128, 128>}, {pipeline_mode = #tpu.pipeline_mode<synchronous>, transform_indices = @transform_1, window_bounds = array<i64: 1, 128>}, {pipeline_mode = #tpu.pipeline_mode<synchronous>, transform_indices = @transform_2, window_bounds = array<i64: 1, 128>}, {pipeline_mode = #tpu.pipeline_mode<synchronous>, transform_indices = @transform_3, window_bounds = array<i64: 128, 128>}, {transform_indices = @transform_4, window_bounds = array<i64: 128, 128>}, {transform_indices = @transform_5, window_bounds = array<i64: 1, 1, 128>}, {transform_indices = @transform_6, window_bounds = array<i64: 1, 1, 128>}]} {
    %c0 = arith.constant 0 : index
    %c0_0 = arith.constant 0 : index
    %0 = vector.load %arg1[%c0, %c0_0] : memref<128x128xbf16, #tpu.memory_space<vmem>>, vector<128x128xbf16>
    %1 = arith.extf %0 : vector<128x128xbf16> to vector<128x128xf32>
    %c0_1 = arith.constant 0 : index
    %c0_2 = arith.constant 0 : index
    %2 = vector.load %arg2[%c0_1, %c0_2] : memref<1x128xf32, #tpu.memory_space<vmem>>, vector<1x128xf32>
    %3 = vector.broadcast %2 : vector<1x128xf32> to vector<128x128xf32>
    %4 = arith.mulf %1, %3 : vector<128x128xf32>
    %c0_3 = arith.constant 0 : index
    %c0_4 = arith.constant 0 : index
    %5 = vector.load %arg3[%c0_3, %c0_4] : memref<1x128xf32, #tpu.memory_space<vmem>>, vector<1x128xf32>
    %6 = vector.broadcast %5 : vector<1x128xf32> to vector<128x128xf32>
    %7 = arith.addf %4, %6 : vector<128x128xf32>
    %cst = arith.constant 0.000000e+00 : f32
    %8 = vector.broadcast %cst : f32 to vector<128x128xf32>
    %9 = arith.maximumf %7, %8 : vector<128x128xf32>
    %10 = arith.truncf %9 : vector<128x128xf32> to vector<128x128xbf16>
    %c0_5 = arith.constant 0 : index
    %c0_6 = arith.constant 0 : index
    %11 = vector.load %arg4[%c0_5, %c0_6] : memref<128x128xbf16, #tpu.memory_space<vmem>>, vector<128x128xbf16>
    %cst_7 = arith.constant dense<0.000000e+00> : vector<128x128xf32>
    %12 = tpu.matmul %10, %11, %cst_7 {dimension_numbers = #tpu.dot_dimension_numbers<[1], [0], [0], [1], [0, 0, 1, 1], [], []>} : vector<128x128xbf16>, vector<128x128xbf16>, vector<128x128xf32> -> vector<128x128xf32>
    %13 = arith.truncf %12 : vector<128x128xf32> to vector<128x128xbf16>
    %c0_8 = arith.constant 0 : index
    %c0_9 = arith.constant 0 : index
    %14 = vector.load %arg5[%c0_8, %c0_9] : memref<128x128xbf16, #tpu.memory_space<vmem>>, vector<128x128xbf16>
    tpu.vector_store %arg5[%c0_8, %c0_9], %13 {strides = array<i32>} : memref<128x128xbf16, #tpu.memory_space<vmem>>, vector<128x128xbf16>,
    %15 = arith.extf %13 : vector<128x128xbf16> to vector<128x128xf32>
    %cst_10 = arith.constant dense<0.000000e+00> : vector<128xf32>
    %16 = vector.multi_reduction <add>, %15, %cst_10 [0] : vector<128x128xf32> to vector<128xf32>
    %17 = vector.shape_cast %16 : vector<128xf32> to vector<1x128xf32>
    %18 = vector.shape_cast %17 : vector<1x128xf32> to vector<1x1x128xf32>
    %c0_11 = arith.constant 0 : index
    %c0_12 = arith.constant 0 : index
    %c0_13 = arith.constant 0 : index
    %19 = vector.load %arg6[%c0_11, %c0_12, %c0_13] : memref<1x1x128xf32, #tpu.memory_space<vmem>>, vector<1x1x128xf32>
    tpu.vector_store %arg6[%c0_11, %c0_12, %c0_13], %18 {strides = array<i32>} : memref<1x1x128xf32, #tpu.memory_space<vmem>>, vector<1x1x128xf32>,
    %20 = arith.mulf %15, %15 : vector<128x128xf32>
    %cst_14 = arith.constant dense<0.000000e+00> : vector<128xf32>
    %21 = vector.multi_reduction <add>, %20, %cst_14 [0] : vector<128x128xf32> to vector<128xf32>
    %22 = vector.shape_cast %21 : vector<128xf32> to vector<1x128xf32>
    %23 = vector.shape_cast %22 : vector<1x128xf32> to vector<1x1x128xf32>
    %c0_15 = arith.constant 0 : index
    %c0_16 = arith.constant 0 : index
    %c0_17 = arith.constant 0 : index
    %24 = vector.load %arg7[%c0_15, %c0_16, %c0_17] : memref<1x1x128xf32, #tpu.memory_space<vmem>>, vector<1x1x128xf32>
    tpu.vector_store %arg7[%c0_15, %c0_16, %c0_17], %23 {strides = array<i32>} : memref<1x1x128xf32, #tpu.memory_space<vmem>>, vector<1x1x128xf32>,
    return
  }
  func.func @transform_0(%arg0: i32) -> (i32, i32) {
    %c0_i32 = arith.constant 0 : i32
    %c0_i32_0 = arith.constant 0 : i32
    return %arg0, %c0_i32 : i32, i32
  }
  func.func @transform_1(%arg0: i32) -> (i32, i32) {
    %c0_i32 = arith.constant 0 : i32
    %c0_i32_0 = arith.constant 0 : i32
    %c0_i32_1 = arith.constant 0 : i32
    return %c0_i32, %c0_i32_0 : i32, i32
  }
  func.func @transform_2(%arg0: i32) -> (i32, i32) {
    %c0_i32 = arith.constant 0 : i32
    %c0_i32_0 = arith.constant 0 : i32
    %c0_i32_1 = arith.constant 0 : i32
    return %c0_i32, %c0_i32_0 : i32, i32
  }
  func.func @transform_3(%arg0: i32) -> (i32, i32) {
    %c0_i32 = arith.constant 0 : i32
    %c0_i32_0 = arith.constant 0 : i32
    %c0_i32_1 = arith.constant 0 : i32
    return %c0_i32, %c0_i32_0 : i32, i32
  }
  func.func @transform_4(%arg0: i32) -> (i32, i32) {
    %c0_i32 = arith.constant 0 : i32
    %c0_i32_0 = arith.constant 0 : i32
    return %arg0, %c0_i32 : i32, i32
  }
  func.func @transform_5(%arg0: i32) -> (i32, i32, i32) {
    %c0_i32 = arith.constant 0 : i32
    %c0_i32_0 = arith.constant 0 : i32
    %c0_i32_1 = arith.constant 0 : i32
    return %arg0, %c0_i32, %c0_i32_0 : i32, i32, i32
  }
  func.func @transform_6(%arg0: i32) -> (i32, i32, i32) {
    %c0_i32 = arith.constant 0 : i32
    %c0_i32_0 = arith.constant 0 : i32
    %c0_i32_1 = arith.constant 0 : i32
    return %arg0, %c0_i32, %c0_i32_0 : i32, i32, i32
  }
}

module attributes {stable_mosaic.version = 11 : i64} {
  func.func @_bn3_residual_kernel(%arg0: i32, %arg1: memref<128x128xbf16, #tpu.memory_space<vmem>>, %arg2: memref<128x128xf32, #tpu.memory_space<vmem>>, %arg3: memref<1x128xf32, #tpu.memory_space<vmem>>, %arg4: memref<1x128xf32, #tpu.memory_space<vmem>>, %arg5: memref<128x128xf32, #tpu.memory_space<vmem>>) attributes {dimension_semantics = [#tpu.dimension_semantics<parallel>], iteration_bounds = array<i64: 1>, scalar_prefetch = 0 : i64, scratch_operands = 0 : i64, tpu.core_type = #tpu.core_type<tc>, window_params = [{transform_indices = @transform_0, window_bounds = array<i64: 128, 128>}, {transform_indices = @transform_1, window_bounds = array<i64: 128, 128>}, {pipeline_mode = #tpu.pipeline_mode<synchronous>, transform_indices = @transform_2, window_bounds = array<i64: 1, 128>}, {pipeline_mode = #tpu.pipeline_mode<synchronous>, transform_indices = @transform_3, window_bounds = array<i64: 1, 128>}, {transform_indices = @transform_4, window_bounds = array<i64: 128, 128>}]} {
    %c0 = arith.constant 0 : index
    %c0_0 = arith.constant 0 : index
    %0 = vector.load %arg1[%c0, %c0_0] : memref<128x128xbf16, #tpu.memory_space<vmem>>, vector<128x128xbf16>
    %1 = arith.extf %0 : vector<128x128xbf16> to vector<128x128xf32>
    %c0_1 = arith.constant 0 : index
    %c0_2 = arith.constant 0 : index
    %2 = vector.load %arg3[%c0_1, %c0_2] : memref<1x128xf32, #tpu.memory_space<vmem>>, vector<1x128xf32>
    %3 = vector.broadcast %2 : vector<1x128xf32> to vector<128x128xf32>
    %4 = arith.mulf %1, %3 : vector<128x128xf32>
    %c0_3 = arith.constant 0 : index
    %c0_4 = arith.constant 0 : index
    %5 = vector.load %arg4[%c0_3, %c0_4] : memref<1x128xf32, #tpu.memory_space<vmem>>, vector<1x128xf32>
    %6 = vector.broadcast %5 : vector<1x128xf32> to vector<128x128xf32>
    %7 = arith.addf %4, %6 : vector<128x128xf32>
    %c0_5 = arith.constant 0 : index
    %c0_6 = arith.constant 0 : index
    %8 = vector.load %arg2[%c0_5, %c0_6] : memref<128x128xf32, #tpu.memory_space<vmem>>, vector<128x128xf32>
    %9 = arith.addf %7, %8 : vector<128x128xf32>
    %cst = arith.constant 0.000000e+00 : f32
    %10 = vector.broadcast %cst : f32 to vector<128x128xf32>
    %11 = arith.maximumf %9, %10 : vector<128x128xf32>
    %c0_7 = arith.constant 0 : index
    %c0_8 = arith.constant 0 : index
    %12 = vector.load %arg5[%c0_7, %c0_8] : memref<128x128xf32, #tpu.memory_space<vmem>>, vector<128x128xf32>
    tpu.vector_store %arg5[%c0_7, %c0_8], %11 {strides = array<i32>} : memref<128x128xf32, #tpu.memory_space<vmem>>, vector<128x128xf32>,
    return
  }
  func.func @transform_0(%arg0: i32) -> (i32, i32) {
    %c0_i32 = arith.constant 0 : i32
    %c0_i32_0 = arith.constant 0 : i32
    return %arg0, %c0_i32 : i32, i32
  }
  func.func @transform_1(%arg0: i32) -> (i32, i32) {
    %c0_i32 = arith.constant 0 : i32
    %c0_i32_0 = arith.constant 0 : i32
    return %arg0, %c0_i32 : i32, i32
  }
  func.func @transform_2(%arg0: i32) -> (i32, i32) {
    %c0_i32 = arith.constant 0 : i32
    %c0_i32_0 = arith.constant 0 : i32
    %c0_i32_1 = arith.constant 0 : i32
    return %c0_i32, %c0_i32_0 : i32, i32
  }
  func.func @transform_3(%arg0: i32) -> (i32, i32) {
    %c0_i32 = arith.constant 0 : i32
    %c0_i32_0 = arith.constant 0 : i32
    %c0_i32_1 = arith.constant 0 : i32
    return %c0_i32, %c0_i32_0 : i32, i32
  }
  func.func @transform_4(%arg0: i32) -> (i32, i32) {
    %c0_i32 = arith.constant 0 : i32
    %c0_i32_0 = arith.constant 0 : i32
    return %arg0, %c0_i32 : i32, i32
  }
}

</mosaic_0001>

<llo_original>
// kernel: bottleneck_block.4
$region0: #{bottleneck_block.4}
  #allocation0 [shape = 'u32[]', space=smem, size = 0x4, offset = 0x4, fixed_abs, tag = 'smem constant byte address 0x4 - core index']
  #allocation1 [shape = 'u32[144,128]{1,0:T(1,128)}', space=vmem, size = 0x12000, scoped, tag = 'internal scratch']
  %s0 = inlined_call_operand.vmem [shape: f32[128,128], index: 0, kind: input, shape index: {}]
  %s1 = inlined_call_operand.vmem [shape: bf16[128,128], index: 1, kind: input, shape index: {}]
  %s2 = inlined_call_operand.vmem [shape: bf16[128,128], index: 2, kind: output, shape index: {0}]
  %s3 = inlined_call_operand.vmem [shape: f32[1,1,128], index: 3, kind: output, shape index: {1}]
  %s4 = inlined_call_operand.vmem [shape: f32[1,1,128], index: 4, kind: output, shape index: {2}]
  %5 = xla_tuple %s2, %s3, %s4
  %s6 = sld [smem:[#allocation0]]
  $region34: #{bottleneck_block.4} parent=0
    _
  %s8 = ssub.s32 1, %s6
  %s9 = scalar_select 0, %s8, %s6
  // Predicated region
  $region2: #{bottleneck_block.4} parent=0 // pred_check
    _
  $region3: #{bottleneck_block.4} parent=0 // pred_check_branch
    %11 = sbr.rel (0) target = $region5
  $region4: #{bottleneck_block.4} parent=0 // pred_region
    _
  $region5: #{bottleneck_block.4} parent=0 // pred_fallthru
    _
  // Predicated region
  $region6: #{bottleneck_block.4} parent=0 // pred_check
    _
  $region7: #{bottleneck_block.4} parent=0 // pred_check_branch
    %13 = sbr.rel (0) target = $region9
  $region8: #{bottleneck_block.4} parent=0 // pred_region
    _
  $region9: #{bottleneck_block.4} parent=0 // pred_fallthru
    _
  %v15 = vld [vmem:[%s0] sm:$0xff]
  %v16 = vld [vmem:[%s0 + $0x8] sm:$0xff]
  %v17 = vld [vmem:[%s0 + $0x10] sm:$0xff]
  %v18 = vld [vmem:[%s0 + $0x18] sm:$0xff]
  %v19 = vld [vmem:[%s0 + $0x20] sm:$0xff]
  %v20 = vld [vmem:[%s0 + $0x28] sm:$0xff]
  %v21 = vld [vmem:[%s0 + $0x30] sm:$0xff]
  %v22 = vld [vmem:[%s0 + $0x38] sm:$0xff]
  %v23 = vld [vmem:[%s0 + $0x40] sm:$0xff]
  %v24 = vld [vmem:[%s0 + $0x48] sm:$0xff]
  %v25 = vld [vmem:[%s0 + $0x50] sm:$0xff]
  %v26 = vld [vmem:[%s0 + $0x58] sm:$0xff]
  %v27 = vld [vmem:[%s0 + $0x60] sm:$0xff]
  %v28 = vld [vmem:[%s0 + $0x68] sm:$0xff]
  %v29 = vld [vmem:[%s0 + $0x70] sm:$0xff]
  %v30 = vld [vmem:[%s0 + $0x78] sm:$0xff]
  %v31 = vpack.c.bf16 %v16, %v15
  %v32 = vpack.c.bf16 %v18, %v17
  %v33 = vpack.c.bf16 %v20, %v19
  %v34 = vpack.c.bf16 %v22, %v21
  %v35 = vpack.c.bf16 %v24, %v23
  %v36 = vpack.c.bf16 %v26, %v25
  %v37 = vpack.c.bf16 %v28, %v27
  %v38 = vpack.c.bf16 %v30, %v29
  %v39 = vld [vmem:[%s1] sm:$0xf]
  %v40 = vld [vmem:[%s1 + $0x4] sm:$0xf]
  %v41 = vld [vmem:[%s1 + $0x8] sm:$0xf]
  %v42 = vld [vmem:[%s1 + $0xc] sm:$0xf]
  %v43 = vld [vmem:[%s1 + $0x10] sm:$0xf]
  %v44 = vld [vmem:[%s1 + $0x14] sm:$0xf]
  %v45 = vld [vmem:[%s1 + $0x18] sm:$0xf]
  %v46 = vld [vmem:[%s1 + $0x1c] sm:$0xf]
  %v47 = vld [vmem:[%s1 + $0x20] sm:$0xf]
  %v48 = vld [vmem:[%s1 + $0x24] sm:$0xf]
  %v49 = vld [vmem:[%s1 + $0x28] sm:$0xf]
  %v50 = vld [vmem:[%s1 + $0x2c] sm:$0xf]
  %v51 = vld [vmem:[%s1 + $0x30] sm:$0xf]
  %v52 = vld [vmem:[%s1 + $0x34] sm:$0xf]
  %v53 = vld [vmem:[%s1 + $0x38] sm:$0xf]
  %v54 = vld [vmem:[%s1 + $0x3c] sm:$0xf]
  %v71 = vunpack.c.l.b16 %v39
  %v72 = vunpack.c.l.b16 %v40
  %v73 = vunpack.c.l.b16 %v41
  %v74 = vunpack.c.l.b16 %v42
  %v75 = vunpack.c.l.b16 %v43
  %v76 = vunpack.c.l.b16 %v44
  %v77 = vunpack.c.l.b16 %v45
  %v78 = vunpack.c.l.b16 %v46
  %v79 = vunpack.c.l.b16 %v47
  %v80 = vunpack.c.l.b16 %v48
  %v81 = vunpack.c.l.b16 %v49
  %v82 = vunpack.c.l.b16 %v50
  %v83 = vunpack.c.l.b16 %v51
  %v84 = vunpack.c.l.b16 %v52
  %v85 = vunpack.c.l.b16 %v53
  %v86 = vunpack.c.l.b16 %v54
  %v87 = vpack.c.b16 %v72, %v71
  %v88 = vpack.c.b16 %v74, %v73
  %v89 = vpack.c.b16 %v76, %v75
  %v90 = vpack.c.b16 %v78, %v77
  %v91 = vpack.c.b16 %v80, %v79
  %v92 = vpack.c.b16 %v82, %v81
  %v93 = vpack.c.b16 %v84, %v83
  %v94 = vpack.c.b16 %v86, %v85
  %103 = vmatprep.subr.bf16.mxu0 0
  %104 = vmatpush1.bf16.msra.mxu0 %v87
  %105 = vmatprep.subr.bf16.mxu0 0
  %106 = vmatpush1.bf16.msra.mxu0 %v88
  %107 = vmatprep.subr.bf16.mxu0 0
  %108 = vmatpush1.bf16.msra.mxu0 %v89
  %109 = vmatprep.subr.bf16.mxu0 0
  %110 = vmatpush1.bf16.msra.mxu0 %v90
  %111 = vmatprep.subr.bf16.mxu0 0
  %112 = vmatpush1.bf16.msra.mxu0 %v91
  %113 = vmatprep.subr.bf16.mxu0 0
  %114 = vmatpush1.bf16.msra.mxu0 %v92
  %115 = vmatprep.subr.bf16.mxu0 0
  %116 = vmatpush1.bf16.msra.mxu0 %v93
  %117 = vmatprep.subr.bf16.mxu0 0
  %118 = vmatpush1.bf16.msra.mxu0 %v94
  %119 = vmatprep.subr.bf16.mxu0 0
  %120 = vmatpush1.bf16.msra.mxu0 0
  %121 = vmatprep.subr.bf16.mxu0 0
  %122 = vmatpush1.bf16.msra.mxu0 0
  %123 = vmatprep.subr.bf16.mxu0 0
  %124 = vmatpush1.bf16.msra.mxu0 0
  %125 = vmatprep.subr.bf16.mxu0 0
  %126 = vmatpush1.bf16.msra.mxu0 0
  %127 = vmatprep.subr.bf16.mxu0 0
  %128 = vmatpush1.bf16.msra.mxu0 0
  %129 = vmatprep.subr.bf16.mxu0 0
  %130 = vmatpush1.bf16.msra.mxu0 0
  %131 = vmatprep.subr.bf16.mxu0 0
  %132 = vmatpush1.bf16.msra.mxu0 0
  %133 = vmatprep.subr.bf16.mxu0 0
  %134 = vmatpush1.bf16.msra.mxu0 0
  %135 = vmatprep.mubr.bf16.mxu0 0
  %136 = vmatmul.mubr.bf16.gmra.mrb[0].mxu0 %v31
  %v137 = vpop.f32.mrb[0].mxu0
  %v138 = vadd.f32 0.0, %v137
  %v139 = vpop.f32.mrb[0].mxu0
  %v140 = vpop.f32.mrb[0].mxu0
  %v141 = vadd.f32 0.0, %v140
  %v142 = vpop.f32.mrb[0].mxu0
  %143 = vmatprep.mubr.bf16.mxu0 0
  %144 = vmatmul.mubr.bf16.gmra.mrb[0].mxu0 %v32
  %v145 = vpop.f32.mrb[0].mxu0
  %v146 = vadd.f32 0.0, %v145
  %v147 = vpop.f32.mrb[0].mxu0
  %v148 = vpop.f32.mrb[0].mxu0
  %v149 = vadd.f32 0.0, %v148
  %v150 = vpop.f32.mrb[0].mxu0
  %151 = vmatprep.mubr.bf16.mxu0 0
  %152 = vmatmul.mubr.bf16.gmra.mrb[0].mxu0 %v33
  %v153 = vpop.f32.mrb[0].mxu0
  %v154 = vadd.f32 0.0, %v153
  %v155 = vpop.f32.mrb[0].mxu0
  %v156 = vpop.f32.mrb[0].mxu0
  %v157 = vadd.f32 0.0, %v156
  %v158 = vpop.f32.mrb[0].mxu0
  %159 = vmatprep.mubr.bf16.mxu0 0
  %160 = vmatmul.mubr.bf16.gmra.mrb[0].mxu0 %v34
  %v161 = vpop.f32.mrb[0].mxu0
  %v162 = vadd.f32 0.0, %v161
  %v163 = vpop.f32.mrb[0].mxu0
  %v164 = vpop.f32.mrb[0].mxu0
  %v165 = vadd.f32 0.0, %v164
  %v166 = vpop.f32.mrb[0].mxu0
  %167 = vmatprep.mubr.bf16.mxu0 0
  %168 = vmatmul.mubr.bf16.gmra.mrb[0].mxu0 %v35
  %v169 = vpop.f32.mrb[0].mxu0
  %v170 = vadd.f32 0.0, %v169
  %v171 = vpop.f32.mrb[0].mxu0
  %v172 = vpop.f32.mrb[0].mxu0
  %v173 = vadd.f32 0.0, %v172
  %v174 = vpop.f32.mrb[0].mxu0
  %175 = vmatprep.mubr.bf16.mxu0 0
  %176 = vmatmul.mubr.bf16.gmra.mrb[0].mxu0 %v36
  %v177 = vpop.f32.mrb[0].mxu0
  %v178 = vadd.f32 0.0, %v177
  %v179 = vpop.f32.mrb[0].mxu0
  %v180 = vpop.f32.mrb[0].mxu0
  %v181 = vadd.f32 0.0, %v180
  %v182 = vpop.f32.mrb[0].mxu0
  %183 = vmatprep.mubr.bf16.mxu0 0
  %184 = vmatmul.mubr.bf16.gmra.mrb[0].mxu0 %v37
  %v185 = vpop.f32.mrb[0].mxu0
  %v186 = vadd.f32 0.0, %v185
  %v187 = vpop.f32.mrb[0].mxu0
  %v188 = vpop.f32.mrb[0].mxu0
  %v189 = vadd.f32 0.0, %v188
  %v190 = vpop.f32.mrb[0].mxu0
  %191 = vmatprep.mubr.bf16.mxu0 0
  %192 = vmatmul.mubr.bf16.gmra.mrb[0].mxu0 %v38
  %v193 = vpop.f32.mrb[0].mxu0
  %v194 = vadd.f32 0.0, %v193
  %v195 = vpop.f32.mrb[0].mxu0
  %v196 = vpop.f32.mrb[0].mxu0
  %v197 = vadd.f32 0.0, %v196
  %v198 = vpop.f32.mrb[0].mxu0
  %199 = vdwg.mxu0
  %v200 = vpack.c.bf16 %v141, %v138
  %v201 = vpack.c.bf16 %v149, %v146
  %v202 = vpack.c.bf16 %v157, %v154
  %v203 = vpack.c.bf16 %v165, %v162
  %v204 = vpack.c.bf16 %v173, %v170
  %v205 = vpack.c.bf16 %v181, %v178
  %v206 = vpack.c.bf16 %v189, %v186
  %v207 = vpack.c.bf16 %v197, %v194
  %v216 = vunpack.c.l.b16 %v200
  %v217 = vunpack.c.h.b16 %v200
  %v218 = vunpack.c.l.b16 %v201
  %v219 = vunpack.c.h.b16 %v201
  %v220 = vunpack.c.l.b16 %v202
  %v221 = vunpack.c.h.b16 %v202
  %v222 = vunpack.c.l.b16 %v203
  %v223 = vunpack.c.h.b16 %v203
  %v224 = vunpack.c.l.b16 %v204
  %v225 = vunpack.c.h.b16 %v204
  %v226 = vunpack.c.l.b16 %v205
  %v227 = vunpack.c.h.b16 %v205
  %v228 = vunpack.c.l.b16 %v206
  %v229 = vunpack.c.h.b16 %v206
  %v230 = vunpack.c.l.b16 %v207
  %v231 = vunpack.c.h.b16 %v207
  %v232 = vpack.c.b16 %v216, %v216
  %v233 = vpack.c.b16 %v217, %v217
  %v234 = vpack.c.b16 %v218, %v218
  %v235 = vpack.c.b16 %v219, %v219
  %v236 = vpack.c.b16 %v220, %v220
  %v237 = vpack.c.b16 %v221, %v221
  %v238 = vpack.c.b16 %v222, %v222
  %v239 = vpack.c.b16 %v223, %v223
  %v240 = vpack.c.b16 %v224, %v224
  %v241 = vpack.c.b16 %v225, %v225
  %v242 = vpack.c.b16 %v226, %v226
  %v243 = vpack.c.b16 %v227, %v227
  %v244 = vpack.c.b16 %v228, %v228
  %v245 = vpack.c.b16 %v229, %v229
  %v246 = vpack.c.b16 %v230, %v230
  %v247 = vpack.c.b16 %v231, %v231
  %264 = vst [vmem:[%s2] sm:$0xf] %v232
  %265 = vst [vmem:[%s2 + $0x4] sm:$0xf] %v233
  %266 = vst [vmem:[%s2 + $0x8] sm:$0xf] %v234
  %267 = vst [vmem:[%s2 + $0xc] sm:$0xf] %v235
  %268 = vst [vmem:[%s2 + $0x10] sm:$0xf] %v236
  %269 = vst [vmem:[%s2 + $0x14] sm:$0xf] %v237
  %270 = vst [vmem:[%s2 + $0x18] sm:$0xf] %v238
  %271 = vst [vmem:[%s2 + $0x1c] sm:$0xf] %v239
  %272 = vst [vmem:[%s2 + $0x20] sm:$0xf] %v240
  %273 = vst [vmem:[%s2 + $0x24] sm:$0xf] %v241
  %274 = vst [vmem:[%s2 + $0x28] sm:$0xf] %v242
  %275 = vst [vmem:[%s2 + $0x2c] sm:$0xf] %v243
  %276 = vst [vmem:[%s2 + $0x30] sm:$0xf] %v244
  %277 = vst [vmem:[%s2 + $0x34] sm:$0xf] %v245
  %278 = vst [vmem:[%s2 + $0x38] sm:$0xf] %v246
  %279 = vst [vmem:[%s2 + $0x3c] sm:$0xf] %v247
  %v280 = vunpack.c.l.bf16 %v200
  %v281 = vunpack.c.h.bf16 %v200
  %v282 = vunpack.c.l.bf16 %v201
  %v283 = vunpack.c.h.bf16 %v201
  %v284 = vunpack.c.l.bf16 %v202
  %v285 = vunpack.c.h.bf16 %v202
  %v286 = vunpack.c.l.bf16 %v203
  %v287 = vunpack.c.h.bf16 %v203
  %v288 = vunpack.c.l.bf16 %v204
  %v289 = vunpack.c.h.bf16 %v204
  %v290 = vunpack.c.l.bf16 %v205
  %v291 = vunpack.c.h.bf16 %v205
  %v292 = vunpack.c.l.bf16 %v206
  %v293 = vunpack.c.h.bf16 %v206
  %v294 = vunpack.c.l.bf16 %v207
  %v295 = vunpack.c.h.bf16 %v207
  %v296 = vadd.f32 %v280, %v281
  %v297 = vadd.f32 %v296, %v282
  %v298 = vadd.f32 %v297, %v283
  %v299 = vadd.f32 %v298, %v284
  %v300 = vadd.f32 %v299, %v285
  %v301 = vadd.f32 %v300, %v286
  %v302 = vadd.f32 %v301, %v287
  %v303 = vadd.f32 %v302, %v288
  %v304 = vadd.f32 %v303, %v289
  %v305 = vadd.f32 %v304, %v290
  %v306 = vadd.f32 %v305, %v291
  %v307 = vadd.f32 %v306, %v292
  %v308 = vadd.f32 %v307, %v293
  %v309 = vadd.f32 %v308, %v294
  %v310 = vadd.f32 %v309, %v295
  %v311 = vrot.slane %v310, 4
  %v312 = vadd.f32 %v310, %v311
  %v313 = vrot.slane %v312, 2
  %v314 = vadd.f32 %v312, %v313
  %v315 = vrot.slane %v314, 1
  %v316 = vadd.f32 %v314, %v315
  %317 = vst [vmem:[%s3] sm:$0x1] %v316
  %v318 = vmul.f32 %v280, %v280
  %v319 = vmul.f32 %v281, %v281
  %v320 = vmul.f32 %v282, %v282
  %v321 = vmul.f32 %v283, %v283
  %v322 = vmul.f32 %v284, %v284
  %v323 = vmul.f32 %v285, %v285
  %v324 = vmul.f32 %v286, %v286
  %v325 = vmul.f32 %v287, %v287
  %v326 = vmul.f32 %v288, %v288
  %v327 = vmul.f32 %v289, %v289
  %v328 = vmul.f32 %v290, %v290
  %v329 = vmul.f32 %v291, %v291
  %v330 = vmul.f32 %v292, %v292
  %v331 = vmul.f32 %v293, %v293
  %v332 = vmul.f32 %v294, %v294
  %v333 = vmul.f32 %v295, %v295
  %v334 = vadd.f32 %v318, %v319
  %v335 = vadd.f32 %v334, %v320
  %v336 = vadd.f32 %v335, %v321
  %v337 = vadd.f32 %v336, %v322
  %v338 = vadd.f32 %v337, %v323
  %v339 = vadd.f32 %v338, %v324
  %v340 = vadd.f32 %v339, %v325
  %v341 = vadd.f32 %v340, %v326
  %v342 = vadd.f32 %v341, %v327
  %v343 = vadd.f32 %v342, %v328
  %v344 = vadd.f32 %v343, %v329
  %v345 = vadd.f32 %v344, %v330
  %v346 = vadd.f32 %v345, %v331
  %v347 = vadd.f32 %v346, %v332
  %v348 = vadd.f32 %v347, %v333
  %v349 = vrot.slane %v348, 4
  %v350 = vadd.f32 %v348, %v349
  %v351 = vrot.slane %v350, 2
  %v352 = vadd.f32 %v350, %v351
  %v353 = vrot.slane %v352, 1
  %v354 = vadd.f32 %v352, %v353
  %355 = vst [vmem:[%s4] sm:$0x1] %v354
  // Predicated region
  $region10: #{bottleneck_block.4} parent=0 // pred_check
    _
  $region11: #{bottleneck_block.4} parent=0 // pred_check_branch
    %357 = sbr.rel (0) target = $region13
  $region12: #{bottleneck_block.4} parent=0 // pred_region
    _
  $region13: #{bottleneck_block.4} parent=0 // pred_fallthru
    _
  // Predicated region
  $region14: #{bottleneck_block.4} parent=0 // pred_check
    _
  $region15: #{bottleneck_block.4} parent=0 // pred_check_branch
    %359 = sbr.rel (0) target = $region17
  $region16: #{bottleneck_block.4} parent=0 // pred_region
    _
  $region17: #{bottleneck_block.4} parent=0 // pred_fallthru
    _
  // Predicated region
  $region18: #{bottleneck_block.4} parent=0 // pred_check
    _
  $region19: #{bottleneck_block.4} parent=0 // pred_check_branch
    %361 = sbr.rel (0) target = $region21
  $region20: #{bottleneck_block.4} parent=0 // pred_region
    _
  $region21: #{bottleneck_block.4} parent=0 // pred_fallthru
    _
  // Predicated region
  $region22: #{bottleneck_block.4} parent=0 // pred_check
    _
  $region23: #{bottleneck_block.4} parent=0 // pred_check_branch
    %363 = sbr.rel (0) target = $region25
  $region24: #{bottleneck_block.4} parent=0 // pred_region
    _
  $region25: #{bottleneck_block.4} parent=0 // pred_fallthru
    _
  // Predicated region
  $region26: #{bottleneck_block.4} parent=0 // pred_check
    _
  $region27: #{bottleneck_block.4} parent=0 // pred_check_branch
    %365 = sbr.rel (0) target = $region29
  $region28: #{bottleneck_block.4} parent=0 // pred_region
    _
  $region29: #{bottleneck_block.4} parent=0 // pred_fallthru
    _
  // Predicated region
  $region30: #{bottleneck_block.4} parent=0 // pred_check
    _
  $region31: #{bottleneck_block.4} parent=0 // pred_check_branch
    %367 = sbr.rel (0) target = $region33
  $region32: #{bottleneck_block.4} parent=0 // pred_region
    _
  $region33: #{bottleneck_block.4} parent=0 // pred_fallthru
    _

// kernel: bottleneck_block.7
$region0: #{bottleneck_block.7}
  #allocation0 [shape = 'u32[]', space=smem, size = 0x4, offset = 0x4, fixed_abs, tag = 'smem constant byte address 0x4 - core index']
  #allocation1 [shape = 'u32[144,128]{1,0:T(1,128)}', space=vmem, size = 0x12000, scoped, tag = 'internal scratch']
  %s0 = inlined_call_operand.vmem [shape: bf16[128,128], index: 0, kind: input, shape index: {}]
  %s1 = inlined_call_operand.vmem [shape: f32[128,128], index: 1, kind: input, shape index: {}]
  %s2 = inlined_call_operand.vmem [shape: f32[1,128], index: 2, kind: input, shape index: {}]
  %s3 = inlined_call_operand.vmem [shape: f32[1,128], index: 3, kind: input, shape index: {}]
  %s4 = inlined_call_operand.hbm [shape: f32[128,128], index: 4, kind: output, shape index: {}]
  %s5 = sld [smem:[#allocation0]]
  $region26: #{bottleneck_block.7} parent=0
    _
  %s7 = ssub.s32 1, %s5
  %s8 = scalar_select 0, %s7, %s5
  $region1: #{bottleneck_block.7} parent=0
    #allocation2 [shape = 'u8[65536]{0}', space=vmem, size = 0x10000, scoped, tag = 'output window, operand 0, single buffered']
    #allocation3 [shape = 's32[1]{0}', space=sflag, size = 0x4, scoped, tag = 'scoped memory for bottleneck_block.7']
    %9 = vsyncpa [#allocation3], 0
    // Predicated region
    $region2: #{bottleneck_block.7} parent=1 // pred_check
      _
    $region3: #{bottleneck_block.7} parent=1 // pred_check_branch
      %11 = sbr.rel (0) target = $region5
    $region4: #{bottleneck_block.7} parent=1 // pred_region
      _
    $region5: #{bottleneck_block.7} parent=1 // pred_fallthru
      _
    // Predicated region
    $region6: #{bottleneck_block.7} parent=1 // pred_check
      _
    $region7: #{bottleneck_block.7} parent=1 // pred_check_branch
      %13 = sbr.rel (0) target = $region9
    $region8: #{bottleneck_block.7} parent=1 // pred_region
      _
    $region9: #{bottleneck_block.7} parent=1 // pred_fallthru
      _
    // Predicated region
    $region10: #{bottleneck_block.7} parent=1 // pred_check
      _
    $region11: #{bottleneck_block.7} parent=1 // pred_check_branch
      %15 = sbr.rel (0) target = $region13
    $region12: #{bottleneck_block.7} parent=1 // pred_region
      _
    $region13: #{bottleneck_block.7} parent=1 // pred_fallthru
      _
    // Predicated region
    $region14: #{bottleneck_block.7} parent=1 // pred_check
      _
    $region15: #{bottleneck_block.7} parent=1 // pred_check_branch
      %17 = sbr.rel (0) target = $region17
    $region16: #{bottleneck_block.7} parent=1 // pred_region
      _
    $region17: #{bottleneck_block.7} parent=1 // pred_fallthru
      _
    %v18 = vld [vmem:[%s0] sm:$0xf]
    %v19 = vld [vmem:[%s0 + $0x4] sm:$0xf]
    %v20 = vld [vmem:[%s0 + $0x8] sm:$0xf]
    %v21 = vld [vmem:[%s0 + $0xc] sm:$0xf]
    %v22 = vld [vmem:[%s0 + $0x10] sm:$0xf]
    %v23 = vld [vmem:[%s0 + $0x14] sm:$0xf]
    %v24 = vld [vmem:[%s0 + $0x18] sm:$0xf]
    %v25 = vld [vmem:[%s0 + $0x1c] sm:$0xf]
    %v26 = vld [vmem:[%s0 + $0x20] sm:$0xf]
    %v27 = vld [vmem:[%s0 + $0x24] sm:$0xf]
    %v28 = vld [vmem:[%s0 + $0x28] sm:$0xf]
    %v29 = vld [vmem:[%s0 + $0x2c] sm:$0xf]
    %v30 = vld [vmem:[%s0 + $0x30] sm:$0xf]
    %v31 = vld [vmem:[%s0 + $0x34] sm:$0xf]
    %v32 = vld [vmem:[%s0 + $0x38] sm:$0xf]
    %v33 = vld [vmem:[%s0 + $0x3c] sm:$0xf]
    %v34 = vunpack.c.l.bf16 %v18
    %v35 = vunpack.c.l.bf16 %v19
    %v36 = vunpack.c.l.bf16 %v20
    %v37 = vunpack.c.l.bf16 %v21
    %v38 = vunpack.c.l.bf16 %v22
    %v39 = vunpack.c.l.bf16 %v23
    %v40 = vunpack.c.l.bf16 %v24
    %v41 = vunpack.c.l.bf16 %v25
    %v42 = vunpack.c.l.bf16 %v26
    %v43 = vunpack.c.l.bf16 %v27
    %v44 = vunpack.c.l.bf16 %v28
    %v45 = vunpack.c.l.bf16 %v29
    %v46 = vunpack.c.l.bf16 %v30
    %v47 = vunpack.c.l.bf16 %v31
    %v48 = vunpack.c.l.bf16 %v32
    %v49 = vunpack.c.l.bf16 %v33
    %v50 = vld [vmem:[%s2] sm:$0x1]
    %v52 = vlaneseq
    %v53 = vshrl.u32 %v52, 7
    %v54 = vsub.s32 0, %v53
    %v55 = vrot.slane %v50, %v54
    %v57 = vmul.f32 %v34, %v55
    %v58 = vmul.f32 %v35, %v55
    %v59 = vmul.f32 %v36, %v55
    %v60 = vmul.f32 %v37, %v55
    %v61 = vmul.f32 %v38, %v55
    %v62 = vmul.f32 %v39, %v55
    %v63 = vmul.f32 %v40, %v55
    %v64 = vmul.f32 %v41, %v55
    %v65 = vmul.f32 %v42, %v55
    %v66 = vmul.f32 %v43, %v55
    %v67 = vmul.f32 %v44, %v55
    %v68 = vmul.f32 %v45, %v55
    %v69 = vmul.f32 %v46, %v55
    %v70 = vmul.f32 %v47, %v55
    %v71 = vmul.f32 %v48, %v55
    %v72 = vmul.f32 %v49, %v55
    %v73 = vld [vmem:[%s3] sm:$0x1]
    %v75 = vlaneseq
    %v76 = vshrl.u32 %v75, 7
    %v77 = vsub.s32 0, %v76
    %v78 = vrot.slane %v73, %v77
    %v80 = vadd.f32 %v57, %v78
    %v81 = vadd.f32 %v58, %v78
    %v82 = vadd.f32 %v59, %v78
    %v83 = vadd.f32 %v60, %v78
    %v84 = vadd.f32 %v61, %v78
    %v85 = vadd.f32 %v62, %v78
    %v86 = vadd.f32 %v63, %v78
    %v87 = vadd.f32 %v64, %v78
    %v88 = vadd.f32 %v65, %v78
    %v89 = vadd.f32 %v66, %v78
    %v90 = vadd.f32 %v67, %v78
    %v91 = vadd.f32 %v68, %v78
    %v92 = vadd.f32 %v69, %v78
    %v93 = vadd.f32 %v70, %v78
    %v94 = vadd.f32 %v71, %v78
    %v95 = vadd.f32 %v72, %v78
    %v96 = vld [vmem:[%s1] sm:$0xff]
    %v97 = vld [vmem:[%s1 + $0x8] sm:$0xff]
    %v98 = vld [vmem:[%s1 + $0x10] sm:$0xff]
    %v99 = vld [vmem:[%s1 + $0x18] sm:$0xff]
    %v100 = vld [vmem:[%s1 + $0x20] sm:$0xff]
    %v101 = vld [vmem:[%s1 + $0x28] sm:$0xff]
    %v102 = vld [vmem:[%s1 + $0x30] sm:$0xff]
    %v103 = vld [vmem:[%s1 + $0x38] sm:$0xff]
    %v104 = vld [vmem:[%s1 + $0x40] sm:$0xff]
    %v105 = vld [vmem:[%s1 + $0x48] sm:$0xff]
    %v106 = vld [vmem:[%s1 + $0x50] sm:$0xff]
    %v107 = vld [vmem:[%s1 + $0x58] sm:$0xff]
    %v108 = vld [vmem:[%s1 + $0x60] sm:$0xff]
    %v109 = vld [vmem:[%s1 + $0x68] sm:$0xff]
    %v110 = vld [vmem:[%s1 + $0x70] sm:$0xff]
    %v111 = vld [vmem:[%s1 + $0x78] sm:$0xff]
    %v112 = vadd.f32 %v80, %v96
    %v113 = vadd.f32 %v81, %v97
    %v114 = vadd.f32 %v82, %v98
    %v115 = vadd.f32 %v83, %v99
    %v116 = vadd.f32 %v84, %v100
    %v117 = vadd.f32 %v85, %v101
    %v118 = vadd.f32 %v86, %v102
    %v119 = vadd.f32 %v87, %v103
    %v120 = vadd.f32 %v88, %v104
    %v121 = vadd.f32 %v89, %v105
    %v122 = vadd.f32 %v90, %v106
    %v123 = vadd.f32 %v91, %v107
    %v124 = vadd.f32 %v92, %v108
    %v125 = vadd.f32 %v93, %v109
    %v126 = vadd.f32 %v94, %v110
    %v127 = vadd.f32 %v95, %v111
    %v128 = vmax.f32 %v112, 0.0
    %v129 = vmax.f32 %v113, 0.0
    %v130 = vmax.f32 %v114, 0.0
    %v131 = vmax.f32 %v115, 0.0
    %v132 = vmax.f32 %v116, 0.0
    %v133 = vmax.f32 %v117, 0.0
    %v134 = vmax.f32 %v118, 0.0
    %v135 = vmax.f32 %v119, 0.0
    %v136 = vmax.f32 %v120, 0.0
    %v137 = vmax.f32 %v121, 0.0
    %v138 = vmax.f32 %v122, 0.0
    %v139 = vmax.f32 %v123, 0.0
    %v140 = vmax.f32 %v124, 0.0
    %v141 = vmax.f32 %v125, 0.0
    %v142 = vmax.f32 %v126, 0.0
    %v143 = vmax.f32 %v127, 0.0
    %144 = vst [vmem:[#allocation2] sm:$0xff] %v128
    %145 = vst [vmem:[#allocation2 + $0x8] sm:$0xff] %v129
    %146 = vst [vmem:[#allocation2 + $0x10] sm:$0xff] %v130
    %147 = vst [vmem:[#allocation2 + $0x18] sm:$0xff] %v131
    %148 = vst [vmem:[#allocation2 + $0x20] sm:$0xff] %v132
    %149 = vst [vmem:[#allocation2 + $0x28] sm:$0xff] %v133
    %150 = vst [vmem:[#allocation2 + $0x30] sm:$0xff] %v134
    %151 = vst [vmem:[#allocation2 + $0x38] sm:$0xff] %v135
    %152 = vst [vmem:[#allocation2 + $0x40] sm:$0xff] %v136
    %153 = vst [vmem:[#allocation2 + $0x48] sm:$0xff] %v137
    %154 = vst [vmem:[#allocation2 + $0x50] sm:$0xff] %v138
    %155 = vst [vmem:[#allocation2 + $0x58] sm:$0xff] %v139
    %156 = vst [vmem:[#allocation2 + $0x60] sm:$0xff] %v140
    %157 = vst [vmem:[#allocation2 + $0x68] sm:$0xff] %v141
    %158 = vst [vmem:[#allocation2 + $0x70] sm:$0xff] %v142
    %159 = vst [vmem:[#allocation2 + $0x78] sm:$0xff] %v143
    // Predicated region
    $region18: #{bottleneck_block.7} parent=1 // pred_check
      _
    $region19: #{bottleneck_block.7} parent=1 // pred_check_branch
      %161 = sbr.rel (0) target = $region21
    $region20: #{bottleneck_block.7} parent=1 // pred_region
      %s163 = ssub.s32 2048, 2048
      %164 = vsyncadd [#allocation3], %s163
      %s165 = sshll.u32 [#allocation2], 4
      %s166 = int_to_ptr.vmem [resolvable:$true] %s165
      %171 = dma.vmem_to_hbm [thread:$0]  %s166, 2048, %s4, [#allocation3], 128, 128, 8
    $region21: #{bottleneck_block.7} parent=1 // pred_fallthru
      _
    // Predicated region
    $region22: #{bottleneck_block.7} parent=1 // pred_check
      _
    $region23: #{bottleneck_block.7} parent=1 // pred_check_branch
      %173 = sbr.rel (0) target = $region25
    $region24: #{bottleneck_block.7} parent=1 // pred_region
      %174 = dma.done [#allocation3], 2048
    $region25: #{bottleneck_block.7} parent=1 // pred_fallthru
      _
    %175 = vsyncpa [#allocation3], 1

// kernel: bottleneck_block.6
$region0: #{bottleneck_block.6}
  #allocation0 [shape = 'u32[]', space=smem, size = 0x4, offset = 0x4, fixed_abs, tag = 'smem constant byte address 0x4 - core index']
  #allocation1 [shape = 'u32[144,128]{1,0:T(1,128)}', space=vmem, size = 0x12000, scoped, tag = 'internal scratch']
  %s0 = inlined_call_operand.vmem [shape: bf16[128,128], index: 0, kind: input, shape index: {}]
  %s1 = inlined_call_operand.vmem [shape: f32[1,128], index: 1, kind: input, shape index: {}]
  %s2 = inlined_call_operand.vmem [shape: f32[1,128], index: 2, kind: input, shape index: {}]
  %s3 = inlined_call_operand.vmem [shape: bf16[128,128], index: 3, kind: input, shape index: {}]
  %s4 = inlined_call_operand.vmem [shape: bf16[128,128], index: 4, kind: output, shape index: {0}]
  %s5 = inlined_call_operand.vmem [shape: f32[1,1,128], index: 5, kind: output, shape index: {1}]
  %s6 = inlined_call_operand.vmem [shape: f32[1,1,128], index: 6, kind: output, shape index: {2}]
  %7 = xla_tuple %s4, %s5, %s6
  %s8 = sld [smem:[#allocation0]]
  $region42: #{bottleneck_block.6} parent=0
    _
  %s10 = ssub.s32 1, %s8
  %s11 = scalar_select 0, %s10, %s8
  // Predicated region
  $region2: #{bottleneck_block.6} parent=0 // pred_check
    _
  $region3: #{bottleneck_block.6} parent=0 // pred_check_branch
    %13 = sbr.rel (0) target = $region5
  $region4: #{bottleneck_block.6} parent=0 // pred_region
    _
  $region5: #{bottleneck_block.6} parent=0 // pred_fallthru
    _
  // Predicated region
  $region6: #{bottleneck_block.6} parent=0 // pred_check
    _
  $region7: #{bottleneck_block.6} parent=0 // pred_check_branch
    %15 = sbr.rel (0) target = $region9
  $region8: #{bottleneck_block.6} parent=0 // pred_region
    _
  $region9: #{bottleneck_block.6} parent=0 // pred_fallthru
    _
  // Predicated region
  $region10: #{bottleneck_block.6} parent=0 // pred_check
    _
  $region11: #{bottleneck_block.6} parent=0 // pred_check_branch
    %17 = sbr.rel (0) target = $region13
  $region12: #{bottleneck_block.6} parent=0 // pred_region
    _
  $region13: #{bottleneck_block.6} parent=0 // pred_fallthru
    _
  // Predicated region
  $region14: #{bottleneck_block.6} parent=0 // pred_check
    _
  $region15: #{bottleneck_block.6} parent=0 // pred_check_branch
    %19 = sbr.rel (0) target = $region17
  $region16: #{bottleneck_block.6} parent=0 // pred_region
    _
  $region17: #{bottleneck_block.6} parent=0 // pred_fallthru
    _
  %v21 = vld [vmem:[%s0] sm:$0xf]
  %v22 = vld [vmem:[%s0 + $0x4] sm:$0xf]
  %v23 = vld [vmem:[%s0 + $0x8] sm:$0xf]
  %v24 = vld [vmem:[%s0 + $0xc] sm:$0xf]
  %v25 = vld [vmem:[%s0 + $0x10] sm:$0xf]
  %v26 = vld [vmem:[%s0 + $0x14] sm:$0xf]
  %v27 = vld [vmem:[%s0 + $0x18] sm:$0xf]
  %v28 = vld [vmem:[%s0 + $0x1c] sm:$0xf]
  %v29 = vld [vmem:[%s0 + $0x20] sm:$0xf]
  %v30 = vld [vmem:[%s0 + $0x24] sm:$0xf]
  %v31 = vld [vmem:[%s0 + $0x28] sm:$0xf]
  %v32 = vld [vmem:[%s0 + $0x2c] sm:$0xf]
  %v33 = vld [vmem:[%s0 + $0x30] sm:$0xf]
  %v34 = vld [vmem:[%s0 + $0x34] sm:$0xf]
  %v35 = vld [vmem:[%s0 + $0x38] sm:$0xf]
  %v36 = vld [vmem:[%s0 + $0x3c] sm:$0xf]
  %v37 = vunpack.c.l.bf16 %v21
  %v38 = vunpack.c.l.bf16 %v22
  %v39 = vunpack.c.l.bf16 %v23
  %v40 = vunpack.c.l.bf16 %v24
  %v41 = vunpack.c.l.bf16 %v25
  %v42 = vunpack.c.l.bf16 %v26
  %v43 = vunpack.c.l.bf16 %v27
  %v44 = vunpack.c.l.bf16 %v28
  %v45 = vunpack.c.l.bf16 %v29
  %v46 = vunpack.c.l.bf16 %v30
  %v47 = vunpack.c.l.bf16 %v31
  %v48 = vunpack.c.l.bf16 %v32
  %v49 = vunpack.c.l.bf16 %v33
  %v50 = vunpack.c.l.bf16 %v34
  %v51 = vunpack.c.l.bf16 %v35
  %v52 = vunpack.c.l.bf16 %v36
  %v53 = vld [vmem:[%s1] sm:$0x1]
  %v55 = vlaneseq
  %v56 = vshrl.u32 %v55, 7
  %v57 = vsub.s32 0, %v56
  %v58 = vrot.slane %v53, %v57
  %v60 = vmul.f32 %v37, %v58
  %v61 = vmul.f32 %v38, %v58
  %v62 = vmul.f32 %v39, %v58
  %v63 = vmul.f32 %v40, %v58
  %v64 = vmul.f32 %v41, %v58
  %v65 = vmul.f32 %v42, %v58
  %v66 = vmul.f32 %v43, %v58
  %v67 = vmul.f32 %v44, %v58
  %v68 = vmul.f32 %v45, %v58
  %v69 = vmul.f32 %v46, %v58
  %v70 = vmul.f32 %v47, %v58
  %v71 = vmul.f32 %v48, %v58
  %v72 = vmul.f32 %v49, %v58
  %v73 = vmul.f32 %v50, %v58
  %v74 = vmul.f32 %v51, %v58
  %v75 = vmul.f32 %v52, %v58
  %v76 = vld [vmem:[%s2] sm:$0x1]
  %v78 = vlaneseq
  %v79 = vshrl.u32 %v78, 7
  %v80 = vsub.s32 0, %v79
  %v81 = vrot.slane %v76, %v80
  %v83 = vadd.f32 %v60, %v81
  %v84 = vadd.f32 %v61, %v81
  %v85 = vadd.f32 %v62, %v81
  %v86 = vadd.f32 %v63, %v81
  %v87 = vadd.f32 %v64, %v81
  %v88 = vadd.f32 %v65, %v81
  %v89 = vadd.f32 %v66, %v81
  %v90 = vadd.f32 %v67, %v81
  %v91 = vadd.f32 %v68, %v81
  %v92 = vadd.f32 %v69, %v81
  %v93 = vadd.f32 %v70, %v81
  %v94 = vadd.f32 %v71, %v81
  %v95 = vadd.f32 %v72, %v81
  %v96 = vadd.f32 %v73, %v81
  %v97 = vadd.f32 %v74, %v81
  %v98 = vadd.f32 %v75, %v81
  %v99 = vmax.f32 %v83, 0.0
  %v100 = vmax.f32 %v84, 0.0
  %v101 = vmax.f32 %v85, 0.0
  %v102 = vmax.f32 %v86, 0.0
  %v103 = vmax.f32 %v87, 0.0
  %v104 = vmax.f32 %v88, 0.0
  %v105 = vmax.f32 %v89, 0.0
  %v106 = vmax.f32 %v90, 0.0
  %v107 = vmax.f32 %v91, 0.0
  %v108 = vmax.f32 %v92, 0.0
  %v109 = vmax.f32 %v93, 0.0
  %v110 = vmax.f32 %v94, 0.0
  %v111 = vmax.f32 %v95, 0.0
  %v112 = vmax.f32 %v96, 0.0
  %v113 = vmax.f32 %v97, 0.0
  %v114 = vmax.f32 %v98, 0.0
  %v115 = vpack.c.bf16 %v100, %v99
  %v116 = vpack.c.bf16 %v102, %v101
  %v117 = vpack.c.bf16 %v104, %v103
  %v118 = vpack.c.bf16 %v106, %v105
  %v119 = vpack.c.bf16 %v108, %v107
  %v120 = vpack.c.bf16 %v110, %v109
  %v121 = vpack.c.bf16 %v112, %v111
  %v122 = vpack.c.bf16 %v114, %v113
  %v123 = vld [vmem:[%s3] sm:$0xf]
  %v124 = vld [vmem:[%s3 + $0x4] sm:$0xf]
  %v125 = vld [vmem:[%s3 + $0x8] sm:$0xf]
  %v126 = vld [vmem:[%s3 + $0xc] sm:$0xf]
  %v127 = vld [vmem:[%s3 + $0x10] sm:$0xf]
  %v128 = vld [vmem:[%s3 + $0x14] sm:$0xf]
  %v129 = vld [vmem:[%s3 + $0x18] sm:$0xf]
  %v130 = vld [vmem:[%s3 + $0x1c] sm:$0xf]
  %v131 = vld [vmem:[%s3 + $0x20] sm:$0xf]
  %v132 = vld [vmem:[%s3 + $0x24] sm:$0xf]
  %v133 = vld [vmem:[%s3 + $0x28] sm:$0xf]
  %v134 = vld [vmem:[%s3 + $0x2c] sm:$0xf]
  %v135 = vld [vmem:[%s3 + $0x30] sm:$0xf]
  %v136 = vld [vmem:[%s3 + $0x34] sm:$0xf]
  %v137 = vld [vmem:[%s3 + $0x38] sm:$0xf]
  %v138 = vld [vmem:[%s3 + $0x3c] sm:$0xf]
  %v155 = vunpack.c.l.b16 %v123
  %v156 = vunpack.c.l.b16 %v124
  %v157 = vunpack.c.l.b16 %v125
  %v158 = vunpack.c.l.b16 %v126
  %v159 = vunpack.c.l.b16 %v127
  %v160 = vunpack.c.l.b16 %v128
  %v161 = vunpack.c.l.b16 %v129
  %v162 = vunpack.c.l.b16 %v130
  %v163 = vunpack.c.l.b16 %v131
  %v164 = vunpack.c.l.b16 %v132
  %v165 = vunpack.c.l.b16 %v133
  %v166 = vunpack.c.l.b16 %v134
  %v167 = vunpack.c.l.b16 %v135
  %v168 = vunpack.c.l.b16 %v136
  %v169 = vunpack.c.l.b16 %v137
  %v170 = vunpack.c.l.b16 %v138
  %v171 = vpack.c.b16 %v156, %v155
  %v172 = vpack.c.b16 %v158, %v157
  %v173 = vpack.c.b16 %v160, %v159
  %v174 = vpack.c.b16 %v162, %v161
  %v175 = vpack.c.b16 %v164, %v163
  %v176 = vpack.c.b16 %v166, %v165
  %v177 = vpack.c.b16 %v168, %v167
  %v178 = vpack.c.b16 %v170, %v169
  %187 = vmatprep.subr.bf16.mxu0 0
  %188 = vmatpush1.bf16.msra.mxu0 %v171
  %189 = vmatprep.subr.bf16.mxu0 0
  %190 = vmatpush1.bf16.msra.mxu0 %v172
  %191 = vmatprep.subr.bf16.mxu0 0
  %192 = vmatpush1.bf16.msra.mxu0 %v173
  %193 = vmatprep.subr.bf16.mxu0 0
  %194 = vmatpush1.bf16.msra.mxu0 %v174
  %195 = vmatprep.subr.bf16.mxu0 0
  %196 = vmatpush1.bf16.msra.mxu0 %v175
  %197 = vmatprep.subr.bf16.mxu0 0
  %198 = vmatpush1.bf16.msra.mxu0 %v176
  %199 = vmatprep.subr.bf16.mxu0 0
  %200 = vmatpush1.bf16.msra.mxu0 %v177
  %201 = vmatprep.subr.bf16.mxu0 0
  %202 = vmatpush1.bf16.msra.mxu0 %v178
  %203 = vmatprep.subr.bf16.mxu0 0
  %204 = vmatpush1.bf16.msra.mxu0 0
  %205 = vmatprep.subr.bf16.mxu0 0
  %206 = vmatpush1.bf16.msra.mxu0 0
  %207 = vmatprep.subr.bf16.mxu0 0
  %208 = vmatpush1.bf16.msra.mxu0 0
  %209 = vmatprep.subr.bf16.mxu0 0
  %210 = vmatpush1.bf16.msra.mxu0 0
  %211 = vmatprep.subr.bf16.mxu0 0
  %212 = vmatpush1.bf16.msra.mxu0 0
  %213 = vmatprep.subr.bf16.mxu0 0
  %214 = vmatpush1.bf16.msra.mxu0 0
  %215 = vmatprep.subr.bf16.mxu0 0
  %216 = vmatpush1.bf16.msra.mxu0 0
  %217 = vmatprep.subr.bf16.mxu0 0
  %218 = vmatpush1.bf16.msra.mxu0 0
  %219 = vmatprep.mubr.bf16.mxu0 0
  %220 = vmatmul.mubr.bf16.gmra.mrb[0].mxu0 %v115
  %v221 = vpop.f32.mrb[0].mxu0
  %v222 = vadd.f32 0.0, %v221
  %v223 = vpop.f32.mrb[0].mxu0
  %v224 = vpop.f32.mrb[0].mxu0
  %v225 = vadd.f32 0.0, %v224
  %v226 = vpop.f32.mrb[0].mxu0
  %227 = vmatprep.mubr.bf16.mxu0 0
  %228 = vmatmul.mubr.bf16.gmra.mrb[0].mxu0 %v116
  %v229 = vpop.f32.mrb[0].mxu0
  %v230 = vadd.f32 0.0, %v229
  %v231 = vpop.f32.mrb[0].mxu0
  %v232 = vpop.f32.mrb[0].mxu0
  %v233 = vadd.f32 0.0, %v232
  %v234 = vpop.f32.mrb[0].mxu0
  %235 = vmatprep.mubr.bf16.mxu0 0
  %236 = vmatmul.mubr.bf16.gmra.mrb[0].mxu0 %v117
  %v237 = vpop.f32.mrb[0].mxu0
  %v238 = vadd.f32 0.0, %v237
  %v239 = vpop.f32.mrb[0].mxu0
  %v240 = vpop.f32.mrb[0].mxu0
  %v241 = vadd.f32 0.0, %v240
  %v242 = vpop.f32.mrb[0].mxu0
  %243 = vmatprep.mubr.bf16.mxu0 0
  %244 = vmatmul.mubr.bf16.gmra.mrb[0].mxu0 %v118
  %v245 = vpop.f32.mrb[0].mxu0
  %v246 = vadd.f32 0.0, %v245
  %v247 = vpop.f32.mrb[0].mxu0
  %v248 = vpop.f32.mrb[0].mxu0
  %v249 = vadd.f32 0.0, %v248
  %v250 = vpop.f32.mrb[0].mxu0
  %251 = vmatprep.mubr.bf16.mxu0 0
  %252 = vmatmul.mubr.bf16.gmra.mrb[0].mxu0 %v119
  %v253 = vpop.f32.mrb[0].mxu0
  %v254 = vadd.f32 0.0, %v253
  %v255 = vpop.f32.mrb[0].mxu0
  %v256 = vpop.f32.mrb[0].mxu0
  %v257 = vadd.f32 0.0, %v256
  %v258 = vpop.f32.mrb[0].mxu0
  %259 = vmatprep.mubr.bf16.mxu0 0
  %260 = vmatmul.mubr.bf16.gmra.mrb[0].mxu0 %v120
  %v261 = vpop.f32.mrb[0].mxu0
  %v262 = vadd.f32 0.0, %v261
  %v263 = vpop.f32.mrb[0].mxu0
  %v264 = vpop.f32.mrb[0].mxu0
  %v265 = vadd.f32 0.0, %v264
  %v266 = vpop.f32.mrb[0].mxu0
  %267 = vmatprep.mubr.bf16.mxu0 0
  %268 = vmatmul.mubr.bf16.gmra.mrb[0].mxu0 %v121
  %v269 = vpop.f32.mrb[0].mxu0
  %v270 = vadd.f32 0.0, %v269
  %v271 = vpop.f32.mrb[0].mxu0
  %v272 = vpop.f32.mrb[0].mxu0
  %v273 = vadd.f32 0.0, %v272
  %v274 = vpop.f32.mrb[0].mxu0
  %275 = vmatprep.mubr.bf16.mxu0 0
  %276 = vmatmul.mubr.bf16.gmra.mrb[0].mxu0 %v122
  %v277 = vpop.f32.mrb[0].mxu0
  %v278 = vadd.f32 0.0, %v277
  %v279 = vpop.f32.mrb[0].mxu0
  %v280 = vpop.f32.mrb[0].mxu0
  %v281 = vadd.f32 0.0, %v280
  %v282 = vpop.f32.mrb[0].mxu0
  %283 = vdwg.mxu0
  %v284 = vpack.c.bf16 %v225, %v222
  %v285 = vpack.c.bf16 %v233, %v230
  %v286 = vpack.c.bf16 %v241, %v238
  %v287 = vpack.c.bf16 %v249, %v246
  %v288 = vpack.c.bf16 %v257, %v254
  %v289 = vpack.c.bf16 %v265, %v262
  %v290 = vpack.c.bf16 %v273, %v270
  %v291 = vpack.c.bf16 %v281, %v278
  %v300 = vunpack.c.l.b16 %v284
  %v301 = vunpack.c.h.b16 %v284
  %v302 = vunpack.c.l.b16 %v285
  %v303 = vunpack.c.h.b16 %v285
  %v304 = vunpack.c.l.b16 %v286
  %v305 = vunpack.c.h.b16 %v286
  %v306 = vunpack.c.l.b16 %v287
  %v307 = vunpack.c.h.b16 %v287
  %v308 = vunpack.c.l.b16 %v288
  %v309 = vunpack.c.h.b16 %v288
  %v310 = vunpack.c.l.b16 %v289
  %v311 = vunpack.c.h.b16 %v289
  %v312 = vunpack.c.l.b16 %v290
  %v313 = vunpack.c.h.b16 %v290
  %v314 = vunpack.c.l.b16 %v291
  %v315 = vunpack.c.h.b16 %v291
  %v316 = vpack.c.b16 %v300, %v300
  %v317 = vpack.c.b16 %v301, %v301
  %v318 = vpack.c.b16 %v302, %v302
  %v319 = vpack.c.b16 %v303, %v303
  %v320 = vpack.c.b16 %v304, %v304
  %v321 = vpack.c.b16 %v305, %v305
  %v322 = vpack.c.b16 %v306, %v306
  %v323 = vpack.c.b16 %v307, %v307
  %v324 = vpack.c.b16 %v308, %v308
  %v325 = vpack.c.b16 %v309, %v309
  %v326 = vpack.c.b16 %v310, %v310
  %v327 = vpack.c.b16 %v311, %v311
  %v328 = vpack.c.b16 %v312, %v312
  %v329 = vpack.c.b16 %v313, %v313
  %v330 = vpack.c.b16 %v314, %v314
  %v331 = vpack.c.b16 %v315, %v315
  %348 = vst [vmem:[%s4] sm:$0xf] %v316
  %349 = vst [vmem:[%s4 + $0x4] sm:$0xf] %v317
  %350 = vst [vmem:[%s4 + $0x8] sm:$0xf] %v318
  %351 = vst [vmem:[%s4 + $0xc] sm:$0xf] %v319
  %352 = vst [vmem:[%s4 + $0x10] sm:$0xf] %v320
  %353 = vst [vmem:[%s4 + $0x14] sm:$0xf] %v321
  %354 = vst [vmem:[%s4 + $0x18] sm:$0xf] %v322
  %355 = vst [vmem:[%s4 + $0x1c] sm:$0xf] %v323
  %356 = vst [vmem:[%s4 + $0x20] sm:$0xf] %v324
  %357 = vst [vmem:[%s4 + $0x24] sm:$0xf] %v325
  %358 = vst [vmem:[%s4 + $0x28] sm:$0xf] %v326
  %359 = vst [vmem:[%s4 + $0x2c] sm:$0xf] %v327
  %360 = vst [vmem:[%s4 + $0x30] sm:$0xf] %v328
  %361 = vst [vmem:[%s4 + $0x34] sm:$0xf] %v329
  %362 = vst [vmem:[%s4 + $0x38] sm:$0xf] %v330
  %363 = vst [vmem:[%s4 + $0x3c] sm:$0xf] %v331
  %v364 = vunpack.c.l.bf16 %v284
  %v365 = vunpack.c.h.bf16 %v284
  %v366 = vunpack.c.l.bf16 %v285
  %v367 = vunpack.c.h.bf16 %v285
  %v368 = vunpack.c.l.bf16 %v286
  %v369 = vunpack.c.h.bf16 %v286
  %v370 = vunpack.c.l.bf16 %v287
  %v371 = vunpack.c.h.bf16 %v287
  %v372 = vunpack.c.l.bf16 %v288
  %v373 = vunpack.c.h.bf16 %v288
  %v374 = vunpack.c.l.bf16 %v289
  %v375 = vunpack.c.h.bf16 %v289
  %v376 = vunpack.c.l.bf16 %v290
  %v377 = vunpack.c.h.bf16 %v290
  %v378 = vunpack.c.l.bf16 %v291
  %v379 = vunpack.c.h.bf16 %v291
  %v380 = vadd.f32 %v364, %v365
  %v381 = vadd.f32 %v380, %v366
  %v382 = vadd.f32 %v381, %v367
  %v383 = vadd.f32 %v382, %v368
  %v384 = vadd.f32 %v383, %v369
  %v385 = vadd.f32 %v384, %v370
  %v386 = vadd.f32 %v385, %v371
  %v387 = vadd.f32 %v386, %v372
  %v388 = vadd.f32 %v387, %v373
  %v389 = vadd.f32 %v388, %v374
  %v390 = vadd.f32 %v389, %v375
  %v391 = vadd.f32 %v390, %v376
  %v392 = vadd.f32 %v391, %v377
  %v393 = vadd.f32 %v392, %v378
  %v394 = vadd.f32 %v393, %v379
  %v395 = vrot.slane %v394, 4
  %v396 = vadd.f32 %v394, %v395
  %v397 = vrot.slane %v396, 2
  %v398 = vadd.f32 %v396, %v397
  %v399 = vrot.slane %v398, 1
  %v400 = vadd.f32 %v398, %v399
  %401 = vst [vmem:[%s5] sm:$0x1] %v400
  %v402 = vmul.f32 %v364, %v364
  %v403 = vmul.f32 %v365, %v365
  %v404 = vmul.f32 %v366, %v366
  %v405 = vmul.f32 %v367, %v367
  %v406 = vmul.f32 %v368, %v368
  %v407 = vmul.f32 %v369, %v369
  %v408 = vmul.f32 %v370, %v370
  %v409 = vmul.f32 %v371, %v371
  %v410 = vmul.f32 %v372, %v372
  %v411 = vmul.f32 %v373, %v373
  %v412 = vmul.f32 %v374, %v374
  %v413 = vmul.f32 %v375, %v375
  %v414 = vmul.f32 %v376, %v376
  %v415 = vmul.f32 %v377, %v377
  %v416 = vmul.f32 %v378, %v378
  %v417 = vmul.f32 %v379, %v379
  %v418 = vadd.f32 %v402, %v403
  %v419 = vadd.f32 %v418, %v404
  %v420 = vadd.f32 %v419, %v405
  %v421 = vadd.f32 %v420, %v406
  %v422 = vadd.f32 %v421, %v407
  %v423 = vadd.f32 %v422, %v408
  %v424 = vadd.f32 %v423, %v409
  %v425 = vadd.f32 %v424, %v410
  %v426 = vadd.f32 %v425, %v411
  %v427 = vadd.f32 %v426, %v412
  %v428 = vadd.f32 %v427, %v413
  %v429 = vadd.f32 %v428, %v414
  %v430 = vadd.f32 %v429, %v415
  %v431 = vadd.f32 %v430, %v416
  %v432 = vadd.f32 %v431, %v417
  %v433 = vrot.slane %v432, 4
  %v434 = vadd.f32 %v432, %v433
  %v435 = vrot.slane %v434, 2
  %v436 = vadd.f32 %v434, %v435
  %v437 = vrot.slane %v436, 1
  %v438 = vadd.f32 %v436, %v437
  %439 = vst [vmem:[%s6] sm:$0x1] %v438
  // Predicated region
  $region18: #{bottleneck_block.6} parent=0 // pred_check
    _
  $region19: #{bottleneck_block.6} parent=0 // pred_check_branch
    %441 = sbr.rel (0) target = $region21
  $region20: #{bottleneck_block.6} parent=0 // pred_region
    _
  $region21: #{bottleneck_block.6} parent=0 // pred_fallthru
    _
  // Predicated region
  $region22: #{bottleneck_block.6} parent=0 // pred_check
    _
  $region23: #{bottleneck_block.6} parent=0 // pred_check_branch
    %443 = sbr.rel (0) target = $region25
  $region24: #{bottleneck_block.6} parent=0 // pred_region
    _
  $region25: #{bottleneck_block.6} parent=0 // pred_fallthru
    _
  // Predicated region
  $region26: #{bottleneck_block.6} parent=0 // pred_check
    _
  $region27: #{bottleneck_block.6} parent=0 // pred_check_branch
    %445 = sbr.rel (0) target = $region29
  $region28: #{bottleneck_block.6} parent=0 // pred_region
    _
  $region29: #{bottleneck_block.6} parent=0 // pred_fallthru
    _
  // Predicated region
  $region30: #{bottleneck_block.6} parent=0 // pred_check
    _
  $region31: #{bottleneck_block.6} parent=0 // pred_check_branch
    %447 = sbr.rel (0) target = $region33
  $region32: #{bottleneck_block.6} parent=0 // pred_region
    _
  $region33: #{bottleneck_block.6} parent=0 // pred_fallthru
    _
  // Predicated region
  $region34: #{bottleneck_block.6} parent=0 // pred_check
    _
  $region35: #{bottleneck_block.6} parent=0 // pred_check_branch
    %449 = sbr.rel (0) target = $region37
  $region36: #{bottleneck_block.6} parent=0 // pred_region
    _
  $region37: #{bottleneck_block.6} parent=0 // pred_fallthru
    _
  // Predicated region
  $region38: #{bottleneck_block.6} parent=0 // pred_check
    _
  $region39: #{bottleneck_block.6} parent=0 // pred_check_branch
    %451 = sbr.rel (0) target = $region41
  $region40: #{bottleneck_block.6} parent=0 // pred_region
    _
  $region41: #{bottleneck_block.6} parent=0 // pred_fallthru
    _

// kernel: bottleneck_block.5
$region0: #{bottleneck_block.5}
  #allocation0 [shape = 'u32[]', space=smem, size = 0x4, offset = 0x4, fixed_abs, tag = 'smem constant byte address 0x4 - core index']
  #allocation1 [shape = 'u32[144,128]{1,0:T(1,128)}', space=vmem, size = 0x12000, scoped, tag = 'internal scratch']
  #allocation2 [shape = 'f32[96,128]{1,0:T(8,128)}', space=vmem, size = 0xc000, scoped, tag = 'scratch operand']
  %s0 = inlined_call_operand.vmem [shape: bf16[128,128], index: 0, kind: input, shape index: {}]
  %s1 = inlined_call_operand.vmem [shape: f32[1,128], index: 1, kind: input, shape index: {}]
  %s2 = inlined_call_operand.vmem [shape: f32[1,128], index: 2, kind: input, shape index: {}]
  %s3 = inlined_call_operand.vmem [shape: bf16[9,128,128], index: 3, kind: input, shape index: {}]
  %s4 = inlined_call_operand.vmem [shape: bf16[128,128], index: 4, kind: output, shape index: {0}]
  %s5 = inlined_call_operand.vmem [shape: f32[2,1,128], index: 5, kind: output, shape index: {1}]
  %s6 = inlined_call_operand.vmem [shape: f32[2,1,128], index: 6, kind: output, shape index: {2}]
  %7 = xla_tuple %s4, %s5, %s6
  %s8 = sld [smem:[#allocation0]]
  $region65: #{bottleneck_block.5} parent=0
    _
  %s10 = ssub.s32 1, %s8
  %s11 = scalar_select 0, %s10, %s8
  loop: start=0, step=1, limit=4
  $region2: #{bottleneck_block.5} parent=0 // loop_pre_header
    _
  $region3: #{bottleneck_block.5} parent=0 // loop_header
    %s13 = sphi 0, %s17
    %p14 = scmp.ge.s32.totalorder %s13, 4
    %s23 = sphi 0, %s25
    %s26 = sphi 0, %s23
    %s27 = sphi 0, %s26
    %s43 = sphi 0, %s27
    %s47 = sphi 0, %s47
    %s49 = sphi 0, %s47
    %s50 = sphi 0, %s49
    %s64 = sphi 0, %s50
    %s68 = sphi 0, %s68
    %s70 = sphi 0, %s68
    %s71 = sphi 0, %s70
    %s85 = sphi 0, %s71
    %s89 = sphi 0, %s89
    %s91 = sphi 0, %s89
    %s92 = sphi 0, %s91
    %s106 = sphi 0, %s92
    %s112 = sphi 0, %s114
    %s115 = sphi 0, %s112
    %s116 = sphi 0, %s115
    %s132 = sphi 0, %s116
    %s138 = sphi 0, %s140
    %s141 = sphi 0, %s138
    %s142 = sphi 0, %s141
    %s158 = sphi 0, %s142
    %s164 = sphi 0, %s166
    %s167 = sphi 0, %s164
    %s168 = sphi 0, %s167
    %s184 = sphi 0, %s168
  $region4: #{bottleneck_block.5} parent=0 // loop_header_branch
    %16 = sbr.rel (%p14) target = $region8
  $region5: #{bottleneck_block.5} parent=0 // loop_body
    %s18 = ssub.s32 %s13, 1
    %s19 = ssub.s32 %s13, 2
    %s20 = sadd.s32 %s13, 1
    %s21 = ssub.s32 %s13, %s20
    %p22 = scmp.eq.s32.totalorder %s21, 0
    %s24 = sadd.s32 %s23, 1
    %s25 = scalar_select %p22, %s23, %s24
    %p28 = pneg %p22
    %p29 = scmp.eq.s32.totalorder %s13, 1
    %p30 = por %p28, %p29
    %p31 = scmp.ne.s32.totalorder %s23, %s26
    %p32 = scmp.eq.s32.totalorder %s13, 0
    %p33 = por %p31, %p32
    %p34 = scmp.ne.s32.totalorder %s23, %s26
    %p35 = scmp.eq.s32.totalorder %s18, 1
    %p36 = por %p34, %p35
    %p37 = scmp.ne.s32.totalorder %s26, %s27
    %p38 = scmp.eq.s32.totalorder %s18, 0
    %p39 = por %p37, %p38
    %p40 = scmp.ne.s32.totalorder %s26, %s27
    %p41 = scmp.eq.s32.totalorder %s19, 1
    %p42 = por %p40, %p41
    %p44 = scmp.ne.s32.totalorder %s27, %s43
    %p45 = scmp.eq.s32.totalorder %s19, 0
    %p46 = por %p44, %p45
    %s48 = sadd.s32 %s47, 1
    %p51 = scmp.eq.s32.totalorder %s13, 1
    %p52 = scmp.ne.s32.totalorder %s47, %s49
    %p53 = scmp.eq.s32.totalorder %s13, 0
    %p54 = por %p52, %p53
    %p55 = scmp.ne.s32.totalorder %s47, %s49
    %p56 = scmp.eq.s32.totalorder %s18, 1
    %p57 = por %p55, %p56
    %p58 = scmp.ne.s32.totalorder %s49, %s50
    %p59 = scmp.eq.s32.totalorder %s18, 0
    %p60 = por %p58, %p59
    %p61 = scmp.ne.s32.totalorder %s49, %s50
    %p62 = scmp.eq.s32.totalorder %s19, 1
    %p63 = por %p61, %p62
    %p65 = scmp.ne.s32.totalorder %s50, %s64
    %p66 = scmp.eq.s32.totalorder %s19, 0
    %p67 = por %p65, %p66
    %s69 = sadd.s32 %s68, 1
    %p72 = scmp.eq.s32.totalorder %s13, 1
    %p73 = scmp.ne.s32.totalorder %s68, %s70
    %p74 = scmp.eq.s32.totalorder %s13, 0
    %p75 = por %p73, %p74
    %p76 = scmp.ne.s32.totalorder %s68, %s70
    %p77 = scmp.eq.s32.totalorder %s18, 1
    %p78 = por %p76, %p77
    %p79 = scmp.ne.s32.totalorder %s70, %s71
    %p80 = scmp.eq.s32.totalorder %s18, 0
    %p81 = por %p79, %p80
    %p82 = scmp.ne.s32.totalorder %s70, %s71
    %p83 = scmp.eq.s32.totalorder %s19, 1
    %p84 = por %p82, %p83
    %p86 = scmp.ne.s32.totalorder %s71, %s85
    %p87 = scmp.eq.s32.totalorder %s19, 0
    %p88 = por %p86, %p87
    %s90 = sadd.s32 %s89, 1
    %p93 = scmp.eq.s32.totalorder %s13, 1
    %p94 = scmp.ne.s32.totalorder %s89, %s91
    %p95 = scmp.eq.s32.totalorder %s13, 0
    %p96 = por %p94, %p95
    %p97 = scmp.ne.s32.totalorder %s89, %s91
    %p98 = scmp.eq.s32.totalorder %s18, 1
    %p99 = por %p97, %p98
    %p100 = scmp.ne.s32.totalorder %s91, %s92
    %p101 = scmp.eq.s32.totalorder %s18, 0
    %p102 = por %p100, %p101
    %p103 = scmp.ne.s32.totalorder %s91, %s92
    %p104 = scmp.eq.s32.totalorder %s19, 1
    %p105 = por %p103, %p104
    %p107 = scmp.ne.s32.totalorder %s92, %s106
    %p108 = scmp.eq.s32.totalorder %s19, 0
    %p109 = por %p107, %p108
    %s110 = ssub.s32 %s13, %s20
    %p111 = scmp.eq.s32.totalorder %s110, 0
    %s113 = sadd.s32 %s112, 1
    %s114 = scalar_select %p111, %s112, %s113
    %p117 = pneg %p111
    %p118 = scmp.eq.s32.totalorder %s13, 1
    %p119 = por %p117, %p118
    %p120 = scmp.ne.s32.totalorder %s112, %s115
    %p121 = scmp.eq.s32.totalorder %s13, 0
    %p122 = por %p120, %p121
    %p123 = scmp.ne.s32.totalorder %s112, %s115
    %p124 = scmp.eq.s32.totalorder %s18, 1
    %p125 = por %p123, %p124
    %p126 = scmp.ne.s32.totalorder %s115, %s116
    %p127 = scmp.eq.s32.totalorder %s18, 0
    %p128 = por %p126, %p127
    %p129 = scmp.ne.s32.totalorder %s115, %s116
    %p130 = scmp.eq.s32.totalorder %s19, 1
    %p131 = por %p129, %p130
    %p133 = scmp.ne.s32.totalorder %s116, %s132
    %p134 = scmp.eq.s32.totalorder %s19, 0
    %p135 = por %p133, %p134
    %s136 = ssub.s32 %s13, %s20
    %p137 = scmp.eq.s32.totalorder %s136, 0
    %s139 = sadd.s32 %s138, 1
    %s140 = scalar_select %p137, %s138, %s139
    %p143 = pneg %p137
    %p144 = scmp.eq.s32.totalorder %s13, 1
    %p145 = por %p143, %p144
    %p146 = scmp.ne.s32.totalorder %s138, %s141
    %p147 = scmp.eq.s32.totalorder %s13, 0
    %p148 = por %p146, %p147
    %p149 = scmp.ne.s32.totalorder %s138, %s141
    %p150 = scmp.eq.s32.totalorder %s18, 1
    %p151 = por %p149, %p150
    %p152 = scmp.ne.s32.totalorder %s141, %s142
    %p153 = scmp.eq.s32.totalorder %s18, 0
    %p154 = por %p152, %p153
    %p155 = scmp.ne.s32.totalorder %s141, %s142
    %p156 = scmp.eq.s32.totalorder %s19, 1
    %p157 = por %p155, %p156
    %p159 = scmp.ne.s32.totalorder %s142, %s158
    %p160 = scmp.eq.s32.totalorder %s19, 0
    %p161 = por %p159, %p160
    %s162 = ssub.s32 %s13, %s20
    %p163 = scmp.eq.s32.totalorder %s162, 0
    %s165 = sadd.s32 %s164, 1
    %s166 = scalar_select %p163, %s164, %s165
    %p169 = pneg %p163
    %p170 = scmp.eq.s32.totalorder %s13, 1
    %p171 = por %p169, %p170
    %p172 = scmp.ne.s32.totalorder %s164, %s167
    %p173 = scmp.eq.s32.totalorder %s13, 0
    %p174 = por %p172, %p173
    %p175 = scmp.ne.s32.totalorder %s164, %s167
    %p176 = scmp.eq.s32.totalorder %s18, 1
    %p177 = por %p175, %p176
    %p178 = scmp.ne.s32.totalorder %s167, %s168
    %p179 = scmp.eq.s32.totalorder %s18, 0
    %p180 = por %p178, %p179
    %p181 = scmp.ne.s32.totalorder %s167, %s168
    %p182 = scmp.eq.s32.totalorder %s19, 1
    %p183 = por %p181, %p182
    %p185 = scmp.ne.s32.totalorder %s168, %s184
    %p186 = scmp.eq.s32.totalorder %s19, 0
    %p187 = por %p185, %p186
    %p188 = scmp.le.s32.totalorder 1, %s13
    %p189 = scmp.lt.s32.totalorder %s13, 3
    %p190 = pnand %p188, %p189
    %p191 = pneg %p190
    // Predicated region
    $region9: #{bottleneck_block.5} parent=5 // pred_check
      _
    $region10: #{bottleneck_block.5} parent=5 // pred_check_branch
      %193 = sbr.rel (%p190) target = $region12
    $region11: #{bottleneck_block.5} parent=5 // pred_region
      %s194 = ssub.s32 %s13, 1
      // Predicated region
      $region13: #{bottleneck_block.5} parent=11 // pred_check
        %p195 = pneg %p60
      $region14: #{bottleneck_block.5} parent=11 // pred_check_branch
        %197 = sbr.rel (%p195) target = $region16
      $region15: #{bottleneck_block.5} parent=11 // pred_region
        _
      $region16: #{bottleneck_block.5} parent=11 // pred_fallthru
        _
      // Predicated region
      $region17: #{bottleneck_block.5} parent=11 // pred_check
        %p198 = pneg %p81
      $region18: #{bottleneck_block.5} parent=11 // pred_check_branch
        %200 = sbr.rel (%p198) target = $region20
      $region19: #{bottleneck_block.5} parent=11 // pred_region
        _
      $region20: #{bottleneck_block.5} parent=11 // pred_fallthru
        _
      // Predicated region
      $region21: #{bottleneck_block.5} parent=11 // pred_check
        %p201 = pneg %p102
      $region22: #{bottleneck_block.5} parent=11 // pred_check_branch
        %203 = sbr.rel (%p201) target = $region24
      $region23: #{bottleneck_block.5} parent=11 // pred_region
        _
      $region24: #{bottleneck_block.5} parent=11 // pred_fallthru
        _
    $region12: #{bottleneck_block.5} parent=5 // pred_fallthru
      _
    %p204 = scmp.lt.s32.totalorder %s13, 2
    // Predicated region
    $region25: #{bottleneck_block.5} parent=5 // pred_check
      %p205 = pneg %p204
    $region26: #{bottleneck_block.5} parent=5 // pred_check_branch
      %207 = sbr.rel (%p205) target = $region28
    $region27: #{bottleneck_block.5} parent=5 // pred_region
      // Predicated region
      $region29: #{bottleneck_block.5} parent=27 // pred_check
        %p208 = pneg %p33
      $region30: #{bottleneck_block.5} parent=27 // pred_check_branch
        %210 = sbr.rel (%p208) target = $region32
      $region31: #{bottleneck_block.5} parent=27 // pred_region
        %s211 = smul.u32 8, %s13
        %p212 = scmp.lt.s32.totalorder %s211, 15
        %s213 = scalar_select %p212, %s211, 15
        %s214 = smul.addr %s213, 4
        %s215 = scalar_lea.vmem %s0, %s214
        %s216 = smul.u32 8, %s13
      $region32: #{bottleneck_block.5} parent=27 // pred_fallthru
        _
    $region28: #{bottleneck_block.5} parent=5 // pred_fallthru
      _
    %p217 = scmp.le.s32.totalorder 1, %s13
    %p218 = scmp.lt.s32.totalorder %s13, 3
    %p219 = pnand %p217, %p218
    %p220 = pneg %p219
    // Predicated region
    $region33: #{bottleneck_block.5} parent=5 // pred_check
      _
    $region34: #{bottleneck_block.5} parent=5 // pred_check_branch
      %222 = sbr.rel (%p219) target = $region36
    $region35: #{bottleneck_block.5} parent=5 // pred_region
      %s223 = ssub.s32 %s13, 1
      %s224 = smul.u32 8, %s18
      %p225 = scmp.lt.s32.totalorder %s224, 15
      %s226 = scalar_select %p225, %s224, 15
      %s227 = smul.addr %s226, 4
      %s228 = scalar_lea.vmem %s0, %s227
      %p229 = pneg %p39
      %p230 = pneg %p36
      %p231 = pneg %p60
      %p232 = pneg %p57
      %p233 = pneg %p81
      %p234 = pneg %p78
      %p235 = pneg %p102
      %p236 = pneg %p99
      %p237 = pneg %p128
      %p238 = pneg %p125
      %s239 = smul.u32 8, %s18
      %p240 = scmp.lt.s32.totalorder %s239, 15
      %s241 = scalar_select %p240, %s239, 15
      %s242 = smul.addr %s241, 4
      %s243 = scalar_lea.vmem %s4, %s242
      %p244 = pneg %p154
      %p245 = pneg %p151
      %p246 = scmp.lt.s32.totalorder %s18, 1
      %s247 = scalar_select %p246, %s18, 1
      %s248 = scalar_lea.vmem %s5, %s247
      %p249 = pneg %p180
      %p250 = pneg %p177
      %p251 = scmp.lt.s32.totalorder %s18, 1
      %s252 = scalar_select %p251, %s18, 1
      %s253 = scalar_lea.vmem %s6, %s252
      %s254 = smul.u32 8, %s18
      %p255 = scmp.lt.s32.totalorder %s254, 15
      %s256 = scalar_select %p255, %s254, 15
      %s257 = smul.addr %s256, 4
      %s258 = scalar_lea.vmem %s0, %s257
      %s259 = smul.u32 8, %s18
      %s260 = smul.u32 8, %s18
      %p261 = scmp.lt.s32.totalorder %s260, 15
      %s262 = scalar_select %p261, %s260, 15
      %s263 = smul.addr %s262, 4
      %s264 = scalar_lea.vmem %s4, %s263
      %s265 = smul.u32 8, %s18
      %p266 = scmp.lt.s32.totalorder %s18, 1
      %s267 = scalar_select %p266, %s18, 1
      %s268 = scalar_lea.vmem %s5, %s267
      %p269 = scmp.lt.s32.totalorder %s18, 1
      %s270 = scalar_select %p269, %s18, 1
      %s271 = scalar_lea.vmem %s6, %s270
      %273 = vst [vmem:[#allocation2] sm:$0xff] 0.0
      %274 = vst [vmem:[#allocation2 + $0x8] sm:$0xff] 0.0
      %275 = vst [vmem:[#allocation2 + $0x50] sm:$0xff] 0.0
      %276 = vst [vmem:[#allocation2 + $0x58] sm:$0xff] 0.0
      %v277 = vld [vmem:[%s258] sm:$0xf]
      %v278 = vld [vmem:[%s258 + $0x4] sm:$0xf]
      %v279 = vld [vmem:[%s258 + $0x8] sm:$0xf]
      %v280 = vld [vmem:[%s258 + $0xc] sm:$0xf]
      %v281 = vld [vmem:[%s258 + $0x10] sm:$0xf]
      %v282 = vld [vmem:[%s258 + $0x14] sm:$0xf]
      %v283 = vld [vmem:[%s258 + $0x18] sm:$0xf]
      %v284 = vld [vmem:[%s258 + $0x1c] sm:$0xf]
      %v285 = vunpack.c.l.bf16 %v277
      %v286 = vunpack.c.l.bf16 %v278
      %v287 = vunpack.c.l.bf16 %v279
      %v288 = vunpack.c.l.bf16 %v280
      %v289 = vunpack.c.l.bf16 %v281
      %v290 = vunpack.c.l.bf16 %v282
      %v291 = vunpack.c.l.bf16 %v283
      %v292 = vunpack.c.l.bf16 %v284
      %v293 = vld [vmem:[%s1] sm:$0x1]
      %v295 = vlaneseq
      %v296 = vshrl.u32 %v295, 7
      %v297 = vsub.s32 0, %v296
      %v298 = vrot.slane %v293, %v297
      %v300 = vmul.f32 %v285, %v298
      %v301 = vmul.f32 %v286, %v298
      %v302 = vmul.f32 %v287, %v298
      %v303 = vmul.f32 %v288, %v298
      %v304 = vmul.f32 %v289, %v298
      %v305 = vmul.f32 %v290, %v298
      %v306 = vmul.f32 %v291, %v298
      %v307 = vmul.f32 %v292, %v298
      %v308 = vld [vmem:[%s2] sm:$0x1]
      %v310 = vlaneseq
      %v311 = vshrl.u32 %v310, 7
      %v312 = vsub.s32 0, %v311
      %v313 = vrot.slane %v308, %v312
      %v315 = vadd.f32 %v300, %v313
      %v316 = vadd.f32 %v301, %v313
      %v317 = vadd.f32 %v302, %v313
      %v318 = vadd.f32 %v303, %v313
      %v319 = vadd.f32 %v304, %v313
      %v320 = vadd.f32 %v305, %v313
      %v321 = vadd.f32 %v306, %v313
      %v322 = vadd.f32 %v307, %v313
      %v323 = vmax.f32 %v315, 0.0
      %v324 = vmax.f32 %v316, 0.0
      %v325 = vmax.f32 %v317, 0.0
      %v326 = vmax.f32 %v318, 0.0
      %v327 = vmax.f32 %v319, 0.0
      %v328 = vmax.f32 %v320, 0.0
      %v329 = vmax.f32 %v321, 0.0
      %v330 = vmax.f32 %v322, 0.0
      %331 = vst [vmem:[#allocation2 + $0x10] sm:$0xff] %v323
      %332 = vst [vmem:[#allocation2 + $0x18] sm:$0xff] %v324
      %333 = vst [vmem:[#allocation2 + $0x20] sm:$0xff] %v325
      %334 = vst [vmem:[#allocation2 + $0x28] sm:$0xff] %v326
      %335 = vst [vmem:[#allocation2 + $0x30] sm:$0xff] %v327
      %336 = vst [vmem:[#allocation2 + $0x38] sm:$0xff] %v328
      %337 = vst [vmem:[#allocation2 + $0x40] sm:$0xff] %v329
      %338 = vst [vmem:[#allocation2 + $0x48] sm:$0xff] %v330
      %v339 = vlaneseq
      %v340 = vshrl.u32 %v339, 7
      %v341 = vadd.s32 %v340, 8
      %v342 = vadd.s32 %v340, 16
      %v343 = vadd.s32 %v340, 24
      %v344 = vadd.s32 %v340, 32
      %v345 = vadd.s32 %v340, 40
      %v346 = vadd.s32 %v340, 48
      %v347 = vadd.s32 %v340, 56
      %vm348 = vcmp.lt.s32.totalorder %v340, 0
      %v349 = vsub.s32 0, %v340
      %v350 = vsel %vm348, %v349, %v340
      %v351 = vshrl.u32 %v350, 3
      %v352 = vand.u32 %v350, 7
      %v353 = vsub.s32 0, %v352
      %v354 = vsel %vm348, %v353, %v352
      %vm355 = vcmp.lt.s32.totalorder %v341, 0
      %v356 = vsub.s32 0, %v341
      %v357 = vsel %vm355, %v356, %v341
      %v358 = vshrl.u32 %v357, 3
      %v359 = vand.u32 %v357, 7
      %v360 = vsub.s32 0, %v359
      %v361 = vsel %vm355, %v360, %v359
      %vm362 = vcmp.lt.s32.totalorder %v342, 0
      %v363 = vsub.s32 0, %v342
      %v364 = vsel %vm362, %v363, %v342
      %v365 = vshrl.u32 %v364, 3
      %v366 = vand.u32 %v364, 7
      %v367 = vsub.s32 0, %v366
      %v368 = vsel %vm362, %v367, %v366
      %vm369 = vcmp.lt.s32.totalorder %v343, 0
      %v370 = vsub.s32 0, %v343
      %v371 = vsel %vm369, %v370, %v343
      %v372 = vshrl.u32 %v371, 3
      %v373 = vand.u32 %v371, 7
      %v374 = vsub.s32 0, %v373
      %v375 = vsel %vm369, %v374, %v373
      %vm376 = vcmp.lt.s32.totalorder %v344, 0
      %v377 = vsub.s32 0, %v344
      %v378 = vsel %vm376, %v377, %v344
      %v379 = vshrl.u32 %v378, 3
      %v380 = vand.u32 %v378, 7
      %v381 = vsub.s32 0, %v380
      %v382 = vsel %vm376, %v381, %v380
      %vm383 = vcmp.lt.s32.totalorder %v345, 0
      %v384 = vsub.s32 0, %v345
      %v385 = vsel %vm383, %v384, %v345
      %v386 = vshrl.u32 %v385, 3
      %v387 = vand.u32 %v385, 7
      %v388 = vsub.s32 0, %v387
      %v389 = vsel %vm383, %v388, %v387
      %vm390 = vcmp.lt.s32.totalorder %v346, 0
      %v391 = vsub.s32 0, %v346
      %v392 = vsel %vm390, %v391, %v346
      %v393 = vshrl.u32 %v392, 3
      %v394 = vand.u32 %v392, 7
      %v395 = vsub.s32 0, %v394
      %v396 = vsel %vm390, %v395, %v394
      %vm397 = vcmp.lt.s32.totalorder %v347, 0
      %v398 = vsub.s32 0, %v347
      %v399 = vsel %vm397, %v398, %v347
      %v400 = vshrl.u32 %v399, 3
      %v401 = vand.u32 %v399, 7
      %v402 = vsub.s32 0, %v401
      %v403 = vsel %vm397, %v402, %v401
      %vm404 = vcmp.ne.s32.totalorder %v354, 0
      %vm405 = vcmp.ne.s32.totalorder %v361, 0
      %vm406 = vcmp.ne.s32.totalorder %v368, 0
      %vm407 = vcmp.ne.s32.totalorder %v375, 0
      %vm408 = vcmp.ne.s32.totalorder %v382, 0
      %vm409 = vcmp.ne.s32.totalorder %v389, 0
      %vm410 = vcmp.ne.s32.totalorder %v396, 0
      %vm411 = vcmp.ne.s32.totalorder %v403, 0
      %vm412 = vcmp.lt.s32.totalorder %v354, 0
      %vm413 = vcmp.lt.s32.totalorder %v361, 0
      %vm414 = vcmp.lt.s32.totalorder %v368, 0
      %vm415 = vcmp.lt.s32.totalorder %v375, 0
      %vm416 = vcmp.lt.s32.totalorder %v382, 0
      %vm417 = vcmp.lt.s32.totalorder %v389, 0
      %vm418 = vcmp.lt.s32.totalorder %v396, 0
      %vm419 = vcmp.lt.s32.totalorder %v403, 0
      %vm420 = vmand %vm412, %vm404
      %vm421 = vmand %vm413, %vm405
      %vm422 = vmand %vm414, %vm406
      %vm423 = vmand %vm415, %vm407
      %vm424 = vmand %vm416, %vm408
      %vm425 = vmand %vm417, %vm409
      %vm426 = vmand %vm418, %vm410
      %vm427 = vmand %vm419, %vm411
      %v428 = vadd.s32 %v354, 8
      %v429 = vadd.s32 %v361, 8
      %v430 = vadd.s32 %v368, 8
      %v431 = vadd.s32 %v375, 8
      %v432 = vadd.s32 %v382, 8
      %v433 = vadd.s32 %v389, 8
      %v434 = vadd.s32 %v396, 8
      %v435 = vadd.s32 %v403, 8
      %v436 = vsel %vm420, %v428, %v354
      %v437 = vsel %vm421, %v429, %v361
      %v438 = vsel %vm422, %v430, %v368
      %v439 = vsel %vm423, %v431, %v375
      %v440 = vsel %vm424, %v432, %v382
      %v441 = vsel %vm425, %v433, %v389
      %v442 = vsel %vm426, %v434, %v396
      %v443 = vsel %vm427, %v435, %v403
      %vm444 = vcmp.ne.s32.totalorder %v436, 7
      %vm445 = vcmp.ne.s32.totalorder %v437, 7
      %vm446 = vcmp.ne.s32.totalorder %v438, 7
      %vm447 = vcmp.ne.s32.totalorder %v439, 7
      %vm448 = vcmp.ne.s32.totalorder %v440, 7
      %vm449 = vcmp.ne.s32.totalorder %v441, 7
      %vm450 = vcmp.ne.s32.totalorder %v442, 7
      %vm451 = vcmp.ne.s32.totalorder %v443, 7
      %v452 = vsel %vm444, 1, 0
      %v453 = vsel %vm445, 1, 0
      %v454 = vsel %vm446, 1, 0
      %v455 = vsel %vm447, 1, 0
      %v456 = vsel %vm448, 1, 0
      %v457 = vsel %vm449, 1, 0
      %v458 = vsel %vm450, 1, 0
      %v459 = vsel %vm451, 1, 0
      %v460 = vcvt.s32.f32 %v452
      %v461 = vcvt.s32.f32 %v453
      %v462 = vcvt.s32.f32 %v454
      %v463 = vcvt.s32.f32 %v455
      %v464 = vcvt.s32.f32 %v456
      %v465 = vcvt.s32.f32 %v457
      %v466 = vcvt.s32.f32 %v458
      %v467 = vcvt.s32.f32 %v459
      %vm468 = vcmp.ne.s32.totalorder %v436, 0
      %vm469 = vcmp.ne.s32.totalorder %v437, 0
      %vm470 = vcmp.ne.s32.totalorder %v438, 0
      %vm471 = vcmp.ne.s32.totalorder %v439, 0
      %vm472 = vcmp.ne.s32.totalorder %v440, 0
      %vm473 = vcmp.ne.s32.totalorder %v441, 0
      %vm474 = vcmp.ne.s32.totalorder %v442, 0
      %vm475 = vcmp.ne.s32.totalorder %v443, 0
      %v476 = vsel %vm468, 1, 0
      %v477 = vsel %vm469, 1, 0
      %v478 = vsel %vm470, 1, 0
      %v479 = vsel %vm471, 1, 0
      %v480 = vsel %vm472, 1, 0
      %v481 = vsel %vm473, 1, 0
      %v482 = vsel %vm474, 1, 0
      %v483 = vsel %vm475, 1, 0
      %v484 = vcvt.s32.f32 %v476
      %v485 = vcvt.s32.f32 %v477
      %v486 = vcvt.s32.f32 %v478
      %v487 = vcvt.s32.f32 %v479
      %v488 = vcvt.s32.f32 %v480
      %v489 = vcvt.s32.f32 %v481
      %v490 = vcvt.s32.f32 %v482
      %v491 = vcvt.s32.f32 %v483
      %v492 = vld [vmem:[#allocation2 + $0x7] sm:$0xff]
      %v493 = vld [vmem:[#allocation2 + $0xf] sm:$0xff]
      %v494 = vld [vmem:[#allocation2 + $0x17] sm:$0xff]
      %v495 = vld [vmem:[#allocation2 + $0x1f] sm:$0xff]
      %v496 = vld [vmem:[#allocation2 + $0x27] sm:$0xff]
      %v497 = vld [vmem:[#allocation2 + $0x2f] sm:$0xff]
      %v498 = vld [vmem:[#allocation2 + $0x37] sm:$0xff]
      %v499 = vld [vmem:[#allocation2 + $0x3f] sm:$0xff]
      %v500 = vmul.f32 %v492, %v484
      %v501 = vmul.f32 %v493, %v485
      %v502 = vmul.f32 %v494, %v486
      %v503 = vmul.f32 %v495, %v487
      %v504 = vmul.f32 %v496, %v488
      %v505 = vmul.f32 %v497, %v489
      %v506 = vmul.f32 %v498, %v490
      %v507 = vmul.f32 %v499, %v491
      %v508 = vpack.c.bf16 %v501, %v500
      %v509 = vpack.c.bf16 %v503, %v502
      %v510 = vpack.c.bf16 %v505, %v504
      %v511 = vpack.c.bf16 %v507, %v506
      %v512 = vld [vmem:[%s3] sm:$0xf]
      %v513 = vld [vmem:[%s3 + $0x4] sm:$0xf]
      %v514 = vld [vmem:[%s3 + $0x8] sm:$0xf]
      %v515 = vld [vmem:[%s3 + $0xc] sm:$0xf]
      %v516 = vld [vmem:[%s3 + $0x10] sm:$0xf]
      %v517 = vld [vmem:[%s3 + $0x14] sm:$0xf]
      %v518 = vld [vmem:[%s3 + $0x18] sm:$0xf]
      %v519 = vld [vmem:[%s3 + $0x1c] sm:$0xf]
      %v520 = vld [vmem:[%s3 + $0x20] sm:$0xf]
      %v521 = vld [vmem:[%s3 + $0x24] sm:$0xf]
      %v522 = vld [vmem:[%s3 + $0x28] sm:$0xf]
      %v523 = vld [vmem:[%s3 + $0x2c] sm:$0xf]
      %v524 = vld [vmem:[%s3 + $0x30] sm:$0xf]
      %v525 = vld [vmem:[%s3 + $0x34] sm:$0xf]
      %v526 = vld [vmem:[%s3 + $0x38] sm:$0xf]
      %v527 = vld [vmem:[%s3 + $0x3c] sm:$0xf]
      %v528 = vld [vmem:[#allocation2 + $0x8] sm:$0xff]
      %v529 = vld [vmem:[#allocation2 + $0x10] sm:$0xff]
      %v530 = vld [vmem:[#allocation2 + $0x18] sm:$0xff]
      %v531 = vld [vmem:[#allocation2 + $0x20] sm:$0xff]
      %v532 = vld [vmem:[#allocation2 + $0x28] sm:$0xff]
      %v533 = vld [vmem:[#allocation2 + $0x30] sm:$0xff]
      %v534 = vld [vmem:[#allocation2 + $0x38] sm:$0xff]
      %v535 = vld [vmem:[#allocation2 + $0x40] sm:$0xff]
      %v536 = vpack.c.bf16 %v529, %v528
      %v537 = vpack.c.bf16 %v531, %v530
      %v538 = vpack.c.bf16 %v533, %v532
      %v539 = vpack.c.bf16 %v535, %v534
      %s540 = scalar_lea.vmem %s3, 64
      %v541 = vld [vmem:[%s540] sm:$0xf]
      %v542 = vld [vmem:[%s540 + $0x4] sm:$0xf]
      %v543 = vld [vmem:[%s540 + $0x8] sm:$0xf]
      %v544 = vld [vmem:[%s540 + $0xc] sm:$0xf]
      %v545 = vld [vmem:[%s540 + $0x10] sm:$0xf]
      %v546 = vld [vmem:[%s540 + $0x14] sm:$0xf]
      %v547 = vld [vmem:[%s540 + $0x18] sm:$0xf]
      %v548 = vld [vmem:[%s540 + $0x1c] sm:$0xf]
      %v549 = vld [vmem:[%s540 + $0x20] sm:$0xf]
      %v550 = vld [vmem:[%s540 + $0x24] sm:$0xf]
      %v551 = vld [vmem:[%s540 + $0x28] sm:$0xf]
      %v552 = vld [vmem:[%s540 + $0x2c] sm:$0xf]
      %v553 = vld [vmem:[%s540 + $0x30] sm:$0xf]
      %v554 = vld [vmem:[%s540 + $0x34] sm:$0xf]
      %v555 = vld [vmem:[%s540 + $0x38] sm:$0xf]
      %v556 = vld [vmem:[%s540 + $0x3c] sm:$0xf]
      %v573 = vunpack.c.l.b16 %v541
      %v574 = vunpack.c.l.b16 %v542
      %v575 = vunpack.c.l.b16 %v543
      %v576 = vunpack.c.l.b16 %v544
      %v577 = vunpack.c.l.b16 %v545
      %v578 = vunpack.c.l.b16 %v546
      %v579 = vunpack.c.l.b16 %v547
      %v580 = vunpack.c.l.b16 %v548
      %v581 = vunpack.c.l.b16 %v549
      %v582 = vunpack.c.l.b16 %v550
      %v583 = vunpack.c.l.b16 %v551
      %v584 = vunpack.c.l.b16 %v552
      %v585 = vunpack.c.l.b16 %v553
      %v586 = vunpack.c.l.b16 %v554
      %v587 = vunpack.c.l.b16 %v555
      %v588 = vunpack.c.l.b16 %v556
      %v589 = vpack.c.b16 %v574, %v573
      %v590 = vpack.c.b16 %v576, %v575
      %v591 = vpack.c.b16 %v578, %v577
      %v592 = vpack.c.b16 %v580, %v579
      %v593 = vpack.c.b16 %v582, %v581
      %v594 = vpack.c.b16 %v584, %v583
      %v595 = vpack.c.b16 %v586, %v585
      %v596 = vpack.c.b16 %v588, %v587
      %605 = vmatprep.subr.bf16.mxu0 0
      %606 = vmatpush1.bf16.msra.mxu0 %v589
      %607 = vmatprep.subr.bf16.mxu0 0
      %608 = vmatpush1.bf16.msra.mxu0 %v590
      %609 = vmatprep.subr.bf16.mxu0 0
      %610 = vmatpush1.bf16.msra.mxu0 %v591
      %611 = vmatprep.subr.bf16.mxu0 0
      %612 = vmatpush1.bf16.msra.mxu0 %v592
      %613 = vmatprep.subr.bf16.mxu0 0
      %614 = vmatpush1.bf16.msra.mxu0 %v593
      %615 = vmatprep.subr.bf16.mxu0 0
      %616 = vmatpush1.bf16.msra.mxu0 %v594
      %617 = vmatprep.subr.bf16.mxu0 0
      %618 = vmatpush1.bf16.msra.mxu0 %v595
      %619 = vmatprep.subr.bf16.mxu0 0
      %620 = vmatpush1.bf16.msra.mxu0 %v596
      %621 = vmatprep.subr.bf16.mxu0 0
      %622 = vmatpush1.bf16.msra.mxu0 0
      %623 = vmatprep.subr.bf16.mxu0 0
      %624 = vmatpush1.bf16.msra.mxu0 0
      %625 = vmatprep.subr.bf16.mxu0 0
      %626 = vmatpush1.bf16.msra.mxu0 0
      %627 = vmatprep.subr.bf16.mxu0 0
      %628 = vmatpush1.bf16.msra.mxu0 0
      %629 = vmatprep.subr.bf16.mxu0 0
      %630 = vmatpush1.bf16.msra.mxu0 0
      %631 = vmatprep.subr.bf16.mxu0 0
      %632 = vmatpush1.bf16.msra.mxu0 0
      %633 = vmatprep.subr.bf16.mxu0 0
      %634 = vmatpush1.bf16.msra.mxu0 0
      %635 = vmatprep.subr.bf16.mxu0 0
      %636 = vmatpush1.bf16.msra.mxu0 0
      %637 = vmatprep.mubr.bf16.mxu0 0
      %638 = vmatmul.mubr.bf16.gmra.mrb[0].mxu0 %v536
      %v639 = vpop.f32.mrb[0].mxu0
      %v640 = vadd.f32 0.0, %v639
      %v641 = vpop.f32.mrb[0].mxu0
      %v642 = vpop.f32.mrb[0].mxu0
      %v643 = vadd.f32 0.0, %v642
      %v644 = vpop.f32.mrb[0].mxu0
      %645 = vmatprep.mubr.bf16.mxu0 0
      %646 = vmatmul.mubr.bf16.gmra.mrb[0].mxu0 %v537
      %v647 = vpop.f32.mrb[0].mxu0
      %v648 = vadd.f32 0.0, %v647
      %v649 = vpop.f32.mrb[0].mxu0
      %v650 = vpop.f32.mrb[0].mxu0
      %v651 = vadd.f32 0.0, %v650
      %v652 = vpop.f32.mrb[0].mxu0
      %653 = vmatprep.mubr.bf16.mxu0 0
      %654 = vmatmul.mubr.bf16.gmra.mrb[0].mxu0 %v538
      %v655 = vpop.f32.mrb[0].mxu0
      %v656 = vadd.f32 0.0, %v655
      %v657 = vpop.f32.mrb[0].mxu0
      %v658 = vpop.f32.mrb[0].mxu0
      %v659 = vadd.f32 0.0, %v658
      %v660 = vpop.f32.mrb[0].mxu0
      %661 = vmatprep.mubr.bf16.mxu0 0
      %662 = vmatmul.mubr.bf16.gmra.mrb[0].mxu0 %v539
      %v663 = vpop.f32.mrb[0].mxu0
      %v664 = vadd.f32 0.0, %v663
      %v665 = vpop.f32.mrb[0].mxu0
      %v666 = vpop.f32.mrb[0].mxu0
      %v667 = vadd.f32 0.0, %v666
      %v668 = vpop.f32.mrb[0].mxu0
      %669 = vdwg.mxu0
      %v686 = vunpack.c.l.b16 %v512
      %v687 = vunpack.c.l.b16 %v513
      %v688 = vunpack.c.l.b16 %v514
      %v689 = vunpack.c.l.b16 %v515
      %v690 = vunpack.c.l.b16 %v516
      %v691 = vunpack.c.l.b16 %v517
      %v692 = vunpack.c.l.b16 %v518
      %v693 = vunpack.c.l.b16 %v519
      %v694 = vunpack.c.l.b16 %v520
      %v695 = vunpack.c.l.b16 %v521
      %v696 = vunpack.c.l.b16 %v522
      %v697 = vunpack.c.l.b16 %v523
      %v698 = vunpack.c.l.b16 %v524
      %v699 = vunpack.c.l.b16 %v525
      %v700 = vunpack.c.l.b16 %v526
      %v701 = vunpack.c.l.b16 %v527
      %v702 = vpack.c.b16 %v687, %v686
      %v703 = vpack.c.b16 %v689, %v688
      %v704 = vpack.c.b16 %v691, %v690
      %v705 = vpack.c.b16 %v693, %v692
      %v706 = vpack.c.b16 %v695, %v694
      %v707 = vpack.c.b16 %v697, %v696
      %v708 = vpack.c.b16 %v699, %v698
      %v709 = vpack.c.b16 %v701, %v700
      %718 = vmatprep.subr.bf16.mxu0 0
      %719 = vmatpush1.bf16.msra.mxu0 %v702
      %720 = vmatprep.subr.bf16.mxu0 0
      %721 = vmatpush1.bf16.msra.mxu0 %v703
      %722 = vmatprep.subr.bf16.mxu0 0
      %723 = vmatpush1.bf16.msra.mxu0 %v704
      %724 = vmatprep.subr.bf16.mxu0 0
      %725 = vmatpush1.bf16.msra.mxu0 %v705
      %726 = vmatprep.subr.bf16.mxu0 0
      %727 = vmatpush1.bf16.msra.mxu0 %v706
      %728 = vmatprep.subr.bf16.mxu0 0
      %729 = vmatpush1.bf16.msra.mxu0 %v707
      %730 = vmatprep.subr.bf16.mxu0 0
      %731 = vmatpush1.bf16.msra.mxu0 %v708
      %732 = vmatprep.subr.bf16.mxu0 0
      %733 = vmatpush1.bf16.msra.mxu0 %v709
      %734 = vmatprep.subr.bf16.mxu0 0
      %735 = vmatpush1.bf16.msra.mxu0 0
      %736 = vmatprep.subr.bf16.mxu0 0
      %737 = vmatpush1.bf16.msra.mxu0 0
      %738 = vmatprep.subr.bf16.mxu0 0
      %739 = vmatpush1.bf16.msra.mxu0 0
      %740 = vmatprep.subr.bf16.mxu0 0
      %741 = vmatpush1.bf16.msra.mxu0 0
      %742 = vmatprep.subr.bf16.mxu0 0
      %743 = vmatpush1.bf16.msra.mxu0 0
      %744 = vmatprep.subr.bf16.mxu0 0
      %745 = vmatpush1.bf16.msra.mxu0 0
      %746 = vmatprep.subr.bf16.mxu0 0
      %747 = vmatpush1.bf16.msra.mxu0 0
      %748 = vmatprep.subr.bf16.mxu0 0
      %749 = vmatpush1.bf16.msra.mxu0 0
      %750 = vmatprep.mubr.bf16.mxu0 0
      %751 = vmatmul.mubr.bf16.gmra.mrb[0].mxu0 %v508
      %v752 = vpop.f32.mrb[0].mxu0
      %v753 = vadd.f32 %v640, %v752
      %v754 = vpop.f32.mrb[0].mxu0
      %v755 = vpop.f32.mrb[0].mxu0
      %v756 = vadd.f32 %v643, %v755
      %v757 = vpop.f32.mrb[0].mxu0
      %758 = vmatprep.mubr.bf16.mxu0 0
      %759 = vmatmul.mubr.bf16.gmra.mrb[0].mxu0 %v509
      %v760 = vpop.f32.mrb[0].mxu0
      %v761 = vadd.f32 %v648, %v760
      %v762 = vpop.f32.mrb[0].mxu0
      %v763 = vpop.f32.mrb[0].mxu0
      %v764 = vadd.f32 %v651, %v763
      %v765 = vpop.f32.mrb[0].mxu0
      %766 = vmatprep.mubr.bf16.mxu0 0
      %767 = vmatmul.mubr.bf16.gmra.mrb[0].mxu0 %v510
      %v768 = vpop.f32.mrb[0].mxu0
      %v769 = vadd.f32 %v656, %v768
      %v770 = vpop.f32.mrb[0].mxu0
      %v771 = vpop.f32.mrb[0].mxu0
      %v772 = vadd.f32 %v659, %v771
      %v773 = vpop.f32.mrb[0].mxu0
      %774 = vmatprep.mubr.bf16.mxu0 0
      %775 = vmatmul.mubr.bf16.gmra.mrb[0].mxu0 %v511
      %v776 = vpop.f32.mrb[0].mxu0
      %v777 = vadd.f32 %v664, %v776
      %v778 = vpop.f32.mrb[0].mxu0
      %v779 = vpop.f32.mrb[0].mxu0
      %v780 = vadd.f32 %v667, %v779
      %v781 = vpop.f32.mrb[0].mxu0
      %782 = vdwg.mxu0
      %v783 = vld [vmem:[#allocation2 + $0x9] sm:$0xff]
      %v784 = vld [vmem:[#allocation2 + $0x11] sm:$0xff]
      %v785 = vld [vmem:[#allocation2 + $0x19] sm:$0xff]
      %v786 = vld [vmem:[#allocation2 + $0x21] sm:$0xff]
      %v787 = vld [vmem:[#allocation2 + $0x29] sm:$0xff]
      %v788 = vld [vmem:[#allocation2 + $0x31] sm:$0xff]
      %v789 = vld [vmem:[#allocation2 + $0x39] sm:$0xff]
      %v790 = vld [vmem:[#allocation2 + $0x41] sm:$0xff]
      %v791 = vmul.f32 %v783, %v460
      %v792 = vmul.f32 %v784, %v461
      %v793 = vmul.f32 %v785, %v462
      %v794 = vmul.f32 %v786, %v463
      %v795 = vmul.f32 %v787, %v464
      %v796 = vmul.f32 %v788, %v465
      %v797 = vmul.f32 %v789, %v466
      %v798 = vmul.f32 %v790, %v467
      %v799 = vpack.c.bf16 %v792, %v791
      %v800 = vpack.c.bf16 %v794, %v793
      %v801 = vpack.c.bf16 %v796, %v795
      %v802 = vpack.c.bf16 %v798, %v797
      %s803 = scalar_lea.vmem %s3, 128
      %v804 = vld [vmem:[%s803] sm:$0xf]
      %v805 = vld [vmem:[%s803 + $0x4] sm:$0xf]
      %v806 = vld [vmem:[%s803 + $0x8] sm:$0xf]
      %v807 = vld [vmem:[%s803 + $0xc] sm:$0xf]
      %v808 = vld [vmem:[%s803 + $0x10] sm:$0xf]
      %v809 = vld [vmem:[%s803 + $0x14] sm:$0xf]
      %v810 = vld [vmem:[%s803 + $0x18] sm:$0xf]
      %v811 = vld [vmem:[%s803 + $0x1c] sm:$0xf]
      %v812 = vld [vmem:[%s803 + $0x20] sm:$0xf]
      %v813 = vld [vmem:[%s803 + $0x24] sm:$0xf]
      %v814 = vld [vmem:[%s803 + $0x28] sm:$0xf]
      %v815 = vld [vmem:[%s803 + $0x2c] sm:$0xf]
      %v816 = vld [vmem:[%s803 + $0x30] sm:$0xf]
      %v817 = vld [vmem:[%s803 + $0x34] sm:$0xf]
      %v818 = vld [vmem:[%s803 + $0x38] sm:$0xf]
      %v819 = vld [vmem:[%s803 + $0x3c] sm:$0xf]
      %v836 = vunpack.c.l.b16 %v804
      %v837 = vunpack.c.l.b16 %v805
      %v838 = vunpack.c.l.b16 %v806
      %v839 = vunpack.c.l.b16 %v807
      %v840 = vunpack.c.l.b16 %v808
      %v841 = vunpack.c.l.b16 %v809
      %v842 = vunpack.c.l.b16 %v810
      %v843 = vunpack.c.l.b16 %v811
      %v844 = vunpack.c.l.b16 %v812
      %v845 = vunpack.c.l.b16 %v813
      %v846 = vunpack.c.l.b16 %v814
      %v847 = vunpack.c.l.b16 %v815
      %v848 = vunpack.c.l.b16 %v816
      %v849 = vunpack.c.l.b16 %v817
      %v850 = vunpack.c.l.b16 %v818
      %v851 = vunpack.c.l.b16 %v819
      %v852 = vpack.c.b16 %v837, %v836
      %v853 = vpack.c.b16 %v839, %v838
      %v854 = vpack.c.b16 %v841, %v840
      %v855 = vpack.c.b16 %v843, %v842
      %v856 = vpack.c.b16 %v845, %v844
      %v857 = vpack.c.b16 %v847, %v846
      %v858 = vpack.c.b16 %v849, %v848
      %v859 = vpack.c.b16 %v851, %v850
      %868 = vmatprep.subr.bf16.mxu0 0
      %869 = vmatpush1.bf16.msra.mxu0 %v852
      %870 = vmatprep.subr.bf16.mxu0 0
      %871 = vmatpush1.bf16.msra.mxu0 %v853
      %872 = vmatprep.subr.bf16.mxu0 0
      %873 = vmatpush1.bf16.msra.mxu0 %v854
      %874 = vmatprep.subr.bf16.mxu0 0
      %875 = vmatpush1.bf16.msra.mxu0 %v855
      %876 = vmatprep.subr.bf16.mxu0 0
      %877 = vmatpush1.bf16.msra.mxu0 %v856
      %878 = vmatprep.subr.bf16.mxu0 0
      %879 = vmatpush1.bf16.msra.mxu0 %v857
      %880 = vmatprep.subr.bf16.mxu0 0
      %881 = vmatpush1.bf16.msra.mxu0 %v858
      %882 = vmatprep.subr.bf16.mxu0 0
      %883 = vmatpush1.bf16.msra.mxu0 %v859
      %884 = vmatprep.subr.bf16.mxu0 0
      %885 = vmatpush1.bf16.msra.mxu0 0
      %886 = vmatprep.subr.bf16.mxu0 0
      %887 = vmatpush1.bf16.msra.mxu0 0
      %888 = vmatprep.subr.bf16.mxu0 0
      %889 = vmatpush1.bf16.msra.mxu0 0
      %890 = vmatprep.subr.bf16.mxu0 0
      %891 = vmatpush1.bf16.msra.mxu0 0
      %892 = vmatprep.subr.bf16.mxu0 0
      %893 = vmatpush1.bf16.msra.mxu0 0
      %894 = vmatprep.subr.bf16.mxu0 0
      %895 = vmatpush1.bf16.msra.mxu0 0
      %896 = vmatprep.subr.bf16.mxu0 0
      %897 = vmatpush1.bf16.msra.mxu0 0
      %898 = vmatprep.subr.bf16.mxu0 0
      %899 = vmatpush1.bf16.msra.mxu0 0
      %900 = vmatprep.mubr.bf16.mxu0 0
      %901 = vmatmul.mubr.bf16.gmra.mrb[0].mxu0 %v799
      %v902 = vpop.f32.mrb[0].mxu0
      %v903 = vadd.f32 0.0, %v902
      %v904 = vpop.f32.mrb[0].mxu0
      %v905 = vpop.f32.mrb[0].mxu0
      %v906 = vadd.f32 0.0, %v905
      %v907 = vpop.f32.mrb[0].mxu0
      %908 = vmatprep.mubr.bf16.mxu0 0
      %909 = vmatmul.mubr.bf16.gmra.mrb[0].mxu0 %v800
      %v910 = vpop.f32.mrb[0].mxu0
      %v911 = vadd.f32 0.0, %v910
      %v912 = vpop.f32.mrb[0].mxu0
      %v913 = vpop.f32.mrb[0].mxu0
      %v914 = vadd.f32 0.0, %v913
      %v915 = vpop.f32.mrb[0].mxu0
      %916 = vmatprep.mubr.bf16.mxu0 0
      %917 = vmatmul.mubr.bf16.gmra.mrb[0].mxu0 %v801
      %v918 = vpop.f32.mrb[0].mxu0
      %v919 = vadd.f32 0.0, %v918
      %v920 = vpop.f32.mrb[0].mxu0
      %v921 = vpop.f32.mrb[0].mxu0
      %v922 = vadd.f32 0.0, %v921
      %v923 = vpop.f32.mrb[0].mxu0
      %924 = vmatprep.mubr.bf16.mxu0 0
      %925 = vmatmul.mubr.bf16.gmra.mrb[0].mxu0 %v802
      %v926 = vpop.f32.mrb[0].mxu0
      %v927 = vadd.f32 0.0, %v926
      %v928 = vpop.f32.mrb[0].mxu0
      %v929 = vpop.f32.mrb[0].mxu0
      %v930 = vadd.f32 0.0, %v929
      %v931 = vpop.f32.mrb[0].mxu0
      %932 = vdwg.mxu0
      %v933 = vadd.f32 %v753, %v903
      %v934 = vadd.f32 %v756, %v906
      %v935 = vadd.f32 %v761, %v911
      %v936 = vadd.f32 %v764, %v914
      %v937 = vadd.f32 %v769, %v919
      %v938 = vadd.f32 %v772, %v922
      %v939 = vadd.f32 %v777, %v927
      %v940 = vadd.f32 %v780, %v930
      %v941 = vld [vmem:[#allocation2 + $0xf] sm:$0xff]
      %v942 = vld [vmem:[#allocation2 + $0x17] sm:$0xff]
      %v943 = vld [vmem:[#allocation2 + $0x1f] sm:$0xff]
      %v944 = vld [vmem:[#allocation2 + $0x27] sm:$0xff]
      %v945 = vld [vmem:[#allocation2 + $0x2f] sm:$0xff]
      %v946 = vld [vmem:[#allocation2 + $0x37] sm:$0xff]
      %v947 = vld [vmem:[#allocation2 + $0x3f] sm:$0xff]
      %v948 = vld [vmem:[#allocation2 + $0x47] sm:$0xff]
      %v949 = vmul.f32 %v941, %v484
      %v950 = vmul.f32 %v942, %v485
      %v951 = vmul.f32 %v943, %v486
      %v952 = vmul.f32 %v944, %v487
      %v953 = vmul.f32 %v945, %v488
      %v954 = vmul.f32 %v946, %v489
      %v955 = vmul.f32 %v947, %v490
      %v956 = vmul.f32 %v948, %v491
      %v957 = vpack.c.bf16 %v950, %v949
      %v958 = vpack.c.bf16 %v952, %v951
      %v959 = vpack.c.bf16 %v954, %v953
      %v960 = vpack.c.bf16 %v956, %v955
      %s961 = scalar_lea.vmem %s3, 192
      %v962 = vld [vmem:[%s961] sm:$0xf]
      %v963 = vld [vmem:[%s961 + $0x4] sm:$0xf]
      %v964 = vld [vmem:[%s961 + $0x8] sm:$0xf]
      %v965 = vld [vmem:[%s961 + $0xc] sm:$0xf]
      %v966 = vld [vmem:[%s961 + $0x10] sm:$0xf]
      %v967 = vld [vmem:[%s961 + $0x14] sm:$0xf]
      %v968 = vld [vmem:[%s961 + $0x18] sm:$0xf]
      %v969 = vld [vmem:[%s961 + $0x1c] sm:$0xf]
      %v970 = vld [vmem:[%s961 + $0x20] sm:$0xf]
      %v971 = vld [vmem:[%s961 + $0x24] sm:$0xf]
      %v972 = vld [vmem:[%s961 + $0x28] sm:$0xf]
      %v973 = vld [vmem:[%s961 + $0x2c] sm:$0xf]
      %v974 = vld [vmem:[%s961 + $0x30] sm:$0xf]
      %v975 = vld [vmem:[%s961 + $0x34] sm:$0xf]
      %v976 = vld [vmem:[%s961 + $0x38] sm:$0xf]
      %v977 = vld [vmem:[%s961 + $0x3c] sm:$0xf]
      %v994 = vunpack.c.l.b16 %v962
      %v995 = vunpack.c.l.b16 %v963
      %v996 = vunpack.c.l.b16 %v964
      %v997 = vunpack.c.l.b16 %v965
      %v998 = vunpack.c.l.b16 %v966
      %v999 = vunpack.c.l.b16 %v967
      %v1000 = vunpack.c.l.b16 %v968
      %v1001 = vunpack.c.l.b16 %v969
      %v1002 = vunpack.c.l.b16 %v970
      %v1003 = vunpack.c.l.b16 %v971
      %v1004 = vunpack.c.l.b16 %v972
      %v1005 = vunpack.c.l.b16 %v973
      %v1006 = vunpack.c.l.b16 %v974
      %v1007 = vunpack.c.l.b16 %v975
      %v1008 = vunpack.c.l.b16 %v976
      %v1009 = vunpack.c.l.b16 %v977
      %v1010 = vpack.c.b16 %v995, %v994
      %v1011 = vpack.c.b16 %v997, %v996
      %v1012 = vpack.c.b16 %v999, %v998
      %v1013 = vpack.c.b16 %v1001, %v1000
      %v1014 = vpack.c.b16 %v1003, %v1002
      %v1015 = vpack.c.b16 %v1005, %v1004
      %v1016 = vpack.c.b16 %v1007, %v1006
      %v1017 = vpack.c.b16 %v1009, %v1008
      %1026 = vmatprep.subr.bf16.mxu0 0
      %1027 = vmatpush1.bf16.msra.mxu0 %v1010
      %1028 = vmatprep.subr.bf16.mxu0 0
      %1029 = vmatpush1.bf16.msra.mxu0 %v1011
      %1030 = vmatprep.subr.bf16.mxu0 0
      %1031 = vmatpush1.bf16.msra.mxu0 %v1012
      %1032 = vmatprep.subr.bf16.mxu0 0
      %1033 = vmatpush1.bf16.msra.mxu0 %v1013
      %1034 = vmatprep.subr.bf16.mxu0 0
      %1035 = vmatpush1.bf16.msra.mxu0 %v1014
      %1036 = vmatprep.subr.bf16.mxu0 0
      %1037 = vmatpush1.bf16.msra.mxu0 %v1015
      %1038 = vmatprep.subr.bf16.mxu0 0
      %1039 = vmatpush1.bf16.msra.mxu0 %v1016
      %1040 = vmatprep.subr.bf16.mxu0 0
      %1041 = vmatpush1.bf16.msra.mxu0 %v1017
      %1042 = vmatprep.subr.bf16.mxu0 0
      %1043 = vmatpush1.bf16.msra.mxu0 0
      %1044 = vmatprep.subr.bf16.mxu0 0
      %1045 = vmatpush1.bf16.msra.mxu0 0
      %1046 = vmatprep.subr.bf16.mxu0 0
      %1047 = vmatpush1.bf16.msra.mxu0 0
      %1048 = vmatprep.subr.bf16.mxu0 0
      %1049 = vmatpush1.bf16.msra.mxu0 0
      %1050 = vmatprep.subr.bf16.mxu0 0
      %1051 = vmatpush1.bf16.msra.mxu0 0
      %1052 = vmatprep.subr.bf16.mxu0 0
      %1053 = vmatpush1.bf16.msra.mxu0 0
      %1054 = vmatprep.subr.bf16.mxu0 0
      %1055 = vmatpush1.bf16.msra.mxu0 0
      %1056 = vmatprep.subr.bf16.mxu0 0
      %1057 = vmatpush1.bf16.msra.mxu0 0
      %1058 = vmatprep.mubr.bf16.mxu0 0
      %1059 = vmatmul.mubr.bf16.gmra.mrb[0].mxu0 %v957
      %v1060 = vpop.f32.mrb[0].mxu0
      %v1061 = vadd.f32 0.0, %v1060
      %v1062 = vpop.f32.mrb[0].mxu0
      %v1063 = vpop.f32.mrb[0].mxu0
      %v1064 = vadd.f32 0.0, %v1063
      %v1065 = vpop.f32.mrb[0].mxu0
      %1066 = vmatprep.mubr.bf16.mxu0 0
      %1067 = vmatmul.mubr.bf16.gmra.mrb[0].mxu0 %v958
      %v1068 = vpop.f32.mrb[0].mxu0
      %v1069 = vadd.f32 0.0, %v1068
      %v1070 = vpop.f32.mrb[0].mxu0
      %v1071 = vpop.f32.mrb[0].mxu0
      %v1072 = vadd.f32 0.0, %v1071
      %v1073 = vpop.f32.mrb[0].mxu0
      %1074 = vmatprep.mubr.bf16.mxu0 0
      %1075 = vmatmul.mubr.bf16.gmra.mrb[0].mxu0 %v959
      %v1076 = vpop.f32.mrb[0].mxu0
      %v1077 = vadd.f32 0.0, %v1076
      %v1078 = vpop.f32.mrb[0].mxu0
      %v1079 = vpop.f32.mrb[0].mxu0
      %v1080 = vadd.f32 0.0, %v1079
      %v1081 = vpop.f32.mrb[0].mxu0
      %1082 = vmatprep.mubr.bf16.mxu0 0
      %1083 = vmatmul.mubr.bf16.gmra.mrb[0].mxu0 %v960
      %v1084 = vpop.f32.mrb[0].mxu0
      %v1085 = vadd.f32 0.0, %v1084
      %v1086 = vpop.f32.mrb[0].mxu0
      %v1087 = vpop.f32.mrb[0].mxu0
      %v1088 = vadd.f32 0.0, %v1087
      %v1089 = vpop.f32.mrb[0].mxu0
      %1090 = vdwg.mxu0
      %v1091 = vadd.f32 %v933, %v1061
      %v1092 = vadd.f32 %v934, %v1064
      %v1093 = vadd.f32 %v935, %v1069
      %v1094 = vadd.f32 %v936, %v1072
      %v1095 = vadd.f32 %v937, %v1077
      %v1096 = vadd.f32 %v938, %v1080
      %v1097 = vadd.f32 %v939, %v1085
      %v1098 = vadd.f32 %v940, %v1088
      %v1099 = vld [vmem:[#allocation2 + $0x10] sm:$0xff]
      %v1100 = vld [vmem:[#allocation2 + $0x18] sm:$0xff]
      %v1101 = vld [vmem:[#allocation2 + $0x20] sm:$0xff]
      %v1102 = vld [vmem:[#allocation2 + $0x28] sm:$0xff]
      %v1103 = vld [vmem:[#allocation2 + $0x30] sm:$0xff]
      %v1104 = vld [vmem:[#allocation2 + $0x38] sm:$0xff]
      %v1105 = vld [vmem:[#allocation2 + $0x40] sm:$0xff]
      %v1106 = vld [vmem:[#allocation2 + $0x48] sm:$0xff]
      %v1107 = vpack.c.bf16 %v1100, %v1099
      %v1108 = vpack.c.bf16 %v1102, %v1101
      %v1109 = vpack.c.bf16 %v1104, %v1103
      %v1110 = vpack.c.bf16 %v1106, %v1105
      %s1111 = scalar_lea.vmem %s3, 256
      %v1112 = vld [vmem:[%s1111] sm:$0xf]
      %v1113 = vld [vmem:[%s1111 + $0x4] sm:$0xf]
      %v1114 = vld [vmem:[%s1111 + $0x8] sm:$0xf]
      %v1115 = vld [vmem:[%s1111 + $0xc] sm:$0xf]
      %v1116 = vld [vmem:[%s1111 + $0x10] sm:$0xf]
      %v1117 = vld [vmem:[%s1111 + $0x14] sm:$0xf]
      %v1118 = vld [vmem:[%s1111 + $0x18] sm:$0xf]
      %v1119 = vld [vmem:[%s1111 + $0x1c] sm:$0xf]
      %v1120 = vld [vmem:[%s1111 + $0x20] sm:$0xf]
      %v1121 = vld [vmem:[%s1111 + $0x24] sm:$0xf]
      %v1122 = vld [vmem:[%s1111 + $0x28] sm:$0xf]
      %v1123 = vld [vmem:[%s1111 + $0x2c] sm:$0xf]
      %v1124 = vld [vmem:[%s1111 + $0x30] sm:$0xf]
      %v1125 = vld [vmem:[%s1111 + $0x34] sm:$0xf]
      %v1126 = vld [vmem:[%s1111 + $0x38] sm:$0xf]
      %v1127 = vld [vmem:[%s1111 + $0x3c] sm:$0xf]
      %v1144 = vunpack.c.l.b16 %v1112
      %v1145 = vunpack.c.l.b16 %v1113
      %v1146 = vunpack.c.l.b16 %v1114
      %v1147 = vunpack.c.l.b16 %v1115
      %v1148 = vunpack.c.l.b16 %v1116
      %v1149 = vunpack.c.l.b16 %v1117
      %v1150 = vunpack.c.l.b16 %v1118
      %v1151 = vunpack.c.l.b16 %v1119
      %v1152 = vunpack.c.l.b16 %v1120
      %v1153 = vunpack.c.l.b16 %v1121
      %v1154 = vunpack.c.l.b16 %v1122
      %v1155 = vunpack.c.l.b16 %v1123
      %v1156 = vunpack.c.l.b16 %v1124
      %v1157 = vunpack.c.l.b16 %v1125
      %v1158 = vunpack.c.l.b16 %v1126
      %v1159 = vunpack.c.l.b16 %v1127
      %v1160 = vpack.c.b16 %v1145, %v1144
      %v1161 = vpack.c.b16 %v1147, %v1146
      %v1162 = vpack.c.b16 %v1149, %v1148
      %v1163 = vpack.c.b16 %v1151, %v1150
      %v1164 = vpack.c.b16 %v1153, %v1152
      %v1165 = vpack.c.b16 %v1155, %v1154
      %v1166 = vpack.c.b16 %v1157, %v1156
      %v1167 = vpack.c.b16 %v1159, %v1158
      %1176 = vmatprep.subr.bf16.mxu0 0
      %1177 = vmatpush1.bf16.msra.mxu0 %v1160
      %1178 = vmatprep.subr.bf16.mxu0 0
      %1179 = vmatpush1.bf16.msra.mxu0 %v1161
      %1180 = vmatprep.subr.bf16.mxu0 0
      %1181 = vmatpush1.bf16.msra.mxu0 %v1162
      %1182 = vmatprep.subr.bf16.mxu0 0
      %1183 = vmatpush1.bf16.msra.mxu0 %v1163
      %1184 = vmatprep.subr.bf16.mxu0 0
      %1185 = vmatpush1.bf16.msra.mxu0 %v1164
      %1186 = vmatprep.subr.bf16.mxu0 0
      %1187 = vmatpush1.bf16.msra.mxu0 %v1165
      %1188 = vmatprep.subr.bf16.mxu0 0
      %1189 = vmatpush1.bf16.msra.mxu0 %v1166
      %1190 = vmatprep.subr.bf16.mxu0 0
      %1191 = vmatpush1.bf16.msra.mxu0 %v1167
      %1192 = vmatprep.subr.bf16.mxu0 0
      %1193 = vmatpush1.bf16.msra.mxu0 0
      %1194 = vmatprep.subr.bf16.mxu0 0
      %1195 = vmatpush1.bf16.msra.mxu0 0
      %1196 = vmatprep.subr.bf16.mxu0 0
      %1197 = vmatpush1.bf16.msra.mxu0 0
      %1198 = vmatprep.subr.bf16.mxu0 0
      %1199 = vmatpush1.bf16.msra.mxu0 0
      %1200 = vmatprep.subr.bf16.mxu0 0
      %1201 = vmatpush1.bf16.msra.mxu0 0
      %1202 = vmatprep.subr.bf16.mxu0 0
      %1203 = vmatpush1.bf16.msra.mxu0 0
      %1204 = vmatprep.subr.bf16.mxu0 0
      %1205 = vmatpush1.bf16.msra.mxu0 0
      %1206 = vmatprep.subr.bf16.mxu0 0
      %1207 = vmatpush1.bf16.msra.mxu0 0
      %1208 = vmatprep.mubr.bf16.mxu0 0
      %1209 = vmatmul.mubr.bf16.gmra.mrb[0].mxu0 %v1107
      %v1210 = vpop.f32.mrb[0].mxu0
      %v1211 = vadd.f32 0.0, %v1210
      %v1212 = vpop.f32.mrb[0].mxu0
      %v1213 = vpop.f32.mrb[0].mxu0
      %v1214 = vadd.f32 0.0, %v1213
      %v1215 = vpop.f32.mrb[0].mxu0
      %1216 = vmatprep.mubr.bf16.mxu0 0
      %1217 = vmatmul.mubr.bf16.gmra.mrb[0].mxu0 %v1108
      %v1218 = vpop.f32.mrb[0].mxu0
      %v1219 = vadd.f32 0.0, %v1218
      %v1220 = vpop.f32.mrb[0].mxu0
      %v1221 = vpop.f32.mrb[0].mxu0
      %v1222 = vadd.f32 0.0, %v1221
      %v1223 = vpop.f32.mrb[0].mxu0
      %1224 = vmatprep.mubr.bf16.mxu0 0
      %1225 = vmatmul.mubr.bf16.gmra.mrb[0].mxu0 %v1109
      %v1226 = vpop.f32.mrb[0].mxu0
      %v1227 = vadd.f32 0.0, %v1226
      %v1228 = vpop.f32.mrb[0].mxu0
      %v1229 = vpop.f32.mrb[0].mxu0
      %v1230 = vadd.f32 0.0, %v1229
      %v1231 = vpop.f32.mrb[0].mxu0
      %1232 = vmatprep.mubr.bf16.mxu0 0
      %1233 = vmatmul.mubr.bf16.gmra.mrb[0].mxu0 %v1110
      %v1234 = vpop.f32.mrb[0].mxu0
      %v1235 = vadd.f32 0.0, %v1234
      %v1236 = vpop.f32.mrb[0].mxu0
      %v1237 = vpop.f32.mrb[0].mxu0
      %v1238 = vadd.f32 0.0, %v1237
      %v1239 = vpop.f32.mrb[0].mxu0
      %1240 = vdwg.mxu0
      %v1241 = vadd.f32 %v1091, %v1211
      %v1242 = vadd.f32 %v1092, %v1214
      %v1243 = vadd.f32 %v1093, %v1219
      %v1244 = vadd.f32 %v1094, %v1222
      %v1245 = vadd.f32 %v1095, %v1227
      %v1246 = vadd.f32 %v1096, %v1230
      %v1247 = vadd.f32 %v1097, %v1235
      %v1248 = vadd.f32 %v1098, %v1238
      %v1249 = vld [vmem:[#allocation2 + $0x11] sm:$0xff]
      %v1250 = vld [vmem:[#allocation2 + $0x19] sm:$0xff]
      %v1251 = vld [vmem:[#allocation2 + $0x21] sm:$0xff]
      %v1252 = vld [vmem:[#allocation2 + $0x29] sm:$0xff]
      %v1253 = vld [vmem:[#allocation2 + $0x31] sm:$0xff]
      %v1254 = vld [vmem:[#allocation2 + $0x39] sm:$0xff]
      %v1255 = vld [vmem:[#allocation2 + $0x41] sm:$0xff]
      %v1256 = vld [vmem:[#allocation2 + $0x49] sm:$0xff]
      %v1257 = vmul.f32 %v1249, %v460
      %v1258 = vmul.f32 %v1250, %v461
      %v1259 = vmul.f32 %v1251, %v462
      %v1260 = vmul.f32 %v1252, %v463
      %v1261 = vmul.f32 %v1253, %v464
      %v1262 = vmul.f32 %v1254, %v465
      %v1263 = vmul.f32 %v1255, %v466
      %v1264 = vmul.f32 %v1256, %v467
      %v1265 = vpack.c.bf16 %v1258, %v1257
      %v1266 = vpack.c.bf16 %v1260, %v1259
      %v1267 = vpack.c.bf16 %v1262, %v1261
      %v1268 = vpack.c.bf16 %v1264, %v1263
      %s1269 = scalar_lea.vmem %s3, 320
      %v1270 = vld [vmem:[%s1269] sm:$0xf]
      %v1271 = vld [vmem:[%s1269 + $0x4] sm:$0xf]
      %v1272 = vld [vmem:[%s1269 + $0x8] sm:$0xf]
      %v1273 = vld [vmem:[%s1269 + $0xc] sm:$0xf]
      %v1274 = vld [vmem:[%s1269 + $0x10] sm:$0xf]
      %v1275 = vld [vmem:[%s1269 + $0x14] sm:$0xf]
      %v1276 = vld [vmem:[%s1269 + $0x18] sm:$0xf]
      %v1277 = vld [vmem:[%s1269 + $0x1c] sm:$0xf]
      %v1278 = vld [vmem:[%s1269 + $0x20] sm:$0xf]
      %v1279 = vld [vmem:[%s1269 + $0x24] sm:$0xf]
      %v1280 = vld [vmem:[%s1269 + $0x28] sm:$0xf]
      %v1281 = vld [vmem:[%s1269 + $0x2c] sm:$0xf]
      %v1282 = vld [vmem:[%s1269 + $0x30] sm:$0xf]
      %v1283 = vld [vmem:[%s1269 + $0x34] sm:$0xf]
      %v1284 = vld [vmem:[%s1269 + $0x38] sm:$0xf]
      %v1285 = vld [vmem:[%s1269 + $0x3c] sm:$0xf]
      %v1302 = vunpack.c.l.b16 %v1270
      %v1303 = vunpack.c.l.b16 %v1271
      %v1304 = vunpack.c.l.b16 %v1272
      %v1305 = vunpack.c.l.b16 %v1273
      %v1306 = vunpack.c.l.b16 %v1274
      %v1307 = vunpack.c.l.b16 %v1275
      %v1308 = vunpack.c.l.b16 %v1276
      %v1309 = vunpack.c.l.b16 %v1277
      %v1310 = vunpack.c.l.b16 %v1278
      %v1311 = vunpack.c.l.b16 %v1279
      %v1312 = vunpack.c.l.b16 %v1280
      %v1313 = vunpack.c.l.b16 %v1281
      %v1314 = vunpack.c.l.b16 %v1282
      %v1315 = vunpack.c.l.b16 %v1283
      %v1316 = vunpack.c.l.b16 %v1284
      %v1317 = vunpack.c.l.b16 %v1285
      %v1318 = vpack.c.b16 %v1303, %v1302
      %v1319 = vpack.c.b16 %v1305, %v1304
      %v1320 = vpack.c.b16 %v1307, %v1306
      %v1321 = vpack.c.b16 %v1309, %v1308
      %v1322 = vpack.c.b16 %v1311, %v1310
      %v1323 = vpack.c.b16 %v1313, %v1312
      %v1324 = vpack.c.b16 %v1315, %v1314
      %v1325 = vpack.c.b16 %v1317, %v1316
      %1334 = vmatprep.subr.bf16.mxu0 0
      %1335 = vmatpush1.bf16.msra.mxu0 %v1318
      %1336 = vmatprep.subr.bf16.mxu0 0
      %1337 = vmatpush1.bf16.msra.mxu0 %v1319
      %1338 = vmatprep.subr.bf16.mxu0 0
      %1339 = vmatpush1.bf16.msra.mxu0 %v1320
      %1340 = vmatprep.subr.bf16.mxu0 0
      %1341 = vmatpush1.bf16.msra.mxu0 %v1321
      %1342 = vmatprep.subr.bf16.mxu0 0
      %1343 = vmatpush1.bf16.msra.mxu0 %v1322
      %1344 = vmatprep.subr.bf16.mxu0 0
      %1345 = vmatpush1.bf16.msra.mxu0 %v1323
      %1346 = vmatprep.subr.bf16.mxu0 0
      %1347 = vmatpush1.bf16.msra.mxu0 %v1324
      %1348 = vmatprep.subr.bf16.mxu0 0
      %1349 = vmatpush1.bf16.msra.mxu0 %v1325
      %1350 = vmatprep.subr.bf16.mxu0 0
      %1351 = vmatpush1.bf16.msra.mxu0 0
      %1352 = vmatprep.subr.bf16.mxu0 0
      %1353 = vmatpush1.bf16.msra.mxu0 0
      %1354 = vmatprep.subr.bf16.mxu0 0
      %1355 = vmatpush1.bf16.msra.mxu0 0
      %1356 = vmatprep.subr.bf16.mxu0 0
      %1357 = vmatpush1.bf16.msra.mxu0 0
      %1358 = vmatprep.subr.bf16.mxu0 0
      %1359 = vmatpush1.bf16.msra.mxu0 0
      %1360 = vmatprep.subr.bf16.mxu0 0
      %1361 = vmatpush1.bf16.msra.mxu0 0
      %1362 = vmatprep.subr.bf16.mxu0 0
      %1363 = vmatpush1.bf16.msra.mxu0 0
      %1364 = vmatprep.subr.bf16.mxu0 0
      %1365 = vmatpush1.bf16.msra.mxu0 0
      %1366 = vmatprep.mubr.bf16.mxu0 0
      %1367 = vmatmul.mubr.bf16.gmra.mrb[0].mxu0 %v1265
      %v1368 = vpop.f32.mrb[0].mxu0
      %v1369 = vadd.f32 0.0, %v1368
      %v1370 = vpop.f32.mrb[0].mxu0
      %v1371 = vpop.f32.mrb[0].mxu0
      %v1372 = vadd.f32 0.0, %v1371
      %v1373 = vpop.f32.mrb[0].mxu0
      %1374 = vmatprep.mubr.bf16.mxu0 0
      %1375 = vmatmul.mubr.bf16.gmra.mrb[0].mxu0 %v1266
      %v1376 = vpop.f32.mrb[0].mxu0
      %v1377 = vadd.f32 0.0, %v1376
      %v1378 = vpop.f32.mrb[0].mxu0
      %v1379 = vpop.f32.mrb[0].mxu0
      %v1380 = vadd.f32 0.0, %v1379
      %v1381 = vpop.f32.mrb[0].mxu0
      %1382 = vmatprep.mubr.bf16.mxu0 0
      %1383 = vmatmul.mubr.bf16.gmra.mrb[0].mxu0 %v1267
      %v1384 = vpop.f32.mrb[0].mxu0
      %v1385 = vadd.f32 0.0, %v1384
      %v1386 = vpop.f32.mrb[0].mxu0
      %v1387 = vpop.f32.mrb[0].mxu0
      %v1388 = vadd.f32 0.0, %v1387
      %v1389 = vpop.f32.mrb[0].mxu0
      %1390 = vmatprep.mubr.bf16.mxu0 0
      %1391 = vmatmul.mubr.bf16.gmra.mrb[0].mxu0 %v1268
      %v1392 = vpop.f32.mrb[0].mxu0
      %v1393 = vadd.f32 0.0, %v1392
      %v1394 = vpop.f32.mrb[0].mxu0
      %v1395 = vpop.f32.mrb[0].mxu0
      %v1396 = vadd.f32 0.0, %v1395
      %v1397 = vpop.f32.mrb[0].mxu0
      %1398 = vdwg.mxu0
      %v1399 = vadd.f32 %v1241, %v1369
      %v1400 = vadd.f32 %v1242, %v1372
      %v1401 = vadd.f32 %v1243, %v1377
      %v1402 = vadd.f32 %v1244, %v1380
      %v1403 = vadd.f32 %v1245, %v1385
      %v1404 = vadd.f32 %v1246, %v1388
      %v1405 = vadd.f32 %v1247, %v1393
      %v1406 = vadd.f32 %v1248, %v1396
      %v1407 = vld [vmem:[#allocation2 + $0x17] sm:$0xff]
      %v1408 = vld [vmem:[#allocation2 + $0x1f] sm:$0xff]
      %v1409 = vld [vmem:[#allocation2 + $0x27] sm:$0xff]
      %v1410 = vld [vmem:[#allocation2 + $0x2f] sm:$0xff]
      %v1411 = vld [vmem:[#allocation2 + $0x37] sm:$0xff]
      %v1412 = vld [vmem:[#allocation2 + $0x3f] sm:$0xff]
      %v1413 = vld [vmem:[#allocation2 + $0x47] sm:$0xff]
      %v1414 = vld [vmem:[#allocation2 + $0x4f] sm:$0xff]
      %v1415 = vmul.f32 %v1407, %v484
      %v1416 = vmul.f32 %v1408, %v485
      %v1417 = vmul.f32 %v1409, %v486
      %v1418 = vmul.f32 %v1410, %v487
      %v1419 = vmul.f32 %v1411, %v488
      %v1420 = vmul.f32 %v1412, %v489
      %v1421 = vmul.f32 %v1413, %v490
      %v1422 = vmul.f32 %v1414, %v491
      %v1423 = vpack.c.bf16 %v1416, %v1415
      %v1424 = vpack.c.bf16 %v1418, %v1417
      %v1425 = vpack.c.bf16 %v1420, %v1419
      %v1426 = vpack.c.bf16 %v1422, %v1421
      %s1427 = scalar_lea.vmem %s3, 384
      %v1428 = vld [vmem:[%s1427] sm:$0xf]
      %v1429 = vld [vmem:[%s1427 + $0x4] sm:$0xf]
      %v1430 = vld [vmem:[%s1427 + $0x8] sm:$0xf]
      %v1431 = vld [vmem:[%s1427 + $0xc] sm:$0xf]
      %v1432 = vld [vmem:[%s1427 + $0x10] sm:$0xf]
      %v1433 = vld [vmem:[%s1427 + $0x14] sm:$0xf]
      %v1434 = vld [vmem:[%s1427 + $0x18] sm:$0xf]
      %v1435 = vld [vmem:[%s1427 + $0x1c] sm:$0xf]
      %v1436 = vld [vmem:[%s1427 + $0x20] sm:$0xf]
      %v1437 = vld [vmem:[%s1427 + $0x24] sm:$0xf]
      %v1438 = vld [vmem:[%s1427 + $0x28] sm:$0xf]
      %v1439 = vld [vmem:[%s1427 + $0x2c] sm:$0xf]
      %v1440 = vld [vmem:[%s1427 + $0x30] sm:$0xf]
      %v1441 = vld [vmem:[%s1427 + $0x34] sm:$0xf]
      %v1442 = vld [vmem:[%s1427 + $0x38] sm:$0xf]
      %v1443 = vld [vmem:[%s1427 + $0x3c] sm:$0xf]
      %v1460 = vunpack.c.l.b16 %v1428
      %v1461 = vunpack.c.l.b16 %v1429
      %v1462 = vunpack.c.l.b16 %v1430
      %v1463 = vunpack.c.l.b16 %v1431
      %v1464 = vunpack.c.l.b16 %v1432
      %v1465 = vunpack.c.l.b16 %v1433
      %v1466 = vunpack.c.l.b16 %v1434
      %v1467 = vunpack.c.l.b16 %v1435
      %v1468 = vunpack.c.l.b16 %v1436
      %v1469 = vunpack.c.l.b16 %v1437
      %v1470 = vunpack.c.l.b16 %v1438
      %v1471 = vunpack.c.l.b16 %v1439
      %v1472 = vunpack.c.l.b16 %v1440
      %v1473 = vunpack.c.l.b16 %v1441
      %v1474 = vunpack.c.l.b16 %v1442
      %v1475 = vunpack.c.l.b16 %v1443
      %v1476 = vpack.c.b16 %v1461, %v1460
      %v1477 = vpack.c.b16 %v1463, %v1462
      %v1478 = vpack.c.b16 %v1465, %v1464
      %v1479 = vpack.c.b16 %v1467, %v1466
      %v1480 = vpack.c.b16 %v1469, %v1468
      %v1481 = vpack.c.b16 %v1471, %v1470
      %v1482 = vpack.c.b16 %v1473, %v1472
      %v1483 = vpack.c.b16 %v1475, %v1474
      %1492 = vmatprep.subr.bf16.mxu0 0
      %1493 = vmatpush1.bf16.msra.mxu0 %v1476
      %1494 = vmatprep.subr.bf16.mxu0 0
      %1495 = vmatpush1.bf16.msra.mxu0 %v1477
      %1496 = vmatprep.subr.bf16.mxu0 0
      %1497 = vmatpush1.bf16.msra.mxu0 %v1478
      %1498 = vmatprep.subr.bf16.mxu0 0
      %1499 = vmatpush1.bf16.msra.mxu0 %v1479
      %1500 = vmatprep.subr.bf16.mxu0 0
      %1501 = vmatpush1.bf16.msra.mxu0 %v1480
      %1502 = vmatprep.subr.bf16.mxu0 0
      %1503 = vmatpush1.bf16.msra.mxu0 %v1481
      %1504 = vmatprep.subr.bf16.mxu0 0
      %1505 = vmatpush1.bf16.msra.mxu0 %v1482
      %1506 = vmatprep.subr.bf16.mxu0 0
      %1507 = vmatpush1.bf16.msra.mxu0 %v1483
      %1508 = vmatprep.subr.bf16.mxu0 0
      %1509 = vmatpush1.bf16.msra.mxu0 0
      %1510 = vmatprep.subr.bf16.mxu0 0
      %1511 = vmatpush1.bf16.msra.mxu0 0
      %1512 = vmatprep.subr.bf16.mxu0 0
      %1513 = vmatpush1.bf16.msra.mxu0 0
      %1514 = vmatprep.subr.bf16.mxu0 0
      %1515 = vmatpush1.bf16.msra.mxu0 0
      %1516 = vmatprep.subr.bf16.mxu0 0
      %1517 = vmatpush1.bf16.msra.mxu0 0
      %1518 = vmatprep.subr.bf16.mxu0 0
      %1519 = vmatpush1.bf16.msra.mxu0 0
      %1520 = vmatprep.subr.bf16.mxu0 0
      %1521 = vmatpush1.bf16.msra.mxu0 0
      %1522 = vmatprep.subr.bf16.mxu0 0
      %1523 = vmatpush1.bf16.msra.mxu0 0
      %1524 = vmatprep.mubr.bf16.mxu0 0
      %1525 = vmatmul.mubr.bf16.gmra.mrb[0].mxu0 %v1423
      %v1526 = vpop.f32.mrb[0].mxu0
      %v1527 = vadd.f32 0.0, %v1526
      %v1528 = vpop.f32.mrb[0].mxu0
      %v1529 = vpop.f32.mrb[0].mxu0
      %v1530 = vadd.f32 0.0, %v1529
      %v1531 = vpop.f32.mrb[0].mxu0
      %1532 = vmatprep.mubr.bf16.mxu0 0
      %1533 = vmatmul.mubr.bf16.gmra.mrb[0].mxu0 %v1424
      %v1534 = vpop.f32.mrb[0].mxu0
      %v1535 = vadd.f32 0.0, %v1534
      %v1536 = vpop.f32.mrb[0].mxu0
      %v1537 = vpop.f32.mrb[0].mxu0
      %v1538 = vadd.f32 0.0, %v1537
      %v1539 = vpop.f32.mrb[0].mxu0
      %1540 = vmatprep.mubr.bf16.mxu0 0
      %1541 = vmatmul.mubr.bf16.gmra.mrb[0].mxu0 %v1425
      %v1542 = vpop.f32.mrb[0].mxu0
      %v1543 = vadd.f32 0.0, %v1542
      %v1544 = vpop.f32.mrb[0].mxu0
      %v1545 = vpop.f32.mrb[0].mxu0
      %v1546 = vadd.f32 0.0, %v1545
      %v1547 = vpop.f32.mrb[0].mxu0
      %1548 = vmatprep.mubr.bf16.mxu0 0
      %1549 = vmatmul.mubr.bf16.gmra.mrb[0].mxu0 %v1426
      %v1550 = vpop.f32.mrb[0].mxu0
      %v1551 = vadd.f32 0.0, %v1550
      %v1552 = vpop.f32.mrb[0].mxu0
      %v1553 = vpop.f32.mrb[0].mxu0
      %v1554 = vadd.f32 0.0, %v1553
      %v1555 = vpop.f32.mrb[0].mxu0
      %1556 = vdwg.mxu0
      %v1557 = vadd.f32 %v1399, %v1527
      %v1558 = vadd.f32 %v1400, %v1530
      %v1559 = vadd.f32 %v1401, %v1535
      %v1560 = vadd.f32 %v1402, %v1538
      %v1561 = vadd.f32 %v1403, %v1543
      %v1562 = vadd.f32 %v1404, %v1546
      %v1563 = vadd.f32 %v1405, %v1551
      %v1564 = vadd.f32 %v1406, %v1554
      %v1565 = vld [vmem:[#allocation2 + $0x18] sm:$0xff]
      %v1566 = vld [vmem:[#allocation2 + $0x20] sm:$0xff]
      %v1567 = vld [vmem:[#allocation2 + $0x28] sm:$0xff]
      %v1568 = vld [vmem:[#allocation2 + $0x30] sm:$0xff]
      %v1569 = vld [vmem:[#allocation2 + $0x38] sm:$0xff]
      %v1570 = vld [vmem:[#allocation2 + $0x40] sm:$0xff]
      %v1571 = vld [vmem:[#allocation2 + $0x48] sm:$0xff]
      %v1572 = vld [vmem:[#allocation2 + $0x50] sm:$0xff]
      %v1573 = vpack.c.bf16 %v1566, %v1565
      %v1574 = vpack.c.bf16 %v1568, %v1567
      %v1575 = vpack.c.bf16 %v1570, %v1569
      %v1576 = vpack.c.bf16 %v1572, %v1571
      %s1577 = scalar_lea.vmem %s3, 448
      %v1578 = vld [vmem:[%s1577] sm:$0xf]
      %v1579 = vld [vmem:[%s1577 + $0x4] sm:$0xf]
      %v1580 = vld [vmem:[%s1577 + $0x8] sm:$0xf]
      %v1581 = vld [vmem:[%s1577 + $0xc] sm:$0xf]
      %v1582 = vld [vmem:[%s1577 + $0x10] sm:$0xf]
      %v1583 = vld [vmem:[%s1577 + $0x14] sm:$0xf]
      %v1584 = vld [vmem:[%s1577 + $0x18] sm:$0xf]
      %v1585 = vld [vmem:[%s1577 + $0x1c] sm:$0xf]
      %v1586 = vld [vmem:[%s1577 + $0x20] sm:$0xf]
      %v1587 = vld [vmem:[%s1577 + $0x24] sm:$0xf]
      %v1588 = vld [vmem:[%s1577 + $0x28] sm:$0xf]
      %v1589 = vld [vmem:[%s1577 + $0x2c] sm:$0xf]
      %v1590 = vld [vmem:[%s1577 + $0x30] sm:$0xf]
      %v1591 = vld [vmem:[%s1577 + $0x34] sm:$0xf]
      %v1592 = vld [vmem:[%s1577 + $0x38] sm:$0xf]
      %v1593 = vld [vmem:[%s1577 + $0x3c] sm:$0xf]
      %v1610 = vunpack.c.l.b16 %v1578
      %v1611 = vunpack.c.l.b16 %v1579
      %v1612 = vunpack.c.l.b16 %v1580
      %v1613 = vunpack.c.l.b16 %v1581
      %v1614 = vunpack.c.l.b16 %v1582
      %v1615 = vunpack.c.l.b16 %v1583
      %v1616 = vunpack.c.l.b16 %v1584
      %v1617 = vunpack.c.l.b16 %v1585
      %v1618 = vunpack.c.l.b16 %v1586
      %v1619 = vunpack.c.l.b16 %v1587
      %v1620 = vunpack.c.l.b16 %v1588
      %v1621 = vunpack.c.l.b16 %v1589
      %v1622 = vunpack.c.l.b16 %v1590
      %v1623 = vunpack.c.l.b16 %v1591
      %v1624 = vunpack.c.l.b16 %v1592
      %v1625 = vunpack.c.l.b16 %v1593
      %v1626 = vpack.c.b16 %v1611, %v1610
      %v1627 = vpack.c.b16 %v1613, %v1612
      %v1628 = vpack.c.b16 %v1615, %v1614
      %v1629 = vpack.c.b16 %v1617, %v1616
      %v1630 = vpack.c.b16 %v1619, %v1618
      %v1631 = vpack.c.b16 %v1621, %v1620
      %v1632 = vpack.c.b16 %v1623, %v1622
      %v1633 = vpack.c.b16 %v1625, %v1624
      %1642 = vmatprep.subr.bf16.mxu0 0
      %1643 = vmatpush1.bf16.msra.mxu0 %v1626
      %1644 = vmatprep.subr.bf16.mxu0 0
      %1645 = vmatpush1.bf16.msra.mxu0 %v1627
      %1646 = vmatprep.subr.bf16.mxu0 0
      %1647 = vmatpush1.bf16.msra.mxu0 %v1628
      %1648 = vmatprep.subr.bf16.mxu0 0
      %1649 = vmatpush1.bf16.msra.mxu0 %v1629
      %1650 = vmatprep.subr.bf16.mxu0 0
      %1651 = vmatpush1.bf16.msra.mxu0 %v1630
      %1652 = vmatprep.subr.bf16.mxu0 0
      %1653 = vmatpush1.bf16.msra.mxu0 %v1631
      %1654 = vmatprep.subr.bf16.mxu0 0
      %1655 = vmatpush1.bf16.msra.mxu0 %v1632
      %1656 = vmatprep.subr.bf16.mxu0 0
      %1657 = vmatpush1.bf16.msra.mxu0 %v1633
      %1658 = vmatprep.subr.bf16.mxu0 0
      %1659 = vmatpush1.bf16.msra.mxu0 0
      %1660 = vmatprep.subr.bf16.mxu0 0
      %1661 = vmatpush1.bf16.msra.mxu0 0
      %1662 = vmatprep.subr.bf16.mxu0 0
      %1663 = vmatpush1.bf16.msra.mxu0 0
      %1664 = vmatprep.subr.bf16.mxu0 0
      %1665 = vmatpush1.bf16.msra.mxu0 0
      %1666 = vmatprep.subr.bf16.mxu0 0
      %1667 = vmatpush1.bf16.msra.mxu0 0
      %1668 = vmatprep.subr.bf16.mxu0 0
      %1669 = vmatpush1.bf16.msra.mxu0 0
      %1670 = vmatprep.subr.bf16.mxu0 0
      %1671 = vmatpush1.bf16.msra.mxu0 0
      %1672 = vmatprep.subr.bf16.mxu0 0
      %1673 = vmatpush1.bf16.msra.mxu0 0
      %1674 = vmatprep.mubr.bf16.mxu0 0
      %1675 = vmatmul.mubr.bf16.gmra.mrb[0].mxu0 %v1573
      %v1676 = vpop.f32.mrb[0].mxu0
      %v1677 = vadd.f32 0.0, %v1676
      %v1678 = vpop.f32.mrb[0].mxu0
      %v1679 = vpop.f32.mrb[0].mxu0
      %v1680 = vadd.f32 0.0, %v1679
      %v1681 = vpop.f32.mrb[0].mxu0
      %1682 = vmatprep.mubr.bf16.mxu0 0
      %1683 = vmatmul.mubr.bf16.gmra.mrb[0].mxu0 %v1574
      %v1684 = vpop.f32.mrb[0].mxu0
      %v1685 = vadd.f32 0.0, %v1684
      %v1686 = vpop.f32.mrb[0].mxu0
      %v1687 = vpop.f32.mrb[0].mxu0
      %v1688 = vadd.f32 0.0, %v1687
      %v1689 = vpop.f32.mrb[0].mxu0
      %1690 = vmatprep.mubr.bf16.mxu0 0
      %1691 = vmatmul.mubr.bf16.gmra.mrb[0].mxu0 %v1575
      %v1692 = vpop.f32.mrb[0].mxu0
      %v1693 = vadd.f32 0.0, %v1692
      %v1694 = vpop.f32.mrb[0].mxu0
      %v1695 = vpop.f32.mrb[0].mxu0
      %v1696 = vadd.f32 0.0, %v1695
      %v1697 = vpop.f32.mrb[0].mxu0
      %1698 = vmatprep.mubr.bf16.mxu0 0
      %1699 = vmatmul.mubr.bf16.gmra.mrb[0].mxu0 %v1576
      %v1700 = vpop.f32.mrb[0].mxu0
      %v1701 = vadd.f32 0.0, %v1700
      %v1702 = vpop.f32.mrb[0].mxu0
      %v1703 = vpop.f32.mrb[0].mxu0
      %v1704 = vadd.f32 0.0, %v1703
      %v1705 = vpop.f32.mrb[0].mxu0
      %1706 = vdwg.mxu0
      %v1707 = vadd.f32 %v1557, %v1677
      %v1708 = vadd.f32 %v1558, %v1680
      %v1709 = vadd.f32 %v1559, %v1685
      %v1710 = vadd.f32 %v1560, %v1688
      %v1711 = vadd.f32 %v1561, %v1693
      %v1712 = vadd.f32 %v1562, %v1696
      %v1713 = vadd.f32 %v1563, %v1701
      %v1714 = vadd.f32 %v1564, %v1704
      %v1715 = vld [vmem:[#allocation2 + $0x19] sm:$0xff]
      %v1716 = vld [vmem:[#allocation2 + $0x21] sm:$0xff]
      %v1717 = vld [vmem:[#allocation2 + $0x29] sm:$0xff]
      %v1718 = vld [vmem:[#allocation2 + $0x31] sm:$0xff]
      %v1719 = vld [vmem:[#allocation2 + $0x39] sm:$0xff]
      %v1720 = vld [vmem:[#allocation2 + $0x41] sm:$0xff]
      %v1721 = vld [vmem:[#allocation2 + $0x49] sm:$0xff]
      %v1722 = vld [vmem:[#allocation2 + $0x51] sm:$0xff]
      %v1723 = vmul.f32 %v1715, %v460
      %v1724 = vmul.f32 %v1716, %v461
      %v1725 = vmul.f32 %v1717, %v462
      %v1726 = vmul.f32 %v1718, %v463
      %v1727 = vmul.f32 %v1719, %v464
      %v1728 = vmul.f32 %v1720, %v465
      %v1729 = vmul.f32 %v1721, %v466
      %v1730 = vmul.f32 %v1722, %v467
      %v1731 = vpack.c.bf16 %v1724, %v1723
      %v1732 = vpack.c.bf16 %v1726, %v1725
      %v1733 = vpack.c.bf16 %v1728, %v1727
      %v1734 = vpack.c.bf16 %v1730, %v1729
      %s1735 = scalar_lea.vmem %s3, 512
      %v1736 = vld [vmem:[%s1735] sm:$0xf]
      %v1737 = vld [vmem:[%s1735 + $0x4] sm:$0xf]
      %v1738 = vld [vmem:[%s1735 + $0x8] sm:$0xf]
      %v1739 = vld [vmem:[%s1735 + $0xc] sm:$0xf]
      %v1740 = vld [vmem:[%s1735 + $0x10] sm:$0xf]
      %v1741 = vld [vmem:[%s1735 + $0x14] sm:$0xf]
      %v1742 = vld [vmem:[%s1735 + $0x18] sm:$0xf]
      %v1743 = vld [vmem:[%s1735 + $0x1c] sm:$0xf]
      %v1744 = vld [vmem:[%s1735 + $0x20] sm:$0xf]
      %v1745 = vld [vmem:[%s1735 + $0x24] sm:$0xf]
      %v1746 = vld [vmem:[%s1735 + $0x28] sm:$0xf]
      %v1747 = vld [vmem:[%s1735 + $0x2c] sm:$0xf]
      %v1748 = vld [vmem:[%s1735 + $0x30] sm:$0xf]
      %v1749 = vld [vmem:[%s1735 + $0x34] sm:$0xf]
      %v1750 = vld [vmem:[%s1735 + $0x38] sm:$0xf]
      %v1751 = vld [vmem:[%s1735 + $0x3c] sm:$0xf]
      %v1768 = vunpack.c.l.b16 %v1736
      %v1769 = vunpack.c.l.b16 %v1737
      %v1770 = vunpack.c.l.b16 %v1738
      %v1771 = vunpack.c.l.b16 %v1739
      %v1772 = vunpack.c.l.b16 %v1740
      %v1773 = vunpack.c.l.b16 %v1741
      %v1774 = vunpack.c.l.b16 %v1742
      %v1775 = vunpack.c.l.b16 %v1743
      %v1776 = vunpack.c.l.b16 %v1744
      %v1777 = vunpack.c.l.b16 %v1745
      %v1778 = vunpack.c.l.b16 %v1746
      %v1779 = vunpack.c.l.b16 %v1747
      %v1780 = vunpack.c.l.b16 %v1748
      %v1781 = vunpack.c.l.b16 %v1749
      %v1782 = vunpack.c.l.b16 %v1750
      %v1783 = vunpack.c.l.b16 %v1751
      %v1784 = vpack.c.b16 %v1769, %v1768
      %v1785 = vpack.c.b16 %v1771, %v1770
      %v1786 = vpack.c.b16 %v1773, %v1772
      %v1787 = vpack.c.b16 %v1775, %v1774
      %v1788 = vpack.c.b16 %v1777, %v1776
      %v1789 = vpack.c.b16 %v1779, %v1778
      %v1790 = vpack.c.b16 %v1781, %v1780
      %v1791 = vpack.c.b16 %v1783, %v1782
      %1800 = vmatprep.subr.bf16.mxu0 0
      %1801 = vmatpush1.bf16.msra.mxu0 %v1784
      %1802 = vmatprep.subr.bf16.mxu0 0
      %1803 = vmatpush1.bf16.msra.mxu0 %v1785
      %1804 = vmatprep.subr.bf16.mxu0 0
      %1805 = vmatpush1.bf16.msra.mxu0 %v1786
      %1806 = vmatprep.subr.bf16.mxu0 0
      %1807 = vmatpush1.bf16.msra.mxu0 %v1787
      %1808 = vmatprep.subr.bf16.mxu0 0
      %1809 = vmatpush1.bf16.msra.mxu0 %v1788
      %1810 = vmatprep.subr.bf16.mxu0 0
      %1811 = vmatpush1.bf16.msra.mxu0 %v1789
      %1812 = vmatprep.subr.bf16.mxu0 0
      %1813 = vmatpush1.bf16.msra.mxu0 %v1790
      %1814 = vmatprep.subr.bf16.mxu0 0
      %1815 = vmatpush1.bf16.msra.mxu0 %v1791
      %1816 = vmatprep.subr.bf16.mxu0 0
      %1817 = vmatpush1.bf16.msra.mxu0 0
      %1818 = vmatprep.subr.bf16.mxu0 0
      %1819 = vmatpush1.bf16.msra.mxu0 0
      %1820 = vmatprep.subr.bf16.mxu0 0
      %1821 = vmatpush1.bf16.msra.mxu0 0
      %1822 = vmatprep.subr.bf16.mxu0 0
      %1823 = vmatpush1.bf16.msra.mxu0 0
      %1824 = vmatprep.subr.bf16.mxu0 0
      %1825 = vmatpush1.bf16.msra.mxu0 0
      %1826 = vmatprep.subr.bf16.mxu0 0
      %1827 = vmatpush1.bf16.msra.mxu0 0
      %1828 = vmatprep.subr.bf16.mxu0 0
      %1829 = vmatpush1.bf16.msra.mxu0 0
      %1830 = vmatprep.subr.bf16.mxu0 0
      %1831 = vmatpush1.bf16.msra.mxu0 0
      %1832 = vmatprep.mubr.bf16.mxu0 0
      %1833 = vmatmul.mubr.bf16.gmra.mrb[0].mxu0 %v1731
      %v1834 = vpop.f32.mrb[0].mxu0
      %v1835 = vadd.f32 0.0, %v1834
      %v1836 = vpop.f32.mrb[0].mxu0
      %v1837 = vpop.f32.mrb[0].mxu0
      %v1838 = vadd.f32 0.0, %v1837
      %v1839 = vpop.f32.mrb[0].mxu0
      %1840 = vmatprep.mubr.bf16.mxu0 0
      %1841 = vmatmul.mubr.bf16.gmra.mrb[0].mxu0 %v1732
      %v1842 = vpop.f32.mrb[0].mxu0
      %v1843 = vadd.f32 0.0, %v1842
      %v1844 = vpop.f32.mrb[0].mxu0
      %v1845 = vpop.f32.mrb[0].mxu0
      %v1846 = vadd.f32 0.0, %v1845
      %v1847 = vpop.f32.mrb[0].mxu0
      %1848 = vmatprep.mubr.bf16.mxu0 0
      %1849 = vmatmul.mubr.bf16.gmra.mrb[0].mxu0 %v1733
      %v1850 = vpop.f32.mrb[0].mxu0
      %v1851 = vadd.f32 0.0, %v1850
      %v1852 = vpop.f32.mrb[0].mxu0
      %v1853 = vpop.f32.mrb[0].mxu0
      %v1854 = vadd.f32 0.0, %v1853
      %v1855 = vpop.f32.mrb[0].mxu0
      %1856 = vmatprep.mubr.bf16.mxu0 0
      %1857 = vmatmul.mubr.bf16.gmra.mrb[0].mxu0 %v1734
      %v1858 = vpop.f32.mrb[0].mxu0
      %v1859 = vadd.f32 0.0, %v1858
      %v1860 = vpop.f32.mrb[0].mxu0
      %v1861 = vpop.f32.mrb[0].mxu0
      %v1862 = vadd.f32 0.0, %v1861
      %v1863 = vpop.f32.mrb[0].mxu0
      %1864 = vdwg.mxu0
      %v1865 = vadd.f32 %v1707, %v1835
      %v1866 = vadd.f32 %v1708, %v1838
      %v1867 = vadd.f32 %v1709, %v1843
      %v1868 = vadd.f32 %v1710, %v1846
      %v1869 = vadd.f32 %v1711, %v1851
      %v1870 = vadd.f32 %v1712, %v1854
      %v1871 = vadd.f32 %v1713, %v1859
      %v1872 = vadd.f32 %v1714, %v1862
      %v1873 = vpack.c.bf16 %v1866, %v1865
      %v1874 = vpack.c.bf16 %v1868, %v1867
      %v1875 = vpack.c.bf16 %v1870, %v1869
      %v1876 = vpack.c.bf16 %v1872, %v1871
      %v1881 = vunpack.c.l.b16 %v1873
      %v1882 = vunpack.c.h.b16 %v1873
      %v1883 = vunpack.c.l.b16 %v1874
      %v1884 = vunpack.c.h.b16 %v1874
      %v1885 = vunpack.c.l.b16 %v1875
      %v1886 = vunpack.c.h.b16 %v1875
      %v1887 = vunpack.c.l.b16 %v1876
      %v1888 = vunpack.c.h.b16 %v1876
      %v1889 = vpack.c.b16 %v1881, %v1881
      %v1890 = vpack.c.b16 %v1882, %v1882
      %v1891 = vpack.c.b16 %v1883, %v1883
      %v1892 = vpack.c.b16 %v1884, %v1884
      %v1893 = vpack.c.b16 %v1885, %v1885
      %v1894 = vpack.c.b16 %v1886, %v1886
      %v1895 = vpack.c.b16 %v1887, %v1887
      %v1896 = vpack.c.b16 %v1888, %v1888
      %1905 = vst [vmem:[%s264] sm:$0xf] %v1889
      %1906 = vst [vmem:[%s264 + $0x4] sm:$0xf] %v1890
      %1907 = vst [vmem:[%s264 + $0x8] sm:$0xf] %v1891
      %1908 = vst [vmem:[%s264 + $0xc] sm:$0xf] %v1892
      %1909 = vst [vmem:[%s264 + $0x10] sm:$0xf] %v1893
      %1910 = vst [vmem:[%s264 + $0x14] sm:$0xf] %v1894
      %1911 = vst [vmem:[%s264 + $0x18] sm:$0xf] %v1895
      %1912 = vst [vmem:[%s264 + $0x1c] sm:$0xf] %v1896
      %v1913 = vunpack.c.l.bf16 %v1873
      %v1914 = vunpack.c.h.bf16 %v1873
      %v1915 = vunpack.c.l.bf16 %v1874
      %v1916 = vunpack.c.h.bf16 %v1874
      %v1917 = vunpack.c.l.bf16 %v1875
      %v1918 = vunpack.c.h.bf16 %v1875
      %v1919 = vunpack.c.l.bf16 %v1876
      %v1920 = vunpack.c.h.bf16 %v1876
      %v1921 = vadd.f32 %v1913, %v1914
      %v1922 = vadd.f32 %v1921, %v1915
      %v1923 = vadd.f32 %v1922, %v1916
      %v1924 = vadd.f32 %v1923, %v1917
      %v1925 = vadd.f32 %v1924, %v1918
      %v1926 = vadd.f32 %v1925, %v1919
      %v1927 = vadd.f32 %v1926, %v1920
      %v1928 = vrot.slane %v1927, 4
      %v1929 = vadd.f32 %v1927, %v1928
      %v1930 = vrot.slane %v1929, 2
      %v1931 = vadd.f32 %v1929, %v1930
      %v1932 = vrot.slane %v1931, 1
      %v1933 = vadd.f32 %v1931, %v1932
      %1934 = vst [vmem:[%s268] sm:$0x1] %v1933
      %v1935 = vmul.f32 %v1913, %v1913
      %v1936 = vmul.f32 %v1914, %v1914
      %v1937 = vmul.f32 %v1915, %v1915
      %v1938 = vmul.f32 %v1916, %v1916
      %v1939 = vmul.f32 %v1917, %v1917
      %v1940 = vmul.f32 %v1918, %v1918
      %v1941 = vmul.f32 %v1919, %v1919
      %v1942 = vmul.f32 %v1920, %v1920
      %v1943 = vadd.f32 %v1935, %v1936
      %v1944 = vadd.f32 %v1943, %v1937
      %v1945 = vadd.f32 %v1944, %v1938
      %v1946 = vadd.f32 %v1945, %v1939
      %v1947 = vadd.f32 %v1946, %v1940
      %v1948 = vadd.f32 %v1947, %v1941
      %v1949 = vadd.f32 %v1948, %v1942
      %v1950 = vrot.slane %v1949, 4
      %v1951 = vadd.f32 %v1949, %v1950
      %v1952 = vrot.slane %v1951, 2
      %v1953 = vadd.f32 %v1951, %v1952
      %v1954 = vrot.slane %v1953, 1
      %v1955 = vadd.f32 %v1953, %v1954
      %1956 = vst [vmem:[%s271] sm:$0x1] %v1955
      %s1957 = smul.u32 8, %s18
      %p1958 = scmp.lt.s32.totalorder %s1957, 15
      %s1959 = scalar_select %p1958, %s1957, 15
      %s1960 = smul.addr %s1959, 4
      %s1961 = scalar_lea.vmem %s4, %s1960
      %p1962 = scmp.lt.s32.totalorder %s18, 1
      %s1963 = scalar_select %p1962, %s18, 1
      %s1964 = scalar_lea.vmem %s5, %s1963
      %p1965 = scmp.lt.s32.totalorder %s18, 1
      %s1966 = scalar_select %p1965, %s18, 1
      %s1967 = scalar_lea.vmem %s6, %s1966
      // Predicated region
      $region37: #{bottleneck_block.5} parent=35 // pred_check
        %p1968 = pneg %p125
      $region38: #{bottleneck_block.5} parent=35 // pred_check_branch
        %1970 = sbr.rel (%p1968) target = $region40
      $region39: #{bottleneck_block.5} parent=35 // pred_region
        %s1971 = smul.u32 8, %s18
      $region40: #{bottleneck_block.5} parent=35 // pred_fallthru
        _
      // Predicated region
      $region41: #{bottleneck_block.5} parent=35 // pred_check
        %p1972 = pneg %p151
      $region42: #{bottleneck_block.5} parent=35 // pred_check_branch
        %1974 = sbr.rel (%p1972) target = $region44
      $region43: #{bottleneck_block.5} parent=35 // pred_region
        _
      $region44: #{bottleneck_block.5} parent=35 // pred_fallthru
        _
      // Predicated region
      $region45: #{bottleneck_block.5} parent=35 // pred_check
        %p1975 = pneg %p177
      $region46: #{bottleneck_block.5} parent=35 // pred_check_branch
        %1977 = sbr.rel (%p1975) target = $region48
      $region47: #{bottleneck_block.5} parent=35 // pred_region
        _
      $region48: #{bottleneck_block.5} parent=35 // pred_fallthru
        _
    $region36: #{bottleneck_block.5} parent=5 // pred_fallthru
      _
    %p1978 = scmp.le.s32.totalorder 2, %s13
    // Predicated region
    $region49: #{bottleneck_block.5} parent=5 // pred_check
      %p1979 = pneg %p1978
    $region50: #{bottleneck_block.5} parent=5 // pred_check_branch
      %1981 = sbr.rel (%p1979) target = $region52
    $region51: #{bottleneck_block.5} parent=5 // pred_region
      %s1982 = ssub.s32 %s13, 2
      // Predicated region
      $region53: #{bottleneck_block.5} parent=51 // pred_check
        %p1983 = pneg %p131
      $region54: #{bottleneck_block.5} parent=51 // pred_check_branch
        %1985 = sbr.rel (%p1983) target = $region56
      $region55: #{bottleneck_block.5} parent=51 // pred_region
        %s1986 = smul.u32 8, %s19
        %p1987 = scmp.lt.s32.totalorder %s1986, 15
        %s1988 = scalar_select %p1987, %s1986, 15
        %s1989 = smul.addr %s1988, 4
        %s1990 = scalar_lea.vmem %s4, %s1989
      $region56: #{bottleneck_block.5} parent=51 // pred_fallthru
        _
      // Predicated region
      $region57: #{bottleneck_block.5} parent=51 // pred_check
        %p1991 = pneg %p157
      $region58: #{bottleneck_block.5} parent=51 // pred_check_branch
        %1993 = sbr.rel (%p1991) target = $region60
      $region59: #{bottleneck_block.5} parent=51 // pred_region
        %p1994 = scmp.lt.s32.totalorder %s19, 1
        %s1995 = scalar_select %p1994, %s19, 1
        %s1996 = scalar_lea.vmem %s5, %s1995
      $region60: #{bottleneck_block.5} parent=51 // pred_fallthru
        _
      // Predicated region
      $region61: #{bottleneck_block.5} parent=51 // pred_check
        %p1997 = pneg %p183
      $region62: #{bottleneck_block.5} parent=51 // pred_check_branch
        %1999 = sbr.rel (%p1997) target = $region64
      $region63: #{bottleneck_block.5} parent=51 // pred_region
        %p2000 = scmp.lt.s32.totalorder %s19, 1
        %s2001 = scalar_select %p2000, %s19, 1
        %s2002 = scalar_lea.vmem %s6, %s2001
      $region64: #{bottleneck_block.5} parent=51 // pred_fallthru
        _
    $region52: #{bottleneck_block.5} parent=5 // pred_fallthru
      _
  $region6: #{bottleneck_block.5} parent=0 // loop_footer
    %s17 = sadd.s32 1, %s13
  $region7: #{bottleneck_block.5} parent=0 // loop_footer_branch
    %12 = sbr.rel target = $region3
  $region8: #{bottleneck_block.5} parent=0 // loop_exit
    _

</llo_original>
